<compile_context>
chip_gen: v6e
topology: v6e:2x2x1
jax: 0.10.0
libtpu: 0.0.40
codegen_flags: <defaults>
</compile_context>

<pallas_src>
import functools

import jax
import jax.numpy as jnp
from jax.experimental import pallas as pl
from jax.experimental.pallas import tpu as pltpu


# ----------------------------------------------------------------------------
# Helpers
# ----------------------------------------------------------------------------
def _round_up(x, m):
    return (x + m - 1) // m * m


def _layernorm(v, gamma, beta, eps=1e-5):
    mu = jnp.mean(v, axis=-1, keepdims=True)
    var = jnp.mean((v - mu) ** 2, axis=-1, keepdims=True)
    return (v - mu) * jax.lax.rsqrt(var + eps) * gamma + beta


def _vmem_cap_bytes():
    # Generation-aware cap: ~80% of physical VMEM (64 MiB v7x, 128 MiB v5e/v6e).
    try:
        cap = int(pltpu.get_tpu_info().vmem_capacity_bytes)
    except Exception:
        cap = 64 * 1024 * 1024  # conservative fallback (v7x physical size)
    return int(cap * 0.8)


def _compiler_params(dim_sem, vmem_estimate_bytes):
    kwargs = dict(dimension_semantics=dim_sem)
    needed = int(vmem_estimate_bytes)
    if needed > 16 * 1024 * 1024:  # smallest scoped-VMEM default (v5e)
        kwargs["vmem_limit_bytes"] = min(max(needed, 32 * 1024 * 1024),
                                         _vmem_cap_bytes())
    return pltpu.CompilerParams(**kwargs)


def _encoder_vmem_estimate(B, S, D, DFF, H):
    """Working-set estimate incl. scores/probs/qkv/FFN intermediates (review fix)."""
    bf, f32 = 2, 4
    weights = 2 * bf * (D * 3 * D + D * D + D * DFF + DFF * D)   # dbl-buffered bf16
    small = 2 * f32 * (3 * D + D + DFF + 8 * D)                  # biases / LN params
    io = 2 * f32 * S * D * 2                                     # x in + o out blocks
    scratch = f32 * B * S * D                                    # full-batch residual
    interm = (f32 + bf) * S * 3 * D                              # qkv f32 + bf16 copies
    interm += (f32 + bf) * H * S * S                             # scores f32 + probs bf16
    interm += f32 * H * S * (D // H) + (f32 + bf) * S * D        # ctx + attn
    interm += (f32 + bf) * S * DFF                               # FFN hidden
    interm += 3 * f32 * S * D                                    # residual / LN temps
    return int(1.25 * (weights + small + io + scratch + interm))


# ----------------------------------------------------------------------------
# Kernels
# ----------------------------------------------------------------------------
def encoder_stack_kernel(x_ref, wqkv_ref, bqkv_ref, wo_ref, bo_ref,
                         g1_ref, be1_ref, w1_ref, b1_ref, w2_ref, b2_ref,
                         g2_ref, be2_ref, lng_ref, lnb_ref,
                         o_ref, h_ref, *, n_heads):
    """grid = (layer, batch).  Per-layer weights fetched once per layer; the
    residual stream for the whole batch is carried in the (B, S, D) scratch."""
    l = pl.program_id(0)
    b = pl.program_id(1)
    n_layers = pl.num_programs(0)

    @pl.when(l == 0)
    def _():
        h_ref[b] = x_ref[0]                      # load embeddings for this batch elem

    x = h_ref[b]                                 # [S, D] f32 residual stream
    S, D = x.shape
    H = n_heads
    hd = D // H
    scale = 1.0 / (hd ** 0.5)
    bf16 = jnp.bfloat16

    # ---- self attention (MultiheadAttention, batched heads) ----
    xb = x.astype(bf16)
    qkv = jnp.dot(xb, wqkv_ref[0], preferred_element_type=jnp.float32) + bqkv_ref[0]
    # fold 1/sqrt(hd) into q ([S, D]) instead of scaling [H, S, S] scores
    q = (qkv[:, 0 * D:1 * D] * scale).reshape(S, H, hd).transpose(1, 0, 2).astype(bf16)
    k = qkv[:, 1 * D:2 * D].reshape(S, H, hd).transpose(1, 0, 2).astype(bf16)
    v = qkv[:, 2 * D:3 * D].reshape(S, H, hd).transpose(1, 0, 2).astype(bf16)

    scores = jnp.einsum('hqd,hkd->hqk', q, k,
                        preferred_element_type=jnp.float32)                 # [H,S,S] f32
    scores = scores - jnp.max(scores, axis=-1, keepdims=True)
    p = jnp.exp(scores)
    inv_l = pl.reciprocal(jnp.sum(p, axis=-1, keepdims=True), approx=True)  # [H,S,1]
    ctx = jnp.einsum('hqk,hkd->hqd', p.astype(bf16), v,
                     preferred_element_type=jnp.float32) * inv_l            # [H,S,hd]
    attn = ctx.transpose(1, 0, 2).reshape(S, D).astype(bf16)                # concat heads
    attn = jnp.dot(attn, wo_ref[0], preferred_element_type=jnp.float32) + bo_ref[0]

    # post-norm residual 1 (f32)
    x1 = _layernorm(x + attn, g1_ref[0], be1_ref[0])

    # ---- feed forward (relu) ----
    h1 = jnp.dot(x1.astype(bf16), w1_ref[0], preferred_element_type=jnp.float32) + b1_ref[0]
    h1 = jnp.maximum(h1, 0.0)
    h2 = jnp.dot(h1.astype(bf16), w2_ref[0], preferred_element_type=jnp.float32) + b2_ref[0]

    # post-norm residual 2 (f32)
    x2 = _layernorm(x1 + h2, g2_ref[0], be2_ref[0])
    h_ref[b] = x2

    @pl.when(l == n_layers - 1)
    def _():
        # final LayerNorm fused into the last-layer epilogue (hoisted out of the
        # vocab-tile loop of the LM head).
        o_ref[0] = _layernorm(x2, lng_ref[...], lnb_ref[...])


def lm_head_kernel(x_ref, w_ref, b_ref, o_ref):
    """grid = (vocab_tile,).  x is already final-LayerNormed; pure tiled matmul."""
    o_ref[...] = (jnp.dot(x_ref[...].astype(jnp.bfloat16), w_ref[...],
                          preferred_element_type=jnp.float32) + b_ref[...])


# ----------------------------------------------------------------------------
# Wrappers
# ----------------------------------------------------------------------------
def run_encoder_stack(x, p, n_heads):
    B, S, D = x.shape
    L = p["wqkv_t"].shape[0]
    DFF = p["w1_t"].shape[2]
    last = L - 1

    # weights indexed only by the (outer) layer id -> fetched once per layer
    wspec = lambda d1, d2: pl.BlockSpec((1, d1, d2), lambda l, b: (l, 0, 0))

    est = _encoder_vmem_estimate(B, S, D, DFF, n_heads)

    return pl.pallas_call(
        functools.partial(encoder_stack_kernel, n_heads=n_heads),
        out_shape=jax.ShapeDtypeStruct((B, S, D), jnp.float32),
        grid=(L, B),
        in_specs=[
            # embeddings: only consumed at l == 0; pin the block index to 0 for
            # l > 0 so they are not re-streamed every layer.
            pl.BlockSpec((1, S, D), lambda l, b: (jnp.where(l == 0, b, 0), 0, 0)),
            wspec(D, 3 * D),                                   # wqkv_t
            wspec(1, 3 * D),                                   # bqkv
            wspec(D, D),                                       # wo_t
            wspec(1, D),                                       # bo
            wspec(1, D), wspec(1, D),                          # g1, be1
            wspec(D, DFF),                                     # w1_t
            wspec(1, DFF),                                     # b1
            wspec(DFF, D),                                     # w2_t
            wspec(1, D),                                       # b2
            wspec(1, D), wspec(1, D),                          # g2, be2
            pl.BlockSpec((1, D), lambda l, b: (0, 0)),         # final LN gamma
            pl.BlockSpec((1, D), lambda l, b: (0, 0)),         # final LN beta
        ],
        # output block pinned to 0 until the last layer -> written back to HBM
        # exactly once per batch element.
        out_specs=pl.BlockSpec(
            (1, S, D), lambda l, b: (jnp.where(l == last, b, 0), 0, 0)),
        scratch_shapes=[pltpu.VMEM((B, S, D), jnp.float32)],
        compiler_params=_compiler_params(("arbitrary", "arbitrary"), est),
    )(x, p["wqkv_t"], p["bqkv"], p["wo_t"], p["bo"],
      p["g1"], p["be1"], p["w1_t"], p["b1"], p["w2_t"], p["b2"],
      p["g2"], p["be2"], p["ln_g"], p["ln_b"])


def run_lm_head(xn, wout_t, bout, tile_v):
    B, S, D = xn.shape
    V_pad = wout_t.shape[1]
    assert V_pad % tile_v == 0
    R = B * S
    x2d = xn.reshape(R, D)                                   # fold batch into rows
    n_vt = V_pad // tile_v

    est = int(1.3 * (2 * R * D * 4 + 2 * (D * tile_v * 2 + tile_v * 4)
                     + 2 * R * tile_v * 4))

    logits = pl.pallas_call(
        lm_head_kernel,
        out_shape=jax.ShapeDtypeStruct((R, V_pad), jnp.float32),
        grid=(n_vt,),
        in_specs=[
            pl.BlockSpec((R, D), lambda v: (0, 0)),          # activations VMEM-resident
            pl.BlockSpec((D, tile_v), lambda v: (0, v)),     # weight tile streams once
            pl.BlockSpec((1, tile_v), lambda v: (0, v)),
        ],
        out_specs=pl.BlockSpec((R, tile_v), lambda v: (0, v)),
        compiler_params=_compiler_params(("parallel",), est),
    )(x2d, wout_t, bout)
    return logits.reshape(B, S, V_pad)


def mini_gpt_forward(token_ids, params, n_heads):
    B, S = token_ids.shape
    # embedding lookups (glue: data-dependent gather done in plain JAX)
    tok = jnp.take(params["tok_emb"], token_ids, axis=0)          # [B, S, D]
    pos = params["pos_emb"][:S][None, :, :]                       # [1, S, D]
    x = (tok + pos).astype(jnp.float32)
    xn = run_encoder_stack(x, params, n_heads)                    # incl. final LayerNorm
    logits = run_lm_head(xn, params["fc_w_t"], params["fc_b"],
                         tile_v=params["lm_tile_v"])
    V = params["vocab_size"]
    if logits.shape[-1] != V:
        logits = logits[..., :V]   # only when vocab was padded at init
    return logits


# ----------------------------------------------------------------------------
# Deterministic parameter init (weights pre-transposed, bf16 matmul operands,
# vocab padded once here instead of per forward call)
# ----------------------------------------------------------------------------
def init_params(key, vocab_size, d_model, n_layers, d_ff, max_len, lm_tile_v=1024):
    ks = iter(jax.random.split(key, 4 + 4 * n_layers))
    std = 0.02
    f32, bf16 = jnp.float32, jnp.bfloat16
    rnd = lambda shape: jax.random.normal(next(ks), shape, f32) * std

    tile_v = min(lm_tile_v, _round_up(vocab_size, 128))
    v_pad = _round_up(vocab_size, tile_v)
    fc_w_t = jnp.zeros((d_model, v_pad), f32).at[:, :vocab_size].set(
        rnd((vocab_size, d_model)).T)

    params = {
        "vocab_size": vocab_size,
        "lm_tile_v": tile_v,
        "tok_emb": rnd((vocab_size, d_model)),
        "pos_emb": rnd((max_len, d_model)),
        "ln_g": jnp.ones((1, d_model), f32),
        "ln_b": jnp.zeros((1, d_model), f32),
        "fc_w_t": fc_w_t.astype(bf16),                            # [D, V_pad]
        "fc_b": jnp.zeros((1, v_pad), f32),
    }
    wqkv, wo, w1, w2 = [], [], [], []
    for _ in range(n_layers):
        wqkv.append(rnd((3 * d_model, d_model)).T)                # [D, 3D]
        wo.append(rnd((d_model, d_model)).T)                      # [D, D]
        w1.append(rnd((d_ff, d_model)).T)                         # [D, DFF]
        w2.append(rnd((d_model, d_ff)).T)                         # [DFF, D]
    L = n_layers
    params.update({
        "wqkv_t": jnp.stack(wqkv).astype(bf16),                   # [L, D, 3D]
        "bqkv": jnp.zeros((L, 1, 3 * d_model), f32),
        "wo_t": jnp.stack(wo).astype(bf16),                       # [L, D, D]
        "bo": jnp.zeros((L, 1, d_model), f32),
        "g1": jnp.ones((L, 1, d_model), f32),
        "be1": jnp.zeros((L, 1, d_model), f32),
        "w1_t": jnp.stack(w1).astype(bf16),                       # [L, D, DFF]
        "b1": jnp.zeros((L, 1, d_ff), f32),
        "w2_t": jnp.stack(w2).astype(bf16),                       # [L, DFF, D]
        "b2": jnp.zeros((L, 1, d_model), f32),
        "g2": jnp.ones((L, 1, d_model), f32),
        "be2": jnp.zeros((L, 1, d_model), f32),
    })
    return params


if __name__ == "__main__":
    # small, lane-dense shapes consistent with the module
    # (scaled down from 25000/512/8/12/256; D kept a multiple of 128)
    VOCAB, D_MODEL, N_HEADS, N_LAYERS, MAX_LEN = 256, 128, 4, 2, 32
    D_FF = 4 * D_MODEL
    B, S = 2, 16

    key = jax.random.PRNGKey(0)
    k_param, k_tok = jax.random.split(key)
    params = init_params(k_param, VOCAB, D_MODEL, N_LAYERS, D_FF, MAX_LEN)
    token_ids = jax.random.randint(k_tok, (B, S), 0, VOCAB, dtype=jnp.int32)

    logits = mini_gpt_forward(token_ids, params, N_HEADS)
    logits = jax.block_until_ready(logits)
    assert logits.shape == (B, S, VOCAB)
    print("KERNEL_OK")
</pallas_src>

<mosaic_0001>
module attributes {stable_mosaic.version = 11 : i64} {
  func.func @encoder_stack_kernel(%arg0: i32, %arg1: i32, %arg2: memref<1x16x128xf32, #tpu.memory_space<vmem>>, %arg3: memref<1x128x384xbf16, #tpu.memory_space<vmem>>, %arg4: memref<1x1x384xf32, #tpu.memory_space<vmem>>, %arg5: memref<1x128x128xbf16, #tpu.memory_space<vmem>>, %arg6: memref<1x1x128xf32, #tpu.memory_space<vmem>>, %arg7: memref<1x1x128xf32, #tpu.memory_space<vmem>>, %arg8: memref<1x1x128xf32, #tpu.memory_space<vmem>>, %arg9: memref<1x128x512xbf16, #tpu.memory_space<vmem>>, %arg10: memref<1x1x512xf32, #tpu.memory_space<vmem>>, %arg11: memref<1x512x128xbf16, #tpu.memory_space<vmem>>, %arg12: memref<1x1x128xf32, #tpu.memory_space<vmem>>, %arg13: memref<1x1x128xf32, #tpu.memory_space<vmem>>, %arg14: memref<1x1x128xf32, #tpu.memory_space<vmem>>, %arg15: memref<1x128xf32, #tpu.memory_space<vmem>>, %arg16: memref<1x128xf32, #tpu.memory_space<vmem>>, %arg17: memref<1x16x128xf32, #tpu.memory_space<vmem>>, %arg18: memref<2x16x128xf32, #tpu.memory_space<vmem>>) attributes {dimension_semantics = [#tpu.dimension_semantics<arbitrary>, #tpu.dimension_semantics<arbitrary>], iteration_bounds = array<i64: 2, 2>, scalar_prefetch = 0 : i64, scratch_operands = 1 : i64, tpu.core_type = #tpu.core_type<tc>, window_params = [{transform_indices = @transform_0, window_bounds = array<i64: 1, 16, 128>}, {transform_indices = @transform_1, window_bounds = array<i64: 1, 128, 384>}, {transform_indices = @transform_2, window_bounds = array<i64: 1, 1, 384>}, {transform_indices = @transform_3, window_bounds = array<i64: 1, 128, 128>}, {transform_indices = @transform_4, window_bounds = array<i64: 1, 1, 128>}, {transform_indices = @transform_5, window_bounds = array<i64: 1, 1, 128>}, {transform_indices = @transform_6, window_bounds = array<i64: 1, 1, 128>}, {transform_indices = @transform_7, window_bounds = array<i64: 1, 128, 512>}, {transform_indices = @transform_8, window_bounds = array<i64: 1, 1, 512>}, {transform_indices = @transform_9, window_bounds = array<i64: 1, 512, 128>}, {transform_indices = @transform_10, window_bounds = array<i64: 1, 1, 128>}, {transform_indices = @transform_11, window_bounds = array<i64: 1, 1, 128>}, {transform_indices = @transform_12, window_bounds = array<i64: 1, 1, 128>}, {pipeline_mode = #tpu.pipeline_mode<synchronous>, transform_indices = @transform_13, window_bounds = array<i64: 1, 128>}, {pipeline_mode = #tpu.pipeline_mode<synchronous>, transform_indices = @transform_14, window_bounds = array<i64: 1, 128>}, {transform_indices = @transform_15, window_bounds = array<i64: 1, 16, 128>}]} {
    %c0_i32 = arith.constant 0 : i32
    %0 = arith.cmpi eq, %arg0, %c0_i32 : i32
    %1 = arith.extui %0 : i1 to i32
    %c0_i32_0 = arith.constant 0 : i32
    %2 = arith.cmpi ne, %1, %c0_i32_0 : i32
    scf.if %2 {
      %c0_60 = arith.constant 0 : index
      %c0_61 = arith.constant 0 : index
      %c0_62 = arith.constant 0 : index
      %130 = vector.load %arg2[%c0_60, %c0_61, %c0_62] : memref<1x16x128xf32, #tpu.memory_space<vmem>>, vector<1x16x128xf32>
      %131 = vector.shape_cast %130 : vector<1x16x128xf32> to vector<16x128xf32>
      %132 = arith.index_cast %arg1 : i32 to index
      %c0_63 = arith.constant 0 : index
      %c0_64 = arith.constant 0 : index
      %133 = vector.load %arg18[%132, %c0_63, %c0_64] : memref<2x16x128xf32, #tpu.memory_space<vmem>>, vector<1x16x128xf32>
      %134 = vector.shape_cast %133 : vector<1x16x128xf32> to vector<16x128xf32>
      %135 = vector.shape_cast %131 : vector<16x128xf32> to vector<1x16x128xf32>
      tpu.vector_store %arg18[%132, %c0_63, %c0_64], %135 {strides = array<i32>} : memref<2x16x128xf32, #tpu.memory_space<vmem>>, vector<1x16x128xf32>,
    } else {
    }
    %3 = arith.index_cast %arg1 : i32 to index
    %c0 = arith.constant 0 : index
    %c0_1 = arith.constant 0 : index
    %4 = vector.load %arg18[%3, %c0, %c0_1] : memref<2x16x128xf32, #tpu.memory_space<vmem>>, vector<1x16x128xf32>
    %5 = vector.shape_cast %4 : vector<1x16x128xf32> to vector<16x128xf32>
    %6 = arith.truncf %5 : vector<16x128xf32> to vector<16x128xbf16>
    %c0_2 = arith.constant 0 : index
    %c0_3 = arith.constant 0 : index
    %c0_4 = arith.constant 0 : index
    %7 = vector.load %arg3[%c0_2, %c0_3, %c0_4] : memref<1x128x384xbf16, #tpu.memory_space<vmem>>, vector<1x128x384xbf16>
    %8 = vector.shape_cast %7 : vector<1x128x384xbf16> to vector<128x384xbf16>
    %cst = arith.constant dense<0.000000e+00> : vector<16x384xf32>
    %9 = tpu.matmul %6, %8, %cst {dimension_numbers = #tpu.dot_dimension_numbers<[1], [0], [0], [1], [0, 0, 1, 1], [], []>} : vector<16x128xbf16>, vector<128x384xbf16>, vector<16x384xf32> -> vector<16x384xf32>
    %c0_5 = arith.constant 0 : index
    %c0_6 = arith.constant 0 : index
    %c0_7 = arith.constant 0 : index
    %10 = vector.load %arg4[%c0_5, %c0_6, %c0_7] : memref<1x1x384xf32, #tpu.memory_space<vmem>>, vector<1x1x384xf32>
    %11 = vector.shape_cast %10 : vector<1x1x384xf32> to vector<1x384xf32>
    %12 = vector.broadcast %11 : vector<1x384xf32> to vector<16x384xf32>
    %13 = arith.addf %9, %12 : vector<16x384xf32>
    %14 = vector.extract_strided_slice %13 {offsets = [0, 0], sizes = [16, 128], strides = [1, 1]} : vector<16x384xf32> to vector<16x128xf32>
    %cst_8 = arith.constant 0.176776692 : f32
    %15 = vector.broadcast %cst_8 : f32 to vector<16x128xf32>
    %16 = arith.mulf %14, %15 : vector<16x128xf32>
    %17 = vector.shape_cast %16 : vector<16x128xf32> to vector<16x4x32xf32>
    %18 = tpu.transpose %17, [1, 0, 2] : vector<16x4x32xf32> -> vector<4x16x32xf32>
    %19 = arith.truncf %18 : vector<4x16x32xf32> to vector<4x16x32xbf16>
    %20 = vector.extract_strided_slice %13 {offsets = [0, 128], sizes = [16, 128], strides = [1, 1]} : vector<16x384xf32> to vector<16x128xf32>
    %21 = vector.shape_cast %20 : vector<16x128xf32> to vector<16x4x32xf32>
    %22 = tpu.transpose %21, [1, 0, 2] : vector<16x4x32xf32> -> vector<4x16x32xf32>
    %23 = arith.truncf %22 : vector<4x16x32xf32> to vector<4x16x32xbf16>
    %24 = vector.extract_strided_slice %13 {offsets = [0, 256], sizes = [16, 128], strides = [1, 1]} : vector<16x384xf32> to vector<16x128xf32>
    %25 = vector.shape_cast %24 : vector<16x128xf32> to vector<16x4x32xf32>
    %26 = tpu.transpose %25, [1, 0, 2] : vector<16x4x32xf32> -> vector<4x16x32xf32>
    %27 = arith.truncf %26 : vector<4x16x32xf32> to vector<4x16x32xbf16>
    "tpu.trace_start"() <{level = 10 : i32, message = "hqd,hkd->hqk"}> : () -> ()
    %cst_9 = arith.constant dense<0.000000e+00> : vector<4x16x16xf32>
    %28 = tpu.matmul %19, %23, %cst_9 {dimension_numbers = #tpu.dot_dimension_numbers<[2], [2], [1], [1], [0, 0, 0, 1, 1, 1], [0], [0]>} : vector<4x16x32xbf16>, vector<4x16x32xbf16>, vector<4x16x16xf32> -> vector<4x16x16xf32>
    "tpu.trace_stop"() : () -> ()
    %cst_10 = arith.constant dense<0xFF800000> : vector<4x16xf32>
    %29 = vector.multi_reduction <maximumf>, %28, %cst_10 [2] : vector<4x16x16xf32> to vector<4x16xf32>
    %30 = vector.shape_cast %29 : vector<4x16xf32> to vector<4x16x1xf32>
    %31 = vector.broadcast %30 : vector<4x16x1xf32> to vector<4x16x16xf32>
    %32 = arith.subf %28, %31 : vector<4x16x16xf32>
    %33 = math.exp %32 : vector<4x16x16xf32>
    %cst_11 = arith.constant dense<0.000000e+00> : vector<4x16xf32>
    %34 = vector.multi_reduction <add>, %33, %cst_11 [2] : vector<4x16x16xf32> to vector<4x16xf32>
    %35 = vector.shape_cast %34 : vector<4x16xf32> to vector<4x16x1xf32>
    %36 = tpu.reciprocal %35 {approx = true} : vector<4x16x1xf32> -> vector<4x16x1xf32>
    %37 = arith.truncf %33 : vector<4x16x16xf32> to vector<4x16x16xbf16>
    "tpu.trace_start"() <{level = 10 : i32, message = "hqk,hkd->hqd"}> : () -> ()
    %cst_12 = arith.constant dense<0.000000e+00> : vector<4x16x32xf32>
    %38 = tpu.matmul %37, %27, %cst_12 {dimension_numbers = #tpu.dot_dimension_numbers<[2], [1], [1], [2], [0, 0, 0, 1, 1, 2], [0], [0]>} : vector<4x16x16xbf16>, vector<4x16x32xbf16>, vector<4x16x32xf32> -> vector<4x16x32xf32>
    "tpu.trace_stop"() : () -> ()
    %39 = vector.broadcast %36 : vector<4x16x1xf32> to vector<4x16x32xf32>
    %40 = arith.mulf %38, %39 : vector<4x16x32xf32>
    %41 = tpu.transpose %40, [1, 0, 2] : vector<4x16x32xf32> -> vector<16x4x32xf32>
    %42 = vector.shape_cast %41 : vector<16x4x32xf32> to vector<16x128xf32>
    %43 = arith.truncf %42 : vector<16x128xf32> to vector<16x128xbf16>
    %c0_13 = arith.constant 0 : index
    %c0_14 = arith.constant 0 : index
    %c0_15 = arith.constant 0 : index
    %44 = vector.load %arg5[%c0_13, %c0_14, %c0_15] : memref<1x128x128xbf16, #tpu.memory_space<vmem>>, vector<1x128x128xbf16>
    %45 = vector.shape_cast %44 : vector<1x128x128xbf16> to vector<128x128xbf16>
    %cst_16 = arith.constant dense<0.000000e+00> : vector<16x128xf32>
    %46 = tpu.matmul %43, %45, %cst_16 {dimension_numbers = #tpu.dot_dimension_numbers<[1], [0], [0], [1], [0, 0, 1, 1], [], []>} : vector<16x128xbf16>, vector<128x128xbf16>, vector<16x128xf32> -> vector<16x128xf32>
    %c0_17 = arith.constant 0 : index
    %c0_18 = arith.constant 0 : index
    %c0_19 = arith.constant 0 : index
    %47 = vector.load %arg6[%c0_17, %c0_18, %c0_19] : memref<1x1x128xf32, #tpu.memory_space<vmem>>, vector<1x1x128xf32>
    %48 = vector.shape_cast %47 : vector<1x1x128xf32> to vector<1x128xf32>
    %49 = vector.broadcast %48 : vector<1x128xf32> to vector<16x128xf32>
    %50 = arith.addf %46, %49 : vector<16x128xf32>
    %51 = arith.addf %5, %50 : vector<16x128xf32>
    %c0_20 = arith.constant 0 : index
    %c0_21 = arith.constant 0 : index
    %c0_22 = arith.constant 0 : index
    %52 = vector.load %arg7[%c0_20, %c0_21, %c0_22] : memref<1x1x128xf32, #tpu.memory_space<vmem>>, vector<1x1x128xf32>
    %53 = vector.shape_cast %52 : vector<1x1x128xf32> to vector<1x128xf32>
    %c0_23 = arith.constant 0 : index
    %c0_24 = arith.constant 0 : index
    %c0_25 = arith.constant 0 : index
    %54 = vector.load %arg8[%c0_23, %c0_24, %c0_25] : memref<1x1x128xf32, #tpu.memory_space<vmem>>, vector<1x1x128xf32>
    %55 = vector.shape_cast %54 : vector<1x1x128xf32> to vector<1x128xf32>
    %cst_26 = arith.constant dense<0.000000e+00> : vector<16xf32>
    %56 = vector.multi_reduction <add>, %51, %cst_26 [1] : vector<16x128xf32> to vector<16xf32>
    %57 = vector.shape_cast %56 : vector<16xf32> to vector<16x1xf32>
    %cst_27 = arith.constant 1.280000e+02 : f32
    %58 = vector.broadcast %cst_27 : f32 to vector<16x1xf32>
    %59 = arith.divf %57, %58 : vector<16x1xf32>
    %60 = vector.broadcast %59 : vector<16x1xf32> to vector<16x128xf32>
    %61 = arith.subf %51, %60 : vector<16x128xf32>
    %62 = arith.mulf %61, %61 : vector<16x128xf32>
    %cst_28 = arith.constant dense<0.000000e+00> : vector<16xf32>
    %63 = vector.multi_reduction <add>, %62, %cst_28 [1] : vector<16x128xf32> to vector<16xf32>
    %64 = vector.shape_cast %63 : vector<16xf32> to vector<16x1xf32>
    %cst_29 = arith.constant 1.280000e+02 : f32
    %65 = vector.broadcast %cst_29 : f32 to vector<16x1xf32>
    %66 = arith.divf %64, %65 : vector<16x1xf32>
    %67 = vector.broadcast %59 : vector<16x1xf32> to vector<16x128xf32>
    %68 = arith.subf %51, %67 : vector<16x128xf32>
    %cst_30 = arith.constant 9.99999974E-6 : f32
    %69 = vector.broadcast %cst_30 : f32 to vector<16x1xf32>
    %70 = arith.addf %66, %69 : vector<16x1xf32>
    %71 = math.rsqrt %70 : vector<16x1xf32>
    %72 = vector.broadcast %71 : vector<16x1xf32> to vector<16x128xf32>
    %73 = arith.mulf %68, %72 : vector<16x128xf32>
    %74 = vector.broadcast %53 : vector<1x128xf32> to vector<16x128xf32>
    %75 = arith.mulf %73, %74 : vector<16x128xf32>
    %76 = vector.broadcast %55 : vector<1x128xf32> to vector<16x128xf32>
    %77 = arith.addf %75, %76 : vector<16x128xf32>
    %78 = arith.truncf %77 : vector<16x128xf32> to vector<16x128xbf16>
    %c0_31 = arith.constant 0 : index
    %c0_32 = arith.constant 0 : index
    %c0_33 = arith.constant 0 : index
    %79 = vector.load %arg9[%c0_31, %c0_32, %c0_33] : memref<1x128x512xbf16, #tpu.memory_space<vmem>>, vector<1x128x512xbf16>
    %80 = vector.shape_cast %79 : vector<1x128x512xbf16> to vector<128x512xbf16>
    %cst_34 = arith.constant dense<0.000000e+00> : vector<16x512xf32>
    %81 = tpu.matmul %78, %80, %cst_34 {dimension_numbers = #tpu.dot_dimension_numbers<[1], [0], [0], [1], [0, 0, 1, 1], [], []>} : vector<16x128xbf16>, vector<128x512xbf16>, vector<16x512xf32> -> vector<16x512xf32>
    %c0_35 = arith.constant 0 : index
    %c0_36 = arith.constant 0 : index
    %c0_37 = arith.constant 0 : index
    %82 = vector.load %arg10[%c0_35, %c0_36, %c0_37] : memref<1x1x512xf32, #tpu.memory_space<vmem>>, vector<1x1x512xf32>
    %83 = vector.shape_cast %82 : vector<1x1x512xf32> to vector<1x512xf32>
    %84 = vector.broadcast %83 : vector<1x512xf32> to vector<16x512xf32>
    %85 = arith.addf %81, %84 : vector<16x512xf32>
    %cst_38 = arith.constant 0.000000e+00 : f32
    %86 = vector.broadcast %cst_38 : f32 to vector<16x512xf32>
    %87 = arith.maximumf %85, %86 : vector<16x512xf32>
    %88 = arith.truncf %87 : vector<16x512xf32> to vector<16x512xbf16>
    %c0_39 = arith.constant 0 : index
    %c0_40 = arith.constant 0 : index
    %c0_41 = arith.constant 0 : index
    %89 = vector.load %arg11[%c0_39, %c0_40, %c0_41] : memref<1x512x128xbf16, #tpu.memory_space<vmem>>, vector<1x512x128xbf16>
    %90 = vector.shape_cast %89 : vector<1x512x128xbf16> to vector<512x128xbf16>
    %cst_42 = arith.constant dense<0.000000e+00> : vector<16x128xf32>
    %91 = tpu.matmul %88, %90, %cst_42 {dimension_numbers = #tpu.dot_dimension_numbers<[1], [0], [0], [1], [0, 0, 1, 1], [], []>} : vector<16x512xbf16>, vector<512x128xbf16>, vector<16x128xf32> -> vector<16x128xf32>
    %c0_43 = arith.constant 0 : index
    %c0_44 = arith.constant 0 : index
    %c0_45 = arith.constant 0 : index
    %92 = vector.load %arg12[%c0_43, %c0_44, %c0_45] : memref<1x1x128xf32, #tpu.memory_space<vmem>>, vector<1x1x128xf32>
    %93 = vector.shape_cast %92 : vector<1x1x128xf32> to vector<1x128xf32>
    %94 = vector.broadcast %93 : vector<1x128xf32> to vector<16x128xf32>
    %95 = arith.addf %91, %94 : vector<16x128xf32>
    %96 = arith.addf %77, %95 : vector<16x128xf32>
    %c0_46 = arith.constant 0 : index
    %c0_47 = arith.constant 0 : index
    %c0_48 = arith.constant 0 : index
    %97 = vector.load %arg13[%c0_46, %c0_47, %c0_48] : memref<1x1x128xf32, #tpu.memory_space<vmem>>, vector<1x1x128xf32>
    %98 = vector.shape_cast %97 : vector<1x1x128xf32> to vector<1x128xf32>
    %c0_49 = arith.constant 0 : index
    %c0_50 = arith.constant 0 : index
    %c0_51 = arith.constant 0 : index
    %99 = vector.load %arg14[%c0_49, %c0_50, %c0_51] : memref<1x1x128xf32, #tpu.memory_space<vmem>>, vector<1x1x128xf32>
    %100 = vector.shape_cast %99 : vector<1x1x128xf32> to vector<1x128xf32>
    %cst_52 = arith.constant dense<0.000000e+00> : vector<16xf32>
    %101 = vector.multi_reduction <add>, %96, %cst_52 [1] : vector<16x128xf32> to vector<16xf32>
    %102 = vector.shape_cast %101 : vector<16xf32> to vector<16x1xf32>
    %cst_53 = arith.constant 1.280000e+02 : f32
    %103 = vector.broadcast %cst_53 : f32 to vector<16x1xf32>
    %104 = arith.divf %102, %103 : vector<16x1xf32>
    %105 = vector.broadcast %104 : vector<16x1xf32> to vector<16x128xf32>
    %106 = arith.subf %96, %105 : vector<16x128xf32>
    %107 = arith.mulf %106, %106 : vector<16x128xf32>
    %cst_54 = arith.constant dense<0.000000e+00> : vector<16xf32>
    %108 = vector.multi_reduction <add>, %107, %cst_54 [1] : vector<16x128xf32> to vector<16xf32>
    %109 = vector.shape_cast %108 : vector<16xf32> to vector<16x1xf32>
    %cst_55 = arith.constant 1.280000e+02 : f32
    %110 = vector.broadcast %cst_55 : f32 to vector<16x1xf32>
    %111 = arith.divf %109, %110 : vector<16x1xf32>
    %112 = vector.broadcast %104 : vector<16x1xf32> to vector<16x128xf32>
    %113 = arith.subf %96, %112 : vector<16x128xf32>
    %cst_56 = arith.constant 9.99999974E-6 : f32
    %114 = vector.broadcast %cst_56 : f32 to vector<16x1xf32>
    %115 = arith.addf %111, %114 : vector<16x1xf32>
    %116 = math.rsqrt %115 : vector<16x1xf32>
    %117 = vector.broadcast %116 : vector<16x1xf32> to vector<16x128xf32>
    %118 = arith.mulf %113, %117 : vector<16x128xf32>
    %119 = vector.broadcast %98 : vector<1x128xf32> to vector<16x128xf32>
    %120 = arith.mulf %118, %119 : vector<16x128xf32>
    %121 = vector.broadcast %100 : vector<1x128xf32> to vector<16x128xf32>
    %122 = arith.addf %120, %121 : vector<16x128xf32>
    %123 = arith.index_cast %arg1 : i32 to index
    %c0_57 = arith.constant 0 : index
    %c0_58 = arith.constant 0 : index
    %124 = vector.load %arg18[%123, %c0_57, %c0_58] : memref<2x16x128xf32, #tpu.memory_space<vmem>>, vector<1x16x128xf32>
    %125 = vector.shape_cast %124 : vector<1x16x128xf32> to vector<16x128xf32>
    %126 = vector.shape_cast %122 : vector<16x128xf32> to vector<1x16x128xf32>
    tpu.vector_store %arg18[%123, %c0_57, %c0_58], %126 {strides = array<i32>} : memref<2x16x128xf32, #tpu.memory_space<vmem>>, vector<1x16x128xf32>,
    %c1_i32 = arith.constant 1 : i32
    %127 = arith.cmpi eq, %arg0, %c1_i32 : i32
    %128 = arith.extui %127 : i1 to i32
    %c0_i32_59 = arith.constant 0 : i32
    %129 = arith.cmpi ne, %128, %c0_i32_59 : i32
    scf.if %129 {
      %c0_60 = arith.constant 0 : index
      %c0_61 = arith.constant 0 : index
      %130 = vector.load %arg15[%c0_60, %c0_61] : memref<1x128xf32, #tpu.memory_space<vmem>>, vector<1x128xf32>
      %c0_62 = arith.constant 0 : index
      %c0_63 = arith.constant 0 : index
      %131 = vector.load %arg16[%c0_62, %c0_63] : memref<1x128xf32, #tpu.memory_space<vmem>>, vector<1x128xf32>
      %cst_64 = arith.constant dense<0.000000e+00> : vector<16xf32>
      %132 = vector.multi_reduction <add>, %122, %cst_64 [1] : vector<16x128xf32> to vector<16xf32>
      %133 = vector.shape_cast %132 : vector<16xf32> to vector<16x1xf32>
      %cst_65 = arith.constant 1.280000e+02 : f32
      %134 = vector.broadcast %cst_65 : f32 to vector<16x1xf32>
      %135 = arith.divf %133, %134 : vector<16x1xf32>
      %136 = vector.broadcast %135 : vector<16x1xf32> to vector<16x128xf32>
      %137 = arith.subf %122, %136 : vector<16x128xf32>
      %138 = arith.mulf %137, %137 : vector<16x128xf32>
      %cst_66 = arith.constant dense<0.000000e+00> : vector<16xf32>
      %139 = vector.multi_reduction <add>, %138, %cst_66 [1] : vector<16x128xf32> to vector<16xf32>
      %140 = vector.shape_cast %139 : vector<16xf32> to vector<16x1xf32>
      %cst_67 = arith.constant 1.280000e+02 : f32
      %141 = vector.broadcast %cst_67 : f32 to vector<16x1xf32>
      %142 = arith.divf %140, %141 : vector<16x1xf32>
      %143 = vector.broadcast %135 : vector<16x1xf32> to vector<16x128xf32>
      %144 = arith.subf %122, %143 : vector<16x128xf32>
      %cst_68 = arith.constant 9.99999974E-6 : f32
      %145 = vector.broadcast %cst_68 : f32 to vector<16x1xf32>
      %146 = arith.addf %142, %145 : vector<16x1xf32>
      %147 = math.rsqrt %146 : vector<16x1xf32>
      %148 = vector.broadcast %147 : vector<16x1xf32> to vector<16x128xf32>
      %149 = arith.mulf %144, %148 : vector<16x128xf32>
      %150 = vector.broadcast %130 : vector<1x128xf32> to vector<16x128xf32>
      %151 = arith.mulf %149, %150 : vector<16x128xf32>
      %152 = vector.broadcast %131 : vector<1x128xf32> to vector<16x128xf32>
      %153 = arith.addf %151, %152 : vector<16x128xf32>
      %c0_69 = arith.constant 0 : index
      %c0_70 = arith.constant 0 : index
      %c0_71 = arith.constant 0 : index
      %154 = vector.load %arg17[%c0_69, %c0_70, %c0_71] : memref<1x16x128xf32, #tpu.memory_space<vmem>>, vector<1x16x128xf32>
      %155 = vector.shape_cast %154 : vector<1x16x128xf32> to vector<16x128xf32>
      %156 = vector.shape_cast %153 : vector<16x128xf32> to vector<1x16x128xf32>
      tpu.vector_store %arg17[%c0_69, %c0_70, %c0_71], %156 {strides = array<i32>} : memref<1x16x128xf32, #tpu.memory_space<vmem>>, vector<1x16x128xf32>,
    } else {
    }
    return
  }
  func.func @transform_0(%arg0: i32, %arg1: i32) -> (i32, i32, i32) {
    %c0_i32 = arith.constant 0 : i32
    %0 = arith.cmpi eq, %arg0, %c0_i32 : i32
    %c0_i32_0 = arith.constant 0 : i32
    %1 = arith.select %0, %arg1, %c0_i32_0 : i32
    %c0_i32_1 = arith.constant 0 : i32
    %c0_i32_2 = arith.constant 0 : i32
    %c0_i32_3 = arith.constant 0 : i32
    return %1, %c0_i32_1, %c0_i32_2 : i32, i32, i32
  }
  func.func @transform_1(%arg0: i32, %arg1: i32) -> (i32, i32, i32) {
    %c0_i32 = arith.constant 0 : i32
    %c0_i32_0 = arith.constant 0 : i32
    %c0_i32_1 = arith.constant 0 : i32
    return %arg0, %c0_i32, %c0_i32_0 : i32, i32, i32
  }
  func.func @transform_2(%arg0: i32, %arg1: i32) -> (i32, i32, i32) {
    %c0_i32 = arith.constant 0 : i32
    %c0_i32_0 = arith.constant 0 : i32
    %c0_i32_1 = arith.constant 0 : i32
    return %arg0, %c0_i32, %c0_i32_0 : i32, i32, i32
  }
  func.func @transform_3(%arg0: i32, %arg1: i32) -> (i32, i32, i32) {
    %c0_i32 = arith.constant 0 : i32
    %c0_i32_0 = arith.constant 0 : i32
    %c0_i32_1 = arith.constant 0 : i32
    return %arg0, %c0_i32, %c0_i32_0 : i32, i32, i32
  }
  func.func @transform_4(%arg0: i32, %arg1: i32) -> (i32, i32, i32) {
    %c0_i32 = arith.constant 0 : i32
    %c0_i32_0 = arith.constant 0 : i32
    %c0_i32_1 = arith.constant 0 : i32
    return %arg0, %c0_i32, %c0_i32_0 : i32, i32, i32
  }
  func.func @transform_5(%arg0: i32, %arg1: i32) -> (i32, i32, i32) {
    %c0_i32 = arith.constant 0 : i32
    %c0_i32_0 = arith.constant 0 : i32
    %c0_i32_1 = arith.constant 0 : i32
    return %arg0, %c0_i32, %c0_i32_0 : i32, i32, i32
  }
  func.func @transform_6(%arg0: i32, %arg1: i32) -> (i32, i32, i32) {
    %c0_i32 = arith.constant 0 : i32
    %c0_i32_0 = arith.constant 0 : i32
    %c0_i32_1 = arith.constant 0 : i32
    return %arg0, %c0_i32, %c0_i32_0 : i32, i32, i32
  }
  func.func @transform_7(%arg0: i32, %arg1: i32) -> (i32, i32, i32) {
    %c0_i32 = arith.constant 0 : i32
    %c0_i32_0 = arith.constant 0 : i32
    %c0_i32_1 = arith.constant 0 : i32
    return %arg0, %c0_i32, %c0_i32_0 : i32, i32, i32
  }
  func.func @transform_8(%arg0: i32, %arg1: i32) -> (i32, i32, i32) {
    %c0_i32 = arith.constant 0 : i32
    %c0_i32_0 = arith.constant 0 : i32
    %c0_i32_1 = arith.constant 0 : i32
    return %arg0, %c0_i32, %c0_i32_0 : i32, i32, i32
  }
  func.func @transform_9(%arg0: i32, %arg1: i32) -> (i32, i32, i32) {
    %c0_i32 = arith.constant 0 : i32
    %c0_i32_0 = arith.constant 0 : i32
    %c0_i32_1 = arith.constant 0 : i32
    return %arg0, %c0_i32, %c0_i32_0 : i32, i32, i32
  }
  func.func @transform_10(%arg0: i32, %arg1: i32) -> (i32, i32, i32) {
    %c0_i32 = arith.constant 0 : i32
    %c0_i32_0 = arith.constant 0 : i32
    %c0_i32_1 = arith.constant 0 : i32
    return %arg0, %c0_i32, %c0_i32_0 : i32, i32, i32
  }
  func.func @transform_11(%arg0: i32, %arg1: i32) -> (i32, i32, i32) {
    %c0_i32 = arith.constant 0 : i32
    %c0_i32_0 = arith.constant 0 : i32
    %c0_i32_1 = arith.constant 0 : i32
    return %arg0, %c0_i32, %c0_i32_0 : i32, i32, i32
  }
  func.func @transform_12(%arg0: i32, %arg1: i32) -> (i32, i32, i32) {
    %c0_i32 = arith.constant 0 : i32
    %c0_i32_0 = arith.constant 0 : i32
    %c0_i32_1 = arith.constant 0 : i32
    return %arg0, %c0_i32, %c0_i32_0 : i32, i32, i32
  }
  func.func @transform_13(%arg0: i32, %arg1: i32) -> (i32, i32) {
    %c0_i32 = arith.constant 0 : i32
    %c0_i32_0 = arith.constant 0 : i32
    %c0_i32_1 = arith.constant 0 : i32
    return %c0_i32, %c0_i32_0 : i32, i32
  }
  func.func @transform_14(%arg0: i32, %arg1: i32) -> (i32, i32) {
    %c0_i32 = arith.constant 0 : i32
    %c0_i32_0 = arith.constant 0 : i32
    %c0_i32_1 = arith.constant 0 : i32
    return %c0_i32, %c0_i32_0 : i32, i32
  }
  func.func @transform_15(%arg0: i32, %arg1: i32) -> (i32, i32, i32) {
    %c1_i32 = arith.constant 1 : i32
    %0 = arith.cmpi eq, %arg0, %c1_i32 : i32
    %c0_i32 = arith.constant 0 : i32
    %1 = arith.select %0, %arg1, %c0_i32 : i32
    %c0_i32_0 = arith.constant 0 : i32
    %c0_i32_1 = arith.constant 0 : i32
    %c0_i32_2 = arith.constant 0 : i32
    return %1, %c0_i32_0, %c0_i32_1 : i32, i32, i32
  }
}

</mosaic_0001>

<llo_original>
// kernel: tpu_custom_call.1
$region0: #{tpu_custom_call.1}
  #allocation0 [shape = 'u32[]', space=smem, size = 0x4, offset = 0x4, fixed_abs, tag = 'smem constant byte address 0x4 - core index']
  #allocation1 [shape = 'u32[144,128]{1,0:T(1,128)}', space=vmem, size = 0x12000, scoped, tag = 'internal scratch']
  #allocation2 [shape = 'f32[2,16,128]{2,1,0:T(8,128)}', space=vmem, size = 0x4000, scoped, tag = 'scratch operand']
  %s0 = inlined_call_operand.hbm [shape: f32[2,16,128], index: 0, kind: input, shape index: {}]
  %s1 = inlined_call_operand.hbm [shape: bf16[2,128,384], index: 1, kind: input, shape index: {}]
  %s2 = inlined_call_operand.hbm [shape: f32[2,1,384], index: 2, kind: input, shape index: {}]
  %s3 = inlined_call_operand.hbm [shape: bf16[2,128,128], index: 3, kind: input, shape index: {}]
  %s4 = inlined_call_operand.vmem [shape: f32[2,1,128], index: 4, kind: input, shape index: {}]
  %s5 = inlined_call_operand.vmem [shape: f32[2,1,128], index: 5, kind: input, shape index: {}]
  %s6 = inlined_call_operand.vmem [shape: f32[2,1,128], index: 6, kind: input, shape index: {}]
  %s7 = inlined_call_operand.hbm [shape: bf16[2,128,512], index: 7, kind: input, shape index: {}]
  %s8 = inlined_call_operand.vmem [shape: f32[2,1,512], index: 8, kind: input, shape index: {}]
  %s9 = inlined_call_operand.hbm [shape: bf16[2,512,128], index: 9, kind: input, shape index: {}]
  %s10 = inlined_call_operand.vmem [shape: f32[2,1,128], index: 10, kind: input, shape index: {}]
  %s11 = inlined_call_operand.vmem [shape: f32[2,1,128], index: 11, kind: input, shape index: {}]
  %s12 = inlined_call_operand.vmem [shape: f32[2,1,128], index: 12, kind: input, shape index: {}]
  %s13 = inlined_call_operand.vmem [shape: f32[1,128], index: 13, kind: input, shape index: {}]
  %s14 = inlined_call_operand.vmem [shape: f32[1,128], index: 14, kind: input, shape index: {}]
  %s15 = inlined_call_operand.hbm [shape: f32[2,16,128], index: 15, kind: output, shape index: {}]
  %s16 = sld [smem:[#allocation0]]
  $region125: #{tpu_custom_call.1} parent=0
    _
  %s18 = ssub.s32 1, %s16
  %s19 = scalar_select 0, %s18, %s16
  $region1: #{tpu_custom_call.1} parent=0
    #allocation3 [shape = 'u8[16384]{0}', space=vmem, size = 0x4000, scoped, tag = 'input window, operand 0']
    #allocation4 [shape = 's32[2]{0}', space=sflag, size = 0x8, scoped, tag = 'scoped memory for tpu_custom_call.1']
    #allocation5 [shape = 's32[2]{0}', space=sflag, size = 0x8, scoped, tag = 'scoped memory for tpu_custom_call.1']
    #allocation6 [shape = 'u8[196608]{0}', space=vmem, size = 0x30000, scoped, tag = 'input window, operand 1']
    #allocation7 [shape = 's32[2]{0}', space=sflag, size = 0x8, scoped, tag = 'scoped memory for tpu_custom_call.1']
    #allocation8 [shape = 'u8[3072]{0}', space=vmem, size = 0xc00, scoped, tag = 'input window, operand 2']
    #allocation9 [shape = 'u8[65536]{0}', space=vmem, size = 0x10000, scoped, tag = 'input window, operand 3']
    #allocation10 [shape = 's32[2]{0}', space=sflag, size = 0x8, scoped, tag = 'scoped memory for tpu_custom_call.1']
    #allocation11 [shape = 'u8[262144]{0}', space=vmem, size = 0x40000, scoped, tag = 'input window, operand 7']
    #allocation12 [shape = 'u8[262144]{0}', space=vmem, size = 0x40000, scoped, tag = 'input window, operand 9']
    #allocation13 [shape = 's32[2]{0}', space=sflag, size = 0x8, scoped, tag = 'scoped memory for tpu_custom_call.1']
    #allocation14 [shape = 'u8[16384]{0}', space=vmem, size = 0x4000, scoped, tag = 'output window, operand 0']
    %20 = vsyncpa [#allocation4], 0
    %s21 = scalar_lea.sflag [#allocation4], 1
    %22 = vsyncpa %s21, 0
    %23 = vsyncpa [#allocation7], 0
    %s24 = scalar_lea.sflag [#allocation7], 1
    %25 = vsyncpa %s24, 0
    %26 = vsyncpa [#allocation10], 0
    %s27 = scalar_lea.sflag [#allocation10], 1
    %28 = vsyncpa %s27, 0
    %29 = vsyncpa [#allocation13], 0
    %s30 = scalar_lea.sflag [#allocation13], 1
    %31 = vsyncpa %s30, 0
    %32 = vsyncpa [#allocation5], 0
    %s33 = scalar_lea.sflag [#allocation5], 1
    %34 = vsyncpa %s33, 0
    loop: start=0, step=1, limit=6
    $region2: #{tpu_custom_call.1} parent=1 // loop_pre_header
      _
    $region3: #{tpu_custom_call.1} parent=1 // loop_header
      %s36 = sphi 0, %s40
      %p37 = scmp.ge.s32.totalorder %s36, 6
      %s43 = sphi 0, %s55
      %s44 = sphi 0, %s51
      %s45 = sphi 0, %s43
      %s46 = sphi 0, %s44
      %s47 = sphi 0, %s45
      %s48 = sphi 0, %s46
      %s62 = sphi 0, %s64
      %s65 = sphi 0, %s62
      %s66 = sphi 0, %s65
      %s82 = sphi 0, %s66
      %s88 = sphi 0, %s90
      %s91 = sphi 0, %s88
      %s92 = sphi 0, %s91
      %s108 = sphi 0, %s92
      %s114 = sphi 0, %s116
      %s117 = sphi 0, %s114
      %s118 = sphi 0, %s117
      %s134 = sphi 0, %s118
      %s140 = sphi 0, %s142
      %s143 = sphi 0, %s140
      %s144 = sphi 0, %s143
      %s160 = sphi 0, %s144
      %s166 = sphi 0, %s168
      %s169 = sphi 0, %s166
      %s170 = sphi 0, %s169
      %s186 = sphi 0, %s170
      %s192 = sphi 0, %s194
      %s195 = sphi 0, %s192
      %s196 = sphi 0, %s195
      %s212 = sphi 0, %s196
      %s218 = sphi 0, %s220
      %s221 = sphi 0, %s218
      %s222 = sphi 0, %s221
      %s238 = sphi 0, %s222
      %s244 = sphi 0, %s246
      %s247 = sphi 0, %s244
      %s248 = sphi 0, %s247
      %s264 = sphi 0, %s248
      %s270 = sphi 0, %s272
      %s273 = sphi 0, %s270
      %s274 = sphi 0, %s273
      %s290 = sphi 0, %s274
      %s296 = sphi 0, %s298
      %s299 = sphi 0, %s296
      %s300 = sphi 0, %s299
      %s316 = sphi 0, %s300
      %s322 = sphi 0, %s324
      %s325 = sphi 0, %s322
      %s326 = sphi 0, %s325
      %s342 = sphi 0, %s326
      %s348 = sphi 0, %s350
      %s351 = sphi 0, %s348
      %s352 = sphi 0, %s351
      %s368 = sphi 0, %s352
      %s374 = sphi 0, %s376
      %s377 = sphi 0, %s374
      %s378 = sphi 0, %s377
      %s394 = sphi 0, %s378
      %s398 = sphi 0, %s398
      %s400 = sphi 0, %s398
      %s401 = sphi 0, %s400
      %s415 = sphi 0, %s401
      %s419 = sphi 0, %s419
      %s421 = sphi 0, %s419
      %s422 = sphi 0, %s421
      %s436 = sphi 0, %s422
      %s446 = sphi 0, %s448
      %s449 = sphi 0, %s446
      %s450 = sphi 0, %s449
      %s466 = sphi 0, %s450
    $region4: #{tpu_custom_call.1} parent=1 // loop_header_branch
      %39 = sbr.rel (%p37) target = $region8
    $region5: #{tpu_custom_call.1} parent=1 // loop_body
      %s41 = ssub.s32 %s36, 1
      %s42 = ssub.s32 %s36, 2
      %s49 = sadd.s32 1, %s44
      %p50 = scmp.ge.s32.totalorder %s49, 2
      %s51 = scalar_select %p50, 0, %s49
      %s52 = sadd.s32 1, %s43
      %s53 = scalar_select %p50, %s52, %s43
      %p54 = scmp.ge.s32.totalorder %s53, 2
      %s55 = scalar_select %p54, 0, %s53
      %p56 = scmp.eq.s32.totalorder %s43, 0
      %s57 = scalar_select %p56, %s44, 0
      %p58 = scmp.eq.s32.totalorder %s55, 0
      %s59 = scalar_select %p58, %s51, 0
      %s60 = ssub.s32 %s57, %s59
      %p61 = scmp.eq.s32.totalorder %s60, 0
      %s63 = sadd.s32 %s62, 1
      %s64 = scalar_select %p61, %s62, %s63
      %p67 = pneg %p61
      %p68 = scmp.eq.s32.totalorder %s36, 3
      %p69 = por %p67, %p68
      %p70 = scmp.ne.s32.totalorder %s62, %s65
      %p71 = scmp.eq.s32.totalorder %s36, 0
      %p72 = por %p70, %p71
      %p73 = scmp.ne.s32.totalorder %s62, %s65
      %p74 = scmp.eq.s32.totalorder %s41, 3
      %p75 = por %p73, %p74
      %p76 = scmp.ne.s32.totalorder %s65, %s66
      %p77 = scmp.eq.s32.totalorder %s41, 0
      %p78 = por %p76, %p77
      %p79 = scmp.ne.s32.totalorder %s65, %s66
      %p80 = scmp.eq.s32.totalorder %s42, 3
      %p81 = por %p79, %p80
      %p83 = scmp.ne.s32.totalorder %s66, %s82
      %p84 = scmp.eq.s32.totalorder %s42, 0
      %p85 = por %p83, %p84
      %s86 = ssub.s32 %s43, %s55
      %p87 = scmp.eq.s32.totalorder %s86, 0
      %s89 = sadd.s32 %s88, 1
      %s90 = scalar_select %p87, %s88, %s89
      %p93 = pneg %p87
      %p94 = scmp.eq.s32.totalorder %s36, 3
      %p95 = por %p93, %p94
      %p96 = scmp.ne.s32.totalorder %s88, %s91
      %p97 = scmp.eq.s32.totalorder %s36, 0
      %p98 = por %p96, %p97
      %p99 = scmp.ne.s32.totalorder %s88, %s91
      %p100 = scmp.eq.s32.totalorder %s41, 3
      %p101 = por %p99, %p100
      %p102 = scmp.ne.s32.totalorder %s91, %s92
      %p103 = scmp.eq.s32.totalorder %s41, 0
      %p104 = por %p102, %p103
      %p105 = scmp.ne.s32.totalorder %s91, %s92
      %p106 = scmp.eq.s32.totalorder %s42, 3
      %p107 = por %p105, %p106
      %p109 = scmp.ne.s32.totalorder %s92, %s108
      %p110 = scmp.eq.s32.totalorder %s42, 0
      %p111 = por %p109, %p110
      %s112 = ssub.s32 %s43, %s55
      %p113 = scmp.eq.s32.totalorder %s112, 0
      %s115 = sadd.s32 %s114, 1
      %s116 = scalar_select %p113, %s114, %s115
      %p119 = pneg %p113
      %p120 = scmp.eq.s32.totalorder %s36, 3
      %p121 = por %p119, %p120
      %p122 = scmp.ne.s32.totalorder %s114, %s117
      %p123 = scmp.eq.s32.totalorder %s36, 0
      %p124 = por %p122, %p123
      %p125 = scmp.ne.s32.totalorder %s114, %s117
      %p126 = scmp.eq.s32.totalorder %s41, 3
      %p127 = por %p125, %p126
      %p128 = scmp.ne.s32.totalorder %s117, %s118
      %p129 = scmp.eq.s32.totalorder %s41, 0
      %p130 = por %p128, %p129
      %p131 = scmp.ne.s32.totalorder %s117, %s118
      %p132 = scmp.eq.s32.totalorder %s42, 3
      %p133 = por %p131, %p132
      %p135 = scmp.ne.s32.totalorder %s118, %s134
      %p136 = scmp.eq.s32.totalorder %s42, 0
      %p137 = por %p135, %p136
      %s138 = ssub.s32 %s43, %s55
      %p139 = scmp.eq.s32.totalorder %s138, 0
      %s141 = sadd.s32 %s140, 1
      %s142 = scalar_select %p139, %s140, %s141
      %p145 = pneg %p139
      %p146 = scmp.eq.s32.totalorder %s36, 3
      %p147 = por %p145, %p146
      %p148 = scmp.ne.s32.totalorder %s140, %s143
      %p149 = scmp.eq.s32.totalorder %s36, 0
      %p150 = por %p148, %p149
      %p151 = scmp.ne.s32.totalorder %s140, %s143
      %p152 = scmp.eq.s32.totalorder %s41, 3
      %p153 = por %p151, %p152
      %p154 = scmp.ne.s32.totalorder %s143, %s144
      %p155 = scmp.eq.s32.totalorder %s41, 0
      %p156 = por %p154, %p155
      %p157 = scmp.ne.s32.totalorder %s143, %s144
      %p158 = scmp.eq.s32.totalorder %s42, 3
      %p159 = por %p157, %p158
      %p161 = scmp.ne.s32.totalorder %s144, %s160
      %p162 = scmp.eq.s32.totalorder %s42, 0
      %p163 = por %p161, %p162
      %s164 = ssub.s32 %s43, %s55
      %p165 = scmp.eq.s32.totalorder %s164, 0
      %s167 = sadd.s32 %s166, 1
      %s168 = scalar_select %p165, %s166, %s167
      %p171 = pneg %p165
      %p172 = scmp.eq.s32.totalorder %s36, 3
      %p173 = por %p171, %p172
      %p174 = scmp.ne.s32.totalorder %s166, %s169
      %p175 = scmp.eq.s32.totalorder %s36, 0
      %p176 = por %p174, %p175
      %p177 = scmp.ne.s32.totalorder %s166, %s169
      %p178 = scmp.eq.s32.totalorder %s41, 3
      %p179 = por %p177, %p178
      %p180 = scmp.ne.s32.totalorder %s169, %s170
      %p181 = scmp.eq.s32.totalorder %s41, 0
      %p182 = por %p180, %p181
      %p183 = scmp.ne.s32.totalorder %s169, %s170
      %p184 = scmp.eq.s32.totalorder %s42, 3
      %p185 = por %p183, %p184
      %p187 = scmp.ne.s32.totalorder %s170, %s186
      %p188 = scmp.eq.s32.totalorder %s42, 0
      %p189 = por %p187, %p188
      %s190 = ssub.s32 %s43, %s55
      %p191 = scmp.eq.s32.totalorder %s190, 0
      %s193 = sadd.s32 %s192, 1
      %s194 = scalar_select %p191, %s192, %s193
      %p197 = pneg %p191
      %p198 = scmp.eq.s32.totalorder %s36, 3
      %p199 = por %p197, %p198
      %p200 = scmp.ne.s32.totalorder %s192, %s195
      %p201 = scmp.eq.s32.totalorder %s36, 0
      %p202 = por %p200, %p201
      %p203 = scmp.ne.s32.totalorder %s192, %s195
      %p204 = scmp.eq.s32.totalorder %s41, 3
      %p205 = por %p203, %p204
      %p206 = scmp.ne.s32.totalorder %s195, %s196
      %p207 = scmp.eq.s32.totalorder %s41, 0
      %p208 = por %p206, %p207
      %p209 = scmp.ne.s32.totalorder %s195, %s196
      %p210 = scmp.eq.s32.totalorder %s42, 3
      %p211 = por %p209, %p210
      %p213 = scmp.ne.s32.totalorder %s196, %s212
      %p214 = scmp.eq.s32.totalorder %s42, 0
      %p215 = por %p213, %p214
      %s216 = ssub.s32 %s43, %s55
      %p217 = scmp.eq.s32.totalorder %s216, 0
      %s219 = sadd.s32 %s218, 1
      %s220 = scalar_select %p217, %s218, %s219
      %p223 = pneg %p217
      %p224 = scmp.eq.s32.totalorder %s36, 3
      %p225 = por %p223, %p224
      %p226 = scmp.ne.s32.totalorder %s218, %s221
      %p227 = scmp.eq.s32.totalorder %s36, 0
      %p228 = por %p226, %p227
      %p229 = scmp.ne.s32.totalorder %s218, %s221
      %p230 = scmp.eq.s32.totalorder %s41, 3
      %p231 = por %p229, %p230
      %p232 = scmp.ne.s32.totalorder %s221, %s222
      %p233 = scmp.eq.s32.totalorder %s41, 0
      %p234 = por %p232, %p233
      %p235 = scmp.ne.s32.totalorder %s221, %s222
      %p236 = scmp.eq.s32.totalorder %s42, 3
      %p237 = por %p235, %p236
      %p239 = scmp.ne.s32.totalorder %s222, %s238
      %p240 = scmp.eq.s32.totalorder %s42, 0
      %p241 = por %p239, %p240
      %s242 = ssub.s32 %s43, %s55
      %p243 = scmp.eq.s32.totalorder %s242, 0
      %s245 = sadd.s32 %s244, 1
      %s246 = scalar_select %p243, %s244, %s245
      %p249 = pneg %p243
      %p250 = scmp.eq.s32.totalorder %s36, 3
      %p251 = por %p249, %p250
      %p252 = scmp.ne.s32.totalorder %s244, %s247
      %p253 = scmp.eq.s32.totalorder %s36, 0
      %p254 = por %p252, %p253
      %p255 = scmp.ne.s32.totalorder %s244, %s247
      %p256 = scmp.eq.s32.totalorder %s41, 3
      %p257 = por %p255, %p256
      %p258 = scmp.ne.s32.totalorder %s247, %s248
      %p259 = scmp.eq.s32.totalorder %s41, 0
      %p260 = por %p258, %p259
      %p261 = scmp.ne.s32.totalorder %s247, %s248
      %p262 = scmp.eq.s32.totalorder %s42, 3
      %p263 = por %p261, %p262
      %p265 = scmp.ne.s32.totalorder %s248, %s264
      %p266 = scmp.eq.s32.totalorder %s42, 0
      %p267 = por %p265, %p266
      %s268 = ssub.s32 %s43, %s55
      %p269 = scmp.eq.s32.totalorder %s268, 0
      %s271 = sadd.s32 %s270, 1
      %s272 = scalar_select %p269, %s270, %s271
      %p275 = pneg %p269
      %p276 = scmp.eq.s32.totalorder %s36, 3
      %p277 = por %p275, %p276
      %p278 = scmp.ne.s32.totalorder %s270, %s273
      %p279 = scmp.eq.s32.totalorder %s36, 0
      %p280 = por %p278, %p279
      %p281 = scmp.ne.s32.totalorder %s270, %s273
      %p282 = scmp.eq.s32.totalorder %s41, 3
      %p283 = por %p281, %p282
      %p284 = scmp.ne.s32.totalorder %s273, %s274
      %p285 = scmp.eq.s32.totalorder %s41, 0
      %p286 = por %p284, %p285
      %p287 = scmp.ne.s32.totalorder %s273, %s274
      %p288 = scmp.eq.s32.totalorder %s42, 3
      %p289 = por %p287, %p288
      %p291 = scmp.ne.s32.totalorder %s274, %s290
      %p292 = scmp.eq.s32.totalorder %s42, 0
      %p293 = por %p291, %p292
      %s294 = ssub.s32 %s43, %s55
      %p295 = scmp.eq.s32.totalorder %s294, 0
      %s297 = sadd.s32 %s296, 1
      %s298 = scalar_select %p295, %s296, %s297
      %p301 = pneg %p295
      %p302 = scmp.eq.s32.totalorder %s36, 3
      %p303 = por %p301, %p302
      %p304 = scmp.ne.s32.totalorder %s296, %s299
      %p305 = scmp.eq.s32.totalorder %s36, 0
      %p306 = por %p304, %p305
      %p307 = scmp.ne.s32.totalorder %s296, %s299
      %p308 = scmp.eq.s32.totalorder %s41, 3
      %p309 = por %p307, %p308
      %p310 = scmp.ne.s32.totalorder %s299, %s300
      %p311 = scmp.eq.s32.totalorder %s41, 0
      %p312 = por %p310, %p311
      %p313 = scmp.ne.s32.totalorder %s299, %s300
      %p314 = scmp.eq.s32.totalorder %s42, 3
      %p315 = por %p313, %p314
      %p317 = scmp.ne.s32.totalorder %s300, %s316
      %p318 = scmp.eq.s32.totalorder %s42, 0
      %p319 = por %p317, %p318
      %s320 = ssub.s32 %s43, %s55
      %p321 = scmp.eq.s32.totalorder %s320, 0
      %s323 = sadd.s32 %s322, 1
      %s324 = scalar_select %p321, %s322, %s323
      %p327 = pneg %p321
      %p328 = scmp.eq.s32.totalorder %s36, 3
      %p329 = por %p327, %p328
      %p330 = scmp.ne.s32.totalorder %s322, %s325
      %p331 = scmp.eq.s32.totalorder %s36, 0
      %p332 = por %p330, %p331
      %p333 = scmp.ne.s32.totalorder %s322, %s325
      %p334 = scmp.eq.s32.totalorder %s41, 3
      %p335 = por %p333, %p334
      %p336 = scmp.ne.s32.totalorder %s325, %s326
      %p337 = scmp.eq.s32.totalorder %s41, 0
      %p338 = por %p336, %p337
      %p339 = scmp.ne.s32.totalorder %s325, %s326
      %p340 = scmp.eq.s32.totalorder %s42, 3
      %p341 = por %p339, %p340
      %p343 = scmp.ne.s32.totalorder %s326, %s342
      %p344 = scmp.eq.s32.totalorder %s42, 0
      %p345 = por %p343, %p344
      %s346 = ssub.s32 %s43, %s55
      %p347 = scmp.eq.s32.totalorder %s346, 0
      %s349 = sadd.s32 %s348, 1
      %s350 = scalar_select %p347, %s348, %s349
      %p353 = pneg %p347
      %p354 = scmp.eq.s32.totalorder %s36, 3
      %p355 = por %p353, %p354
      %p356 = scmp.ne.s32.totalorder %s348, %s351
      %p357 = scmp.eq.s32.totalorder %s36, 0
      %p358 = por %p356, %p357
      %p359 = scmp.ne.s32.totalorder %s348, %s351
      %p360 = scmp.eq.s32.totalorder %s41, 3
      %p361 = por %p359, %p360
      %p362 = scmp.ne.s32.totalorder %s351, %s352
      %p363 = scmp.eq.s32.totalorder %s41, 0
      %p364 = por %p362, %p363
      %p365 = scmp.ne.s32.totalorder %s351, %s352
      %p366 = scmp.eq.s32.totalorder %s42, 3
      %p367 = por %p365, %p366
      %p369 = scmp.ne.s32.totalorder %s352, %s368
      %p370 = scmp.eq.s32.totalorder %s42, 0
      %p371 = por %p369, %p370
      %s372 = ssub.s32 %s43, %s55
      %p373 = scmp.eq.s32.totalorder %s372, 0
      %s375 = sadd.s32 %s374, 1
      %s376 = scalar_select %p373, %s374, %s375
      %p379 = pneg %p373
      %p380 = scmp.eq.s32.totalorder %s36, 3
      %p381 = por %p379, %p380
      %p382 = scmp.ne.s32.totalorder %s374, %s377
      %p383 = scmp.eq.s32.totalorder %s36, 0
      %p384 = por %p382, %p383
      %p385 = scmp.ne.s32.totalorder %s374, %s377
      %p386 = scmp.eq.s32.totalorder %s41, 3
      %p387 = por %p385, %p386
      %p388 = scmp.ne.s32.totalorder %s377, %s378
      %p389 = scmp.eq.s32.totalorder %s41, 0
      %p390 = por %p388, %p389
      %p391 = scmp.ne.s32.totalorder %s377, %s378
      %p392 = scmp.eq.s32.totalorder %s42, 3
      %p393 = por %p391, %p392
      %p395 = scmp.ne.s32.totalorder %s378, %s394
      %p396 = scmp.eq.s32.totalorder %s42, 0
      %p397 = por %p395, %p396
      %s399 = sadd.s32 %s398, 1
      %p402 = scmp.eq.s32.totalorder %s36, 3
      %p403 = scmp.ne.s32.totalorder %s398, %s400
      %p404 = scmp.eq.s32.totalorder %s36, 0
      %p405 = por %p403, %p404
      %p406 = scmp.ne.s32.totalorder %s398, %s400
      %p407 = scmp.eq.s32.totalorder %s41, 3
      %p408 = por %p406, %p407
      %p409 = scmp.ne.s32.totalorder %s400, %s401
      %p410 = scmp.eq.s32.totalorder %s41, 0
      %p411 = por %p409, %p410
      %p412 = scmp.ne.s32.totalorder %s400, %s401
      %p413 = scmp.eq.s32.totalorder %s42, 3
      %p414 = por %p412, %p413
      %p416 = scmp.ne.s32.totalorder %s401, %s415
      %p417 = scmp.eq.s32.totalorder %s42, 0
      %p418 = por %p416, %p417
      %s420 = sadd.s32 %s419, 1
      %p423 = scmp.eq.s32.totalorder %s36, 3
      %p424 = scmp.ne.s32.totalorder %s419, %s421
      %p425 = scmp.eq.s32.totalorder %s36, 0
      %p426 = por %p424, %p425
      %p427 = scmp.ne.s32.totalorder %s419, %s421
      %p428 = scmp.eq.s32.totalorder %s41, 3
      %p429 = por %p427, %p428
      %p430 = scmp.ne.s32.totalorder %s421, %s422
      %p431 = scmp.eq.s32.totalorder %s41, 0
      %p432 = por %p430, %p431
      %p433 = scmp.ne.s32.totalorder %s421, %s422
      %p434 = scmp.eq.s32.totalorder %s42, 3
      %p435 = por %p433, %p434
      %p437 = scmp.ne.s32.totalorder %s422, %s436
      %p438 = scmp.eq.s32.totalorder %s42, 0
      %p439 = por %p437, %p438
      %p440 = scmp.eq.s32.totalorder %s43, 1
      %s441 = scalar_select %p440, %s44, 0
      %p442 = scmp.eq.s32.totalorder %s55, 1
      %s443 = scalar_select %p442, %s51, 0
      %s444 = ssub.s32 %s441, %s443
      %p445 = scmp.eq.s32.totalorder %s444, 0
      %s447 = sadd.s32 %s446, 1
      %s448 = scalar_select %p445, %s446, %s447
      %p451 = pneg %p445
      %p452 = scmp.eq.s32.totalorder %s36, 3
      %p453 = por %p451, %p452
      %p454 = scmp.ne.s32.totalorder %s446, %s449
      %p455 = scmp.eq.s32.totalorder %s36, 0
      %p456 = por %p454, %p455
      %p457 = scmp.ne.s32.totalorder %s446, %s449
      %p458 = scmp.eq.s32.totalorder %s41, 3
      %p459 = por %p457, %p458
      %p460 = scmp.ne.s32.totalorder %s449, %s450
      %p461 = scmp.eq.s32.totalorder %s41, 0
      %p462 = por %p460, %p461
      %p463 = scmp.ne.s32.totalorder %s449, %s450
      %p464 = scmp.eq.s32.totalorder %s42, 3
      %p465 = por %p463, %p464
      %p467 = scmp.ne.s32.totalorder %s450, %s466
      %p468 = scmp.eq.s32.totalorder %s42, 0
      %p469 = por %p467, %p468
      %p470 = scmp.le.s32.totalorder 1, %s36
      %p471 = scmp.lt.s32.totalorder %s36, 5
      %p472 = pnand %p470, %p471
      %p473 = pneg %p472
      // Predicated region
      $region9: #{tpu_custom_call.1} parent=5 // pred_check
        _
      $region10: #{tpu_custom_call.1} parent=5 // pred_check_branch
        %475 = sbr.rel (%p472) target = $region12
      $region11: #{tpu_custom_call.1} parent=5 // pred_region
        %s476 = ssub.s32 %s36, 1
        // Predicated region
        $region13: #{tpu_custom_call.1} parent=11 // pred_check
          %p477 = pneg %p411
        $region14: #{tpu_custom_call.1} parent=11 // pred_check_branch
          %479 = sbr.rel (%p477) target = $region16
        $region15: #{tpu_custom_call.1} parent=11 // pred_region
          _
        $region16: #{tpu_custom_call.1} parent=11 // pred_fallthru
          _
        // Predicated region
        $region17: #{tpu_custom_call.1} parent=11 // pred_check
          %p480 = pneg %p432
        $region18: #{tpu_custom_call.1} parent=11 // pred_check_branch
          %482 = sbr.rel (%p480) target = $region20
        $region19: #{tpu_custom_call.1} parent=11 // pred_region
          _
        $region20: #{tpu_custom_call.1} parent=11 // pred_fallthru
          _
      $region12: #{tpu_custom_call.1} parent=5 // pred_fallthru
        _
      %p483 = scmp.lt.s32.totalorder %s36, 4
      // Predicated region
      $region21: #{tpu_custom_call.1} parent=5 // pred_check
        %p484 = pneg %p483
      $region22: #{tpu_custom_call.1} parent=5 // pred_check_branch
        %486 = sbr.rel (%p484) target = $region24
      $region23: #{tpu_custom_call.1} parent=5 // pred_region
        // Predicated region
        $region25: #{tpu_custom_call.1} parent=23 // pred_check
          %p487 = pneg %p72
        $region26: #{tpu_custom_call.1} parent=23 // pred_check_branch
          %489 = sbr.rel (%p487) target = $region28
        $region27: #{tpu_custom_call.1} parent=23 // pred_region
          %s490 = sand.u32 %s62, 1
          %s491 = scalar_lea.sflag [#allocation4], %s490
          %s492 = sand.u32 %s62, 1
          %s493 = smul.addr %s492, 16
          %s494 = scalar_lea.vmem [#allocation3], %s493
          %p495 = scmp.eq.s32.totalorder %s43, 0
          %s496 = scalar_select %p495, %s44, 0
          %s498 = ssub.s32 256, 256
          %499 = vsyncadd %s491, %s498
          %s500 = smul.addr %s496, 2
          %s501 = smul.addr %s500, 128
          %s502 = scalar_lea.hbm %s0, %s501
          %s503 = sshll.u32 %s494, 4
          %s504 = int_to_ptr.vmem [resolvable:$true] %s503
          %509 = dma.hbm_to_vmem [thread:$0]  %s502, 256, %s504, %s491, 128, 128, 8
        $region28: #{tpu_custom_call.1} parent=23 // pred_fallthru
          _
        // Predicated region
        $region29: #{tpu_custom_call.1} parent=23 // pred_check
          %p510 = pneg %p98
        $region30: #{tpu_custom_call.1} parent=23 // pred_check_branch
          %512 = sbr.rel (%p510) target = $region32
        $region31: #{tpu_custom_call.1} parent=23 // pred_region
          %s513 = sand.u32 %s36, 1
          %s514 = scalar_lea.sflag [#allocation7], %s513
          %s515 = sand.u32 %s88, 1
          %s516 = smul.addr %s515, 192
          %s517 = scalar_lea.vmem [#allocation6], %s516
          %s519 = ssub.s32 3072, 3072
          %520 = vsyncadd %s514, %s519
          %s521 = smul.addr %s43, 48
          %s522 = smul.addr %s521, 64
          %s523 = scalar_lea.hbm %s1, %s522
          %s524 = sshll.u32 %s517, 4
          %s525 = int_to_ptr.vmem [resolvable:$true] %s524
          %530 = dma.hbm_to_vmem [thread:$0]  %s523, 3072, %s525, %s514, 192, 192, 12
        $region32: #{tpu_custom_call.1} parent=23 // pred_fallthru
          _
        // Predicated region
        $region33: #{tpu_custom_call.1} parent=23 // pred_check
          %p531 = pneg %p124
        $region34: #{tpu_custom_call.1} parent=23 // pred_check_branch
          %533 = sbr.rel (%p531) target = $region36
        $region35: #{tpu_custom_call.1} parent=23 // pred_region
          %s534 = sand.u32 %s36, 1
          %s535 = scalar_lea.sflag [#allocation7], %s534
          %s536 = sand.u32 %s114, 1
          %s537 = smul.addr %s536, 3
          %s538 = scalar_lea.vmem [#allocation8], %s537
          %s540 = ssub.s32 48, 48
          %541 = vsyncadd %s535, %s540
          %s542 = smul.addr %s43, 3
          %s543 = smul.addr %s542, 16
          %s544 = scalar_lea.hbm %s2, %s543
          %s546 = sshll.u32 %s538, 4
          %s547 = int_to_ptr.vmem [resolvable:$true] %s546
          %549 = dma.hbm_to_vmem [thread:$0]  %s544, 48, %s547, %s535
        $region36: #{tpu_custom_call.1} parent=23 // pred_fallthru
          _
        // Predicated region
        $region37: #{tpu_custom_call.1} parent=23 // pred_check
          %p550 = pneg %p150
        $region38: #{tpu_custom_call.1} parent=23 // pred_check_branch
          %552 = sbr.rel (%p550) target = $region40
        $region39: #{tpu_custom_call.1} parent=23 // pred_region
          %s553 = sand.u32 %s36, 1
          %s554 = scalar_lea.sflag [#allocation10], %s553
          %s555 = sand.u32 %s140, 1
          %s556 = smul.addr %s555, 64
          %s557 = scalar_lea.vmem [#allocation9], %s556
          %s559 = ssub.s32 1024, 1024
          %560 = vsyncadd %s554, %s559
          %s561 = smul.addr %s43, 16
          %s562 = smul.addr %s561, 64
          %s563 = scalar_lea.hbm %s3, %s562
          %s564 = sshll.u32 %s557, 4
          %s565 = int_to_ptr.vmem [resolvable:$true] %s564
          %570 = dma.hbm_to_vmem [thread:$0]  %s563, 1024, %s565, %s554, 64, 64, 4
        $region40: #{tpu_custom_call.1} parent=23 // pred_fallthru
          _
        // Predicated region
        $region41: #{tpu_custom_call.1} parent=23 // pred_check
          %p571 = pneg %p176
        $region42: #{tpu_custom_call.1} parent=23 // pred_check_branch
          %573 = sbr.rel (%p571) target = $region44
        $region43: #{tpu_custom_call.1} parent=23 // pred_region
          %p574 = scmp.lt.s32.totalorder %s43, 1
          %s575 = scalar_select %p574, %s43, 1
          %s576 = scalar_lea.vmem %s4, %s575
        $region44: #{tpu_custom_call.1} parent=23 // pred_fallthru
          _
        // Predicated region
        $region45: #{tpu_custom_call.1} parent=23 // pred_check
          %p577 = pneg %p202
        $region46: #{tpu_custom_call.1} parent=23 // pred_check_branch
          %579 = sbr.rel (%p577) target = $region48
        $region47: #{tpu_custom_call.1} parent=23 // pred_region
          %p580 = scmp.lt.s32.totalorder %s43, 1
          %s581 = scalar_select %p580, %s43, 1
          %s582 = scalar_lea.vmem %s5, %s581
        $region48: #{tpu_custom_call.1} parent=23 // pred_fallthru
          _
        // Predicated region
        $region49: #{tpu_custom_call.1} parent=23 // pred_check
          %p583 = pneg %p228
        $region50: #{tpu_custom_call.1} parent=23 // pred_check_branch
          %585 = sbr.rel (%p583) target = $region52
        $region51: #{tpu_custom_call.1} parent=23 // pred_region
          %p586 = scmp.lt.s32.totalorder %s43, 1
          %s587 = scalar_select %p586, %s43, 1
          %s588 = scalar_lea.vmem %s6, %s587
        $region52: #{tpu_custom_call.1} parent=23 // pred_fallthru
          _
        // Predicated region
        $region53: #{tpu_custom_call.1} parent=23 // pred_check
          %p589 = pneg %p254
        $region54: #{tpu_custom_call.1} parent=23 // pred_check_branch
          %591 = sbr.rel (%p589) target = $region56
        $region55: #{tpu_custom_call.1} parent=23 // pred_region
          %s592 = sand.u32 %s36, 1
          %s593 = scalar_lea.sflag [#allocation10], %s592
          %s594 = sand.u32 %s244, 1
          %s595 = smul.addr %s594, 256
          %s596 = scalar_lea.vmem [#allocation11], %s595
          %s598 = ssub.s32 4096, 4096
          %599 = vsyncadd %s593, %s598
          %s600 = smul.addr %s43, 64
          %s601 = smul.addr %s600, 64
          %s602 = scalar_lea.hbm %s7, %s601
          %s603 = sshll.u32 %s596, 4
          %s604 = int_to_ptr.vmem [resolvable:$true] %s603
          %609 = dma.hbm_to_vmem [thread:$0]  %s602, 4096, %s604, %s593, 256, 256, 16
        $region56: #{tpu_custom_call.1} parent=23 // pred_fallthru
          _
        // Predicated region
        $region57: #{tpu_custom_call.1} parent=23 // pred_check
          %p610 = pneg %p280
        $region58: #{tpu_custom_call.1} parent=23 // pred_check_branch
          %612 = sbr.rel (%p610) target = $region60
        $region59: #{tpu_custom_call.1} parent=23 // pred_region
          %p613 = scmp.lt.s32.totalorder %s43, 1
          %s614 = scalar_select %p613, %s43, 1
          %s615 = smul.addr %s614, 4
          %s616 = scalar_lea.vmem %s8, %s615
        $region60: #{tpu_custom_call.1} parent=23 // pred_fallthru
          _
        // Predicated region
        $region61: #{tpu_custom_call.1} parent=23 // pred_check
          %p617 = pneg %p306
        $region62: #{tpu_custom_call.1} parent=23 // pred_check_branch
          %619 = sbr.rel (%p617) target = $region64
        $region63: #{tpu_custom_call.1} parent=23 // pred_region
          %s620 = sand.u32 %s296, 1
          %s621 = scalar_lea.sflag [#allocation13], %s620
          %s622 = sand.u32 %s296, 1
          %s623 = smul.addr %s622, 256
          %s624 = scalar_lea.vmem [#allocation12], %s623
          %s626 = ssub.s32 4096, 4096
          %627 = vsyncadd %s621, %s626
          %s628 = smul.addr %s43, 64
          %s629 = smul.addr %s628, 64
          %s630 = scalar_lea.hbm %s9, %s629
          %s631 = sshll.u32 %s624, 4
          %s632 = int_to_ptr.vmem [resolvable:$true] %s631
          %637 = dma.hbm_to_vmem [thread:$0]  %s630, 4096, %s632, %s621, 64, 64, 4
        $region64: #{tpu_custom_call.1} parent=23 // pred_fallthru
          _
        // Predicated region
        $region65: #{tpu_custom_call.1} parent=23 // pred_check
          %p638 = pneg %p332
        $region66: #{tpu_custom_call.1} parent=23 // pred_check_branch
          %640 = sbr.rel (%p638) target = $region68
        $region67: #{tpu_custom_call.1} parent=23 // pred_region
          %p641 = scmp.lt.s32.totalorder %s43, 1
          %s642 = scalar_select %p641, %s43, 1
          %s643 = scalar_lea.vmem %s10, %s642
        $region68: #{tpu_custom_call.1} parent=23 // pred_fallthru
          _
        // Predicated region
        $region69: #{tpu_custom_call.1} parent=23 // pred_check
          %p644 = pneg %p358
        $region70: #{tpu_custom_call.1} parent=23 // pred_check_branch
          %646 = sbr.rel (%p644) target = $region72
        $region71: #{tpu_custom_call.1} parent=23 // pred_region
          %p647 = scmp.lt.s32.totalorder %s43, 1
          %s648 = scalar_select %p647, %s43, 1
          %s649 = scalar_lea.vmem %s11, %s648
        $region72: #{tpu_custom_call.1} parent=23 // pred_fallthru
          _
        // Predicated region
        $region73: #{tpu_custom_call.1} parent=23 // pred_check
          %p650 = pneg %p384
        $region74: #{tpu_custom_call.1} parent=23 // pred_check_branch
          %652 = sbr.rel (%p650) target = $region76
        $region75: #{tpu_custom_call.1} parent=23 // pred_region
          %p653 = scmp.lt.s32.totalorder %s43, 1
          %s654 = scalar_select %p653, %s43, 1
          %s655 = scalar_lea.vmem %s12, %s654
        $region76: #{tpu_custom_call.1} parent=23 // pred_fallthru
          _
      $region24: #{tpu_custom_call.1} parent=5 // pred_fallthru
        _
      %p656 = scmp.le.s32.totalorder 1, %s36
      %p657 = scmp.lt.s32.totalorder %s36, 5
      %p658 = pnand %p656, %p657
      %p659 = pneg %p658
      // Predicated region
      $region77: #{tpu_custom_call.1} parent=5 // pred_check
        _
      $region78: #{tpu_custom_call.1} parent=5 // pred_check_branch
        %661 = sbr.rel (%p658) target = $region80
      $region79: #{tpu_custom_call.1} parent=5 // pred_region
        %s662 = ssub.s32 %s36, 1
        %s663 = sand.u32 %s65, 1
        %s664 = scalar_lea.sflag [#allocation4], %s663
        %s665 = sand.u32 %s65, 1
        %s666 = smul.addr %s665, 16
        %s667 = scalar_lea.vmem [#allocation3], %s666
        // Predicated region
        $region81: #{tpu_custom_call.1} parent=79 // pred_check
          %p668 = pneg %p78
        $region82: #{tpu_custom_call.1} parent=79 // pred_check_branch
          %670 = sbr.rel (%p668) target = $region84
        $region83: #{tpu_custom_call.1} parent=79 // pred_region
          %671 = dma.done %s664, 256
        $region84: #{tpu_custom_call.1} parent=79 // pred_fallthru
          _
        %s672 = sand.u32 %s41, 1
        %s673 = scalar_lea.sflag [#allocation7], %s672
        %s674 = sand.u32 %s91, 1
        %s675 = smul.addr %s674, 192
        %s676 = scalar_lea.vmem [#allocation6], %s675
        // Predicated region
        $region85: #{tpu_custom_call.1} parent=79 // pred_check
          %p677 = pneg %p104
        $region86: #{tpu_custom_call.1} parent=79 // pred_check_branch
          %679 = sbr.rel (%p677) target = $region88
        $region87: #{tpu_custom_call.1} parent=79 // pred_region
          %680 = dma.done %s673, 3072
        $region88: #{tpu_custom_call.1} parent=79 // pred_fallthru
          _
        %s681 = sand.u32 %s41, 1
        %s682 = scalar_lea.sflag [#allocation7], %s681
        %s683 = sand.u32 %s117, 1
        %s684 = smul.addr %s683, 3
        %s685 = scalar_lea.vmem [#allocation8], %s684
        // Predicated region
        $region89: #{tpu_custom_call.1} parent=79 // pred_check
          %p686 = pneg %p130
        $region90: #{tpu_custom_call.1} parent=79 // pred_check_branch
          %688 = sbr.rel (%p686) target = $region92
        $region91: #{tpu_custom_call.1} parent=79 // pred_region
          %689 = dma.done %s682, 48
        $region92: #{tpu_custom_call.1} parent=79 // pred_fallthru
          _
        %s690 = sand.u32 %s41, 1
        %s691 = scalar_lea.sflag [#allocation10], %s690
        %s692 = sand.u32 %s143, 1
        %s693 = smul.addr %s692, 64
        %s694 = scalar_lea.vmem [#allocation9], %s693
        // Predicated region
        $region93: #{tpu_custom_call.1} parent=79 // pred_check
          %p695 = pneg %p156
        $region94: #{tpu_custom_call.1} parent=79 // pred_check_branch
          %697 = sbr.rel (%p695) target = $region96
        $region95: #{tpu_custom_call.1} parent=79 // pred_region
          %698 = dma.done %s691, 1024
        $region96: #{tpu_custom_call.1} parent=79 // pred_fallthru
          _
        %s699 = sand.u32 %s41, 1
        %s700 = scalar_lea.sflag [#allocation10], %s699
        %s701 = sand.u32 %s247, 1
        %s702 = smul.addr %s701, 256
        %s703 = scalar_lea.vmem [#allocation11], %s702
        // Predicated region
        $region97: #{tpu_custom_call.1} parent=79 // pred_check
          %p704 = pneg %p260
        $region98: #{tpu_custom_call.1} parent=79 // pred_check_branch
          %706 = sbr.rel (%p704) target = $region100
        $region99: #{tpu_custom_call.1} parent=79 // pred_region
          %707 = dma.done %s700, 4096
        $region100: #{tpu_custom_call.1} parent=79 // pred_fallthru
          _
        %s708 = sand.u32 %s299, 1
        %s709 = scalar_lea.sflag [#allocation13], %s708
        %s710 = sand.u32 %s299, 1
        %s711 = smul.addr %s710, 256
        %s712 = scalar_lea.vmem [#allocation12], %s711
        // Predicated region
        $region101: #{tpu_custom_call.1} parent=79 // pred_check
          %p713 = pneg %p312
        $region102: #{tpu_custom_call.1} parent=79 // pred_check_branch
          %715 = sbr.rel (%p713) target = $region104
        $region103: #{tpu_custom_call.1} parent=79 // pred_region
          %716 = dma.done %s709, 4096
        $region104: #{tpu_custom_call.1} parent=79 // pred_fallthru
          _
        %s717 = sand.u32 %s65, 1
        %s718 = scalar_lea.sflag [#allocation4], %s717
        %s719 = sand.u32 %s65, 1
        %s720 = smul.addr %s719, 16
        %s721 = scalar_lea.vmem [#allocation3], %s720
        %p722 = pneg %p78
        %p723 = pneg %p75
        %s724 = sand.u32 %s41, 1
        %s725 = scalar_lea.sflag [#allocation7], %s724
        %s726 = sand.u32 %s91, 1
        %s727 = smul.addr %s726, 192
        %s728 = scalar_lea.vmem [#allocation6], %s727
        %p729 = pneg %p104
        %p730 = pneg %p101
        %s731 = sand.u32 %s41, 1
        %s732 = scalar_lea.sflag [#allocation7], %s731
        %s733 = sand.u32 %s117, 1
        %s734 = smul.addr %s733, 3
        %s735 = scalar_lea.vmem [#allocation8], %s734
        %p736 = pneg %p130
        %p737 = pneg %p127
        %s738 = sand.u32 %s41, 1
        %s739 = scalar_lea.sflag [#allocation10], %s738
        %s740 = sand.u32 %s143, 1
        %s741 = smul.addr %s740, 64
        %s742 = scalar_lea.vmem [#allocation9], %s741
        %p743 = pneg %p156
        %p744 = pneg %p153
        %p745 = scmp.lt.s32.totalorder %s45, 1
        %s746 = scalar_select %p745, %s45, 1
        %s747 = scalar_lea.vmem %s4, %s746
        %p748 = pneg %p182
        %p749 = pneg %p179
        %p750 = scmp.lt.s32.totalorder %s45, 1
        %s751 = scalar_select %p750, %s45, 1
        %s752 = scalar_lea.vmem %s5, %s751
        %p753 = pneg %p208
        %p754 = pneg %p205
        %p755 = scmp.lt.s32.totalorder %s45, 1
        %s756 = scalar_select %p755, %s45, 1
        %s757 = scalar_lea.vmem %s6, %s756
        %p758 = pneg %p234
        %p759 = pneg %p231
        %s760 = sand.u32 %s41, 1
        %s761 = scalar_lea.sflag [#allocation10], %s760
        %s762 = sand.u32 %s247, 1
        %s763 = smul.addr %s762, 256
        %s764 = scalar_lea.vmem [#allocation11], %s763
        %p765 = pneg %p260
        %p766 = pneg %p257
        %p767 = scmp.lt.s32.totalorder %s45, 1
        %s768 = scalar_select %p767, %s45, 1
        %s769 = smul.addr %s768, 4
        %s770 = scalar_lea.vmem %s8, %s769
        %p771 = pneg %p286
        %p772 = pneg %p283
        %s773 = sand.u32 %s299, 1
        %s774 = scalar_lea.sflag [#allocation13], %s773
        %s775 = sand.u32 %s299, 1
        %s776 = smul.addr %s775, 256
        %s777 = scalar_lea.vmem [#allocation12], %s776
        %p778 = pneg %p312
        %p779 = pneg %p309
        %p780 = scmp.lt.s32.totalorder %s45, 1
        %s781 = scalar_select %p780, %s45, 1
        %s782 = scalar_lea.vmem %s10, %s781
        %p783 = pneg %p338
        %p784 = pneg %p335
        %p785 = scmp.lt.s32.totalorder %s45, 1
        %s786 = scalar_select %p785, %s45, 1
        %s787 = scalar_lea.vmem %s11, %s786
        %p788 = pneg %p364
        %p789 = pneg %p361
        %p790 = scmp.lt.s32.totalorder %s45, 1
        %s791 = scalar_select %p790, %s45, 1
        %s792 = scalar_lea.vmem %s12, %s791
        %p793 = pneg %p390
        %p794 = pneg %p387
        %p795 = pneg %p411
        %p796 = pneg %p408
        %p797 = pneg %p432
        %p798 = pneg %p429
        %p799 = pneg %p462
        %p800 = pneg %p459
        %s801 = sand.u32 %s449, 1
        %s802 = scalar_lea.sflag [#allocation5], %s801
        %s803 = sand.u32 %s449, 1
        %s804 = smul.addr %s803, 16
        %s805 = scalar_lea.vmem [#allocation14], %s804
        %p806 = scmp.eq.s32.totalorder %s45, 0
        %s807 = scalar_select %p806, %s46, 0
        %p808 = scmp.lt.s32.totalorder %s45, 1
        %s809 = scalar_select %p808, %s45, 1
        %s810 = scalar_lea.vmem %s4, %s809
        %p811 = scmp.lt.s32.totalorder %s45, 1
        %s812 = scalar_select %p811, %s45, 1
        %s813 = scalar_lea.vmem %s5, %s812
        %p814 = scmp.lt.s32.totalorder %s45, 1
        %s815 = scalar_select %p814, %s45, 1
        %s816 = scalar_lea.vmem %s6, %s815
        %p817 = scmp.lt.s32.totalorder %s45, 1
        %s818 = scalar_select %p817, %s45, 1
        %s819 = smul.addr %s818, 4
        %s820 = scalar_lea.vmem %s8, %s819
        %p821 = scmp.lt.s32.totalorder %s45, 1
        %s822 = scalar_select %p821, %s45, 1
        %s823 = scalar_lea.vmem %s10, %s822
        %p824 = scmp.lt.s32.totalorder %s45, 1
        %s825 = scalar_select %p824, %s45, 1
        %s826 = scalar_lea.vmem %s11, %s825
        %p827 = scmp.lt.s32.totalorder %s45, 1
        %s828 = scalar_select %p827, %s45, 1
        %s829 = scalar_lea.vmem %s12, %s828
        %p830 = scmp.eq.s32.totalorder %s45, 1
        %s831 = scalar_select %p830, %s46, 0
        %p833 = scmp.eq.s32.totalorder %s45, 0
        // Predicated region
        $region105: #{tpu_custom_call.1} parent=79 // pred_check
          %p834 = pneg %p833
        $region106: #{tpu_custom_call.1} parent=79 // pred_check_branch
          %836 = sbr.rel (%p834) target = $region108
        $region107: #{tpu_custom_call.1} parent=79 // pred_region
          %v837 = vld [vmem:[%s667] sm:$0xff]
          %v838 = vld [vmem:[%s667 + $0x8] sm:$0xff]
          %s839 = smul.u32 %s46, 16
          %s840 = scalar_lea.vmem [#allocation2], %s839
          %841 = vst [vmem:[%s840] sm:$0xff] %v837
          %842 = vst [vmem:[%s840 + $0x8] sm:$0xff] %v838
        $region108: #{tpu_custom_call.1} parent=79 // pred_fallthru
          _
        %s843 = smul.u32 %s46, 16
        %s844 = scalar_lea.vmem [#allocation2], %s843
        %v845 = vld [vmem:[%s844] sm:$0xff]
        %v846 = vld [vmem:[%s844 + $0x8] sm:$0xff]
        %v847 = vpack.c.bf16 %v846, %v845
        %v848 = vld [vmem:[%s676] sm:$0xff]
        %v849 = vld [vmem:[%s676 + $0x8] sm:$0xf]
        %v850 = vld [vmem:[%s676 + $0xc] sm:$0xff]
        %v851 = vld [vmem:[%s676 + $0x14] sm:$0xf]
        %v852 = vld [vmem:[%s676 + $0x18] sm:$0xff]
        %v853 = vld [vmem:[%s676 + $0x20] sm:$0xf]
        %v854 = vld [vmem:[%s676 + $0x24] sm:$0xff]
        %v855 = vld [vmem:[%s676 + $0x2c] sm:$0xf]
        %v856 = vld [vmem:[%s676 + $0x30] sm:$0xff]
        %v857 = vld [vmem:[%s676 + $0x38] sm:$0xf]
        %v858 = vld [vmem:[%s676 + $0x3c] sm:$0xff]
        %v859 = vld [vmem:[%s676 + $0x44] sm:$0xf]
        %v860 = vld [vmem:[%s676 + $0x48] sm:$0xff]
        %v861 = vld [vmem:[%s676 + $0x50] sm:$0xf]
        %v862 = vld [vmem:[%s676 + $0x54] sm:$0xff]
        %v863 = vld [vmem:[%s676 + $0x5c] sm:$0xf]
        %v864 = vld [vmem:[%s676 + $0x60] sm:$0xff]
        %v865 = vld [vmem:[%s676 + $0x68] sm:$0xf]
        %v866 = vld [vmem:[%s676 + $0x6c] sm:$0xff]
        %v867 = vld [vmem:[%s676 + $0x74] sm:$0xf]
        %v868 = vld [vmem:[%s676 + $0x78] sm:$0xff]
        %v869 = vld [vmem:[%s676 + $0x80] sm:$0xf]
        %v870 = vld [vmem:[%s676 + $0x84] sm:$0xff]
        %v871 = vld [vmem:[%s676 + $0x8c] sm:$0xf]
        %v872 = vld [vmem:[%s676 + $0x90] sm:$0xff]
        %v873 = vld [vmem:[%s676 + $0x98] sm:$0xf]
        %v874 = vld [vmem:[%s676 + $0x9c] sm:$0xff]
        %v875 = vld [vmem:[%s676 + $0xa4] sm:$0xf]
        %v876 = vld [vmem:[%s676 + $0xa8] sm:$0xff]
        %v877 = vld [vmem:[%s676 + $0xb0] sm:$0xf]
        %v878 = vld [vmem:[%s676 + $0xb4] sm:$0xff]
        %v879 = vld [vmem:[%s676 + $0xbc] sm:$0xf]
        %v880 = vld [vmem:[%s685] sm:$0x7]
        %v882 = vlaneseq
        %v883 = vshrl.u32 %v882, 7
        %v884 = vsub.s32 0, %v883
        %v885 = vrot.slane %v880, %v884
        %v886 = vlaneseq
        %v887 = vshrl.u32 %v886, 7
        %v888 = vsub.s32 1, %v887
        %v889 = vrot.slane %v880, %v888
        %v890 = vlaneseq
        %v891 = vshrl.u32 %v890, 7
        %v892 = vsub.s32 2, %v891
        %v893 = vrot.slane %v880, %v892
        %v929 = vunpack.c.l.b16 %v848
        %v930 = vunpack.c.h.b16 %v848
        %v931 = vunpack.c.l.b16 %v849
        %v932 = vunpack.c.l.b16 %v850
        %v933 = vunpack.c.h.b16 %v850
        %v934 = vunpack.c.l.b16 %v851
        %v935 = vunpack.c.l.b16 %v852
        %v936 = vunpack.c.h.b16 %v852
        %v937 = vunpack.c.l.b16 %v853
        %v938 = vunpack.c.l.b16 %v854
        %v939 = vunpack.c.h.b16 %v854
        %v940 = vunpack.c.l.b16 %v855
        %v941 = vunpack.c.l.b16 %v856
        %v942 = vunpack.c.h.b16 %v856
        %v943 = vunpack.c.l.b16 %v857
        %v944 = vunpack.c.l.b16 %v858
        %v945 = vunpack.c.h.b16 %v858
        %v946 = vunpack.c.l.b16 %v859
        %v947 = vunpack.c.l.b16 %v860
        %v948 = vunpack.c.h.b16 %v860
        %v949 = vunpack.c.l.b16 %v861
        %v950 = vunpack.c.l.b16 %v862
        %v951 = vunpack.c.h.b16 %v862
        %v952 = vunpack.c.l.b16 %v863
        %v953 = vunpack.c.l.b16 %v864
        %v954 = vunpack.c.h.b16 %v864
        %v955 = vunpack.c.l.b16 %v865
        %v956 = vunpack.c.l.b16 %v866
        %v957 = vunpack.c.h.b16 %v866
        %v958 = vunpack.c.l.b16 %v867
        %v959 = vunpack.c.l.b16 %v868
        %v960 = vunpack.c.h.b16 %v868
        %v961 = vunpack.c.l.b16 %v869
        %v962 = vunpack.c.l.b16 %v870
        %v963 = vunpack.c.h.b16 %v870
        %v964 = vunpack.c.l.b16 %v871
        %v965 = vunpack.c.l.b16 %v872
        %v966 = vunpack.c.h.b16 %v872
        %v967 = vunpack.c.l.b16 %v873
        %v968 = vunpack.c.l.b16 %v874
        %v969 = vunpack.c.h.b16 %v874
        %v970 = vunpack.c.l.b16 %v875
        %v971 = vunpack.c.l.b16 %v876
        %v972 = vunpack.c.h.b16 %v876
        %v973 = vunpack.c.l.b16 %v877
        %v974 = vunpack.c.l.b16 %v878
        %v975 = vunpack.c.h.b16 %v878
        %v976 = vunpack.c.l.b16 %v879
        %v977 = vpack.c.b16 %v932, %v929
        %v978 = vpack.c.b16 %v933, %v930
        %v979 = vpack.c.b16 %v934, %v931
        %v980 = vpack.c.b16 %v938, %v935
        %v981 = vpack.c.b16 %v939, %v936
        %v982 = vpack.c.b16 %v940, %v937
        %v983 = vpack.c.b16 %v944, %v941
        %v984 = vpack.c.b16 %v945, %v942
        %v985 = vpack.c.b16 %v946, %v943
        %v986 = vpack.c.b16 %v950, %v947
        %v987 = vpack.c.b16 %v951, %v948
        %v988 = vpack.c.b16 %v952, %v949
        %v989 = vpack.c.b16 %v956, %v953
        %v990 = vpack.c.b16 %v957, %v954
        %v991 = vpack.c.b16 %v958, %v955
        %v992 = vpack.c.b16 %v962, %v959
        %v993 = vpack.c.b16 %v963, %v960
        %v994 = vpack.c.b16 %v964, %v961
        %v995 = vpack.c.b16 %v968, %v965
        %v996 = vpack.c.b16 %v969, %v966
        %v997 = vpack.c.b16 %v970, %v967
        %v998 = vpack.c.b16 %v974, %v971
        %v999 = vpack.c.b16 %v975, %v972
        %v1000 = vpack.c.b16 %v976, %v973
        %1025 = vmatprep.subr.bf16.mxu0 %v999
        %1026 = vmatpush1.bf16.msra.mxu0 %v998
        %1027 = vmatprep.subr.bf16.mxu0 %v996
        %1028 = vmatpush1.bf16.msra.mxu0 %v995
        %1029 = vmatprep.subr.bf16.mxu0 %v993
        %1030 = vmatpush1.bf16.msra.mxu0 %v992
        %1031 = vmatprep.subr.bf16.mxu0 %v990
        %1032 = vmatpush1.bf16.msra.mxu0 %v989
        %1033 = vmatprep.subr.bf16.mxu0 %v987
        %1034 = vmatpush1.bf16.msra.mxu0 %v986
        %1035 = vmatprep.subr.bf16.mxu0 %v984
        %1036 = vmatpush1.bf16.msra.mxu0 %v983
        %1037 = vmatprep.subr.bf16.mxu0 %v981
        %1038 = vmatpush1.bf16.msra.mxu0 %v980
        %1039 = vmatprep.subr.bf16.mxu0 %v978
        %1040 = vmatpush1.bf16.msra.mxu0 %v977
        %1041 = vmatprep.subr.bf16.mxu0 0
        %1042 = vmatpush2.bf16.msra.mxu0 0
        %1043 = vmatprep.subr.bf16.mxu0 0
        %1044 = vmatpush2.bf16.msra.mxu0 0
        %1045 = vmatprep.subr.bf16.mxu0 0
        %1046 = vmatpush2.bf16.msra.mxu0 0
        %1047 = vmatprep.subr.bf16.mxu0 0
        %1048 = vmatpush2.bf16.msra.mxu0 0
        %1049 = vmatprep.subr.bf16.mxu0 0
        %1050 = vmatpush2.bf16.msra.mxu0 0
        %1051 = vmatprep.subr.bf16.mxu0 0
        %1052 = vmatpush2.bf16.msra.mxu0 0
        %1053 = vmatprep.subr.bf16.mxu0 0
        %1054 = vmatpush2.bf16.msra.mxu0 0
        %1055 = vmatprep.subr.bf16.mxu0 0
        %1056 = vmatpush2.bf16.msra.mxu0 0
        %1057 = vmatprep.mubr.bf16.mxu0 0
        %1058 = vmatmul.mubr.bf16.gmra.mxu0 %v847
        %v1059 = vpop.f32.mrf.mxu0
        %v1060 = vadd.f32 %v885, %v1059
        %v1061 = vpop.f32.mrf.mxu0
        %v1062 = vadd.f32 %v889, %v1061
        %v1063 = vpop.f32.mrf.mxu0
        %v1064 = vadd.f32 %v885, %v1063
        %v1065 = vpop.f32.mrf.mxu0
        %v1066 = vadd.f32 %v889, %v1065
        %1067 = vdwg.mxu0
        %1068 = vmatprep.subr.bf16.mxu0 0
        %1069 = vmatpush1.bf16.msra.mxu0 %v1000
        %1070 = vmatprep.subr.bf16.mxu0 0
        %1071 = vmatpush1.bf16.msra.mxu0 %v997
        %1072 = vmatprep.subr.bf16.mxu0 0
        %1073 = vmatpush1.bf16.msra.mxu0 %v994
        %1074 = vmatprep.subr.bf16.mxu0 0
        %1075 = vmatpush1.bf16.msra.mxu0 %v991
        %1076 = vmatprep.subr.bf16.mxu0 0
        %1077 = vmatpush1.bf16.msra.mxu0 %v988
        %1078 = vmatprep.subr.bf16.mxu0 0
        %1079 = vmatpush1.bf16.msra.mxu0 %v985
        %1080 = vmatprep.subr.bf16.mxu0 0
        %1081 = vmatpush1.bf16.msra.mxu0 %v982
        %1082 = vmatprep.subr.bf16.mxu0 0
        %1083 = vmatpush1.bf16.msra.mxu0 %v979
        %1084 = vmatprep.subr.bf16.mxu0 0
        %1085 = vmatpush2.bf16.msra.mxu0 0
        %1086 = vmatprep.subr.bf16.mxu0 0
        %1087 = vmatpush2.bf16.msra.mxu0 0
        %1088 = vmatprep.subr.bf16.mxu0 0
        %1089 = vmatpush2.bf16.msra.mxu0 0
        %1090 = vmatprep.subr.bf16.mxu0 0
        %1091 = vmatpush2.bf16.msra.mxu0 0
        %1092 = vmatprep.subr.bf16.mxu0 0
        %1093 = vmatpush2.bf16.msra.mxu0 0
        %1094 = vmatprep.subr.bf16.mxu0 0
        %1095 = vmatpush2.bf16.msra.mxu0 0
        %1096 = vmatprep.subr.bf16.mxu0 0
        %1097 = vmatpush2.bf16.msra.mxu0 0
        %1098 = vmatprep.subr.bf16.mxu0 0
        %1099 = vmatpush2.bf16.msra.mxu0 0
        %1100 = vmatprep.mubr.bf16.mxu0 0
        %1101 = vmatmul.mubr.bf16.gmra.mxu0 %v847
        %v1102 = vpop.f32.mrf.mxu0
        %v1103 = vadd.f32 %v893, %v1102
        %v1104 = vpop.f32.mrf.mxu0
        %v1105 = vpop.f32.mrf.mxu0
        %v1106 = vadd.f32 %v893, %v1105
        %v1107 = vpop.f32.mrf.mxu0
        %1108 = vdwg.mxu0
        %v1109 = vmul.f32 %v1060, 0.17677669
        %v1110 = vmul.f32 %v1064, 0.17677669
        %1113 = vrot.lane.b32.xlu0 %v1109, 96
        %v1114 = vpop.permute.xlu0 %1113
        %1115 = vrot.lane.b32.xlu0 %v1110, 96
        %v1116 = vpop.permute.xlu0 %1115
        %1119 = vrot.lane.b32.xlu0 %v1109, 64
        %v1120 = vpop.permute.xlu0 %1119
        %1121 = vrot.lane.b32.xlu0 %v1110, 64
        %v1122 = vpop.permute.xlu0 %1121
        %1125 = vrot.lane.b32.xlu0 %v1109, 32
        %v1126 = vpop.permute.xlu0 %1125
        %1127 = vrot.lane.b32.xlu0 %v1110, 32
        %v1128 = vpop.permute.xlu0 %1127
        %v1131 = vcombine.low %v1109, %v1120
        %v1132 = vcombine.high %v1109, %v1120
        %v1134 = vunpack.c.l.s4 1983009808
        %v1135 = vunpack.c.0.s8 %v1134
        %v1136 = vlaneseq
        %v1137 = vshrl.u32 %v1136, 7
        %v1138 = vsub.s32 %v1135, %v1137
        %v1139 = vrot.slane %v1131, %v1138
        %v1141 = vunpack.c.l.s4 1983009808
        %v1142 = vunpack.c.0.s8 %v1141
        %v1143 = vlaneseq
        %v1144 = vshrl.u32 %v1143, 7
        %v1145 = vsub.s32 %v1142, %v1144
        %v1146 = vrot.slane %v1132, %v1145
        %v1147 = vcombine.low %v1114, %v1126
        %v1148 = vcombine.high %v1114, %v1126
        %v1150 = vunpack.c.l.s4 1983009808
        %v1151 = vunpack.c.0.s8 %v1150
        %v1152 = vlaneseq
        %v1153 = vshrl.u32 %v1152, 7
        %v1154 = vsub.s32 %v1151, %v1153
        %v1155 = vrot.slane %v1147, %v1154
        %v1157 = vunpack.c.l.s4 1983009808
        %v1158 = vunpack.c.0.s8 %v1157
        %v1159 = vlaneseq
        %v1160 = vshrl.u32 %v1159, 7
        %v1161 = vsub.s32 %v1158, %v1160
        %v1162 = vrot.slane %v1148, %v1161
        %v1163 = vcombine.low %v1139, %v1155
        %v1164 = vcombine.high %v1139, %v1155
        %v1166 = vunpack.c.l.s4 1934713408
        %v1167 = vunpack.c.0.s8 %v1166
        %v1168 = vlaneseq
        %v1169 = vshrl.u32 %v1168, 7
        %v1170 = vsub.s32 %v1167, %v1169
        %v1171 = vrot.slane %v1163, %v1170
        %v1173 = vunpack.c.l.s4 1934713408
        %v1174 = vunpack.c.0.s8 %v1173
        %v1175 = vlaneseq
        %v1176 = vshrl.u32 %v1175, 7
        %v1177 = vsub.s32 %v1174, %v1176
        %v1178 = vrot.slane %v1164, %v1177
        %v1179 = vcombine.low %v1146, %v1162
        %v1180 = vcombine.high %v1146, %v1162
        %v1182 = vunpack.c.l.s4 1934713408
        %v1183 = vunpack.c.0.s8 %v1182
        %v1184 = vlaneseq
        %v1185 = vshrl.u32 %v1184, 7
        %v1186 = vsub.s32 %v1183, %v1185
        %v1187 = vrot.slane %v1179, %v1186
        %v1189 = vunpack.c.l.s4 1934713408
        %v1190 = vunpack.c.0.s8 %v1189
        %v1191 = vlaneseq
        %v1192 = vshrl.u32 %v1191, 7
        %v1193 = vsub.s32 %v1190, %v1192
        %v1194 = vrot.slane %v1180, %v1193
        %v1195 = vcombine.high %v1171, 0.0
        %v1196 = vcombine.high %v1178, 0.0
        %v1197 = vcombine.high %v1187, 0.0
        %v1198 = vcombine.high %v1194, 0.0
        %v1199 = vcombine.low %v1110, %v1122
        %v1200 = vcombine.high %v1110, %v1122
        %v1202 = vunpack.c.l.s4 1983009808
        %v1203 = vunpack.c.0.s8 %v1202
        %v1204 = vlaneseq
        %v1205 = vshrl.u32 %v1204, 7
        %v1206 = vsub.s32 %v1203, %v1205
        %v1207 = vrot.slane %v1199, %v1206
        %v1209 = vunpack.c.l.s4 1983009808
        %v1210 = vunpack.c.0.s8 %v1209
        %v1211 = vlaneseq
        %v1212 = vshrl.u32 %v1211, 7
        %v1213 = vsub.s32 %v1210, %v1212
        %v1214 = vrot.slane %v1200, %v1213
        %v1215 = vcombine.low %v1116, %v1128
        %v1216 = vcombine.high %v1116, %v1128
        %v1218 = vunpack.c.l.s4 1983009808
        %v1219 = vunpack.c.0.s8 %v1218
        %v1220 = vlaneseq
        %v1221 = vshrl.u32 %v1220, 7
        %v1222 = vsub.s32 %v1219, %v1221
        %v1223 = vrot.slane %v1215, %v1222
        %v1225 = vunpack.c.l.s4 1983009808
        %v1226 = vunpack.c.0.s8 %v1225
        %v1227 = vlaneseq
        %v1228 = vshrl.u32 %v1227, 7
        %v1229 = vsub.s32 %v1226, %v1228
        %v1230 = vrot.slane %v1216, %v1229
        %v1231 = vcombine.low %v1207, %v1223
        %v1232 = vcombine.high %v1207, %v1223
        %v1234 = vunpack.c.l.s4 1934713408
        %v1235 = vunpack.c.0.s8 %v1234
        %v1236 = vlaneseq
        %v1237 = vshrl.u32 %v1236, 7
        %v1238 = vsub.s32 %v1235, %v1237
        %v1239 = vrot.slane %v1231, %v1238
        %v1241 = vunpack.c.l.s4 1934713408
        %v1242 = vunpack.c.0.s8 %v1241
        %v1243 = vlaneseq
        %v1244 = vshrl.u32 %v1243, 7
        %v1245 = vsub.s32 %v1242, %v1244
        %v1246 = vrot.slane %v1232, %v1245
        %v1247 = vcombine.low %v1214, %v1230
        %v1248 = vcombine.high %v1214, %v1230
        %v1250 = vunpack.c.l.s4 1934713408
        %v1251 = vunpack.c.0.s8 %v1250
        %v1252 = vlaneseq
        %v1253 = vshrl.u32 %v1252, 7
        %v1254 = vsub.s32 %v1251, %v1253
        %v1255 = vrot.slane %v1247, %v1254
        %v1257 = vunpack.c.l.s4 1934713408
        %v1258 = vunpack.c.0.s8 %v1257
        %v1259 = vlaneseq
        %v1260 = vshrl.u32 %v1259, 7
        %v1261 = vsub.s32 %v1258, %v1260
        %v1262 = vrot.slane %v1248, %v1261
        %v1263 = vcombine.high %v1239, 0.0
        %v1264 = vcombine.high %v1246, 0.0
        %v1265 = vcombine.high %v1255, 0.0
        %v1266 = vcombine.high %v1262, 0.0
        %v1267 = vcombine.low %v1171, %v1178
        %v1269 = vunpack.c.l.s4 1983009808
        %v1270 = vunpack.c.0.s8 %v1269
        %v1271 = vlaneseq
        %v1272 = vshrl.u32 %v1271, 7
        %v1273 = vsub.s32 %v1270, %v1272
        %v1274 = vrot.slane %v1267, %v1273
        %v1275 = vcombine.low %v1195, %v1196
        %v1277 = vunpack.c.l.s4 1983009808
        %v1278 = vunpack.c.0.s8 %v1277
        %v1279 = vlaneseq
        %v1280 = vshrl.u32 %v1279, 7
        %v1281 = vsub.s32 %v1278, %v1280
        %v1282 = vrot.slane %v1275, %v1281
        %v1283 = vcombine.low %v1187, %v1194
        %v1285 = vunpack.c.l.s4 1983009808
        %v1286 = vunpack.c.0.s8 %v1285
        %v1287 = vlaneseq
        %v1288 = vshrl.u32 %v1287, 7
        %v1289 = vsub.s32 %v1286, %v1288
        %v1290 = vrot.slane %v1283, %v1289
        %v1291 = vcombine.low %v1197, %v1198
        %v1293 = vunpack.c.l.s4 1983009808
        %v1294 = vunpack.c.0.s8 %v1293
        %v1295 = vlaneseq
        %v1296 = vshrl.u32 %v1295, 7
        %v1297 = vsub.s32 %v1294, %v1296
        %v1298 = vrot.slane %v1291, %v1297
        %v1299 = vcombine.low %v1274, %v1282
        %v1300 = vcombine.high %v1274, %v1282
        %v1302 = vunpack.c.l.s4 1934713408
        %v1303 = vunpack.c.0.s8 %v1302
        %v1304 = vlaneseq
        %v1305 = vshrl.u32 %v1304, 7
        %v1306 = vsub.s32 %v1303, %v1305
        %v1307 = vrot.slane %v1299, %v1306
        %v1309 = vunpack.c.l.s4 1934713408
        %v1310 = vunpack.c.0.s8 %v1309
        %v1311 = vlaneseq
        %v1312 = vshrl.u32 %v1311, 7
        %v1313 = vsub.s32 %v1310, %v1312
        %v1314 = vrot.slane %v1300, %v1313
        %v1315 = vcombine.low %v1290, %v1298
        %v1316 = vcombine.high %v1290, %v1298
        %v1318 = vunpack.c.l.s4 1934713408
        %v1319 = vunpack.c.0.s8 %v1318
        %v1320 = vlaneseq
        %v1321 = vshrl.u32 %v1320, 7
        %v1322 = vsub.s32 %v1319, %v1321
        %v1323 = vrot.slane %v1315, %v1322
        %v1325 = vunpack.c.l.s4 1934713408
        %v1326 = vunpack.c.0.s8 %v1325
        %v1327 = vlaneseq
        %v1328 = vshrl.u32 %v1327, 7
        %v1329 = vsub.s32 %v1326, %v1328
        %v1330 = vrot.slane %v1316, %v1329
        %v1331 = vcombine.low %v1307, %v1323
        %v1332 = vcombine.high %v1307, %v1323
        %v1333 = vcombine.low %v1314, %v1330
        %v1334 = vcombine.high %v1314, %v1330
        %v1335 = vcombine.low %v1239, %v1246
        %v1337 = vunpack.c.l.s4 1983009808
        %v1338 = vunpack.c.0.s8 %v1337
        %v1339 = vlaneseq
        %v1340 = vshrl.u32 %v1339, 7
        %v1341 = vsub.s32 %v1338, %v1340
        %v1342 = vrot.slane %v1335, %v1341
        %v1343 = vcombine.low %v1263, %v1264
        %v1345 = vunpack.c.l.s4 1983009808
        %v1346 = vunpack.c.0.s8 %v1345
        %v1347 = vlaneseq
        %v1348 = vshrl.u32 %v1347, 7
        %v1349 = vsub.s32 %v1346, %v1348
        %v1350 = vrot.slane %v1343, %v1349
        %v1351 = vcombine.low %v1255, %v1262
        %v1353 = vunpack.c.l.s4 1983009808
        %v1354 = vunpack.c.0.s8 %v1353
        %v1355 = vlaneseq
        %v1356 = vshrl.u32 %v1355, 7
        %v1357 = vsub.s32 %v1354, %v1356
        %v1358 = vrot.slane %v1351, %v1357
        %v1359 = vcombine.low %v1265, %v1266
        %v1361 = vunpack.c.l.s4 1983009808
        %v1362 = vunpack.c.0.s8 %v1361
        %v1363 = vlaneseq
        %v1364 = vshrl.u32 %v1363, 7
        %v1365 = vsub.s32 %v1362, %v1364
        %v1366 = vrot.slane %v1359, %v1365
        %v1367 = vcombine.low %v1342, %v1350
        %v1368 = vcombine.high %v1342, %v1350
        %v1370 = vunpack.c.l.s4 1934713408
        %v1371 = vunpack.c.0.s8 %v1370
        %v1372 = vlaneseq
        %v1373 = vshrl.u32 %v1372, 7
        %v1374 = vsub.s32 %v1371, %v1373
        %v1375 = vrot.slane %v1367, %v1374
        %v1377 = vunpack.c.l.s4 1934713408
        %v1378 = vunpack.c.0.s8 %v1377
        %v1379 = vlaneseq
        %v1380 = vshrl.u32 %v1379, 7
        %v1381 = vsub.s32 %v1378, %v1380
        %v1382 = vrot.slane %v1368, %v1381
        %v1383 = vcombine.low %v1358, %v1366
        %v1384 = vcombine.high %v1358, %v1366
        %v1386 = vunpack.c.l.s4 1934713408
        %v1387 = vunpack.c.0.s8 %v1386
        %v1388 = vlaneseq
        %v1389 = vshrl.u32 %v1388, 7
        %v1390 = vsub.s32 %v1387, %v1389
        %v1391 = vrot.slane %v1383, %v1390
        %v1393 = vunpack.c.l.s4 1934713408
        %v1394 = vunpack.c.0.s8 %v1393
        %v1395 = vlaneseq
        %v1396 = vshrl.u32 %v1395, 7
        %v1397 = vsub.s32 %v1394, %v1396
        %v1398 = vrot.slane %v1384, %v1397
        %v1399 = vcombine.low %v1375, %v1391
        %v1400 = vcombine.high %v1375, %v1391
        %v1401 = vcombine.low %v1382, %v1398
        %v1402 = vcombine.high %v1382, %v1398
        %v1403 = vpack.c.bf16 %v1399, %v1331
        %v1404 = vpack.c.bf16 %v1400, %v1332
        %v1405 = vpack.c.bf16 %v1401, %v1333
        %v1406 = vpack.c.bf16 %v1402, %v1334
        %1409 = vrot.lane.b32.xlu0 %v1062, 96
        %v1410 = vpop.permute.xlu0 %1409
        %1411 = vrot.lane.b32.xlu0 %v1066, 96
        %v1412 = vpop.permute.xlu0 %1411
        %1415 = vrot.lane.b32.xlu0 %v1062, 64
        %v1416 = vpop.permute.xlu0 %1415
        %1417 = vrot.lane.b32.xlu0 %v1066, 64
        %v1418 = vpop.permute.xlu0 %1417
        %1421 = vrot.lane.b32.xlu0 %v1062, 32
        %v1422 = vpop.permute.xlu0 %1421
        %1423 = vrot.lane.b32.xlu0 %v1066, 32
        %v1424 = vpop.permute.xlu0 %1423
        %v1427 = vcombine.low %v1062, %v1416
        %v1428 = vcombine.high %v1062, %v1416
        %v1430 = vunpack.c.l.s4 1983009808
        %v1431 = vunpack.c.0.s8 %v1430
        %v1432 = vlaneseq
        %v1433 = vshrl.u32 %v1432, 7
        %v1434 = vsub.s32 %v1431, %v1433
        %v1435 = vrot.slane %v1427, %v1434
        %v1437 = vunpack.c.l.s4 1983009808
        %v1438 = vunpack.c.0.s8 %v1437
        %v1439 = vlaneseq
        %v1440 = vshrl.u32 %v1439, 7
        %v1441 = vsub.s32 %v1438, %v1440
        %v1442 = vrot.slane %v1428, %v1441
        %v1443 = vcombine.low %v1410, %v1422
        %v1444 = vcombine.high %v1410, %v1422
        %v1446 = vunpack.c.l.s4 1983009808
        %v1447 = vunpack.c.0.s8 %v1446
        %v1448 = vlaneseq
        %v1449 = vshrl.u32 %v1448, 7
        %v1450 = vsub.s32 %v1447, %v1449
        %v1451 = vrot.slane %v1443, %v1450
        %v1453 = vunpack.c.l.s4 1983009808
        %v1454 = vunpack.c.0.s8 %v1453
        %v1455 = vlaneseq
        %v1456 = vshrl.u32 %v1455, 7
        %v1457 = vsub.s32 %v1454, %v1456
        %v1458 = vrot.slane %v1444, %v1457
        %v1459 = vcombine.low %v1435, %v1451
        %v1460 = vcombine.high %v1435, %v1451
        %v1462 = vunpack.c.l.s4 1934713408
        %v1463 = vunpack.c.0.s8 %v1462
        %v1464 = vlaneseq
        %v1465 = vshrl.u32 %v1464, 7
        %v1466 = vsub.s32 %v1463, %v1465
        %v1467 = vrot.slane %v1459, %v1466
        %v1469 = vunpack.c.l.s4 1934713408
        %v1470 = vunpack.c.0.s8 %v1469
        %v1471 = vlaneseq
        %v1472 = vshrl.u32 %v1471, 7
        %v1473 = vsub.s32 %v1470, %v1472
        %v1474 = vrot.slane %v1460, %v1473
        %v1475 = vcombine.low %v1442, %v1458
        %v1476 = vcombine.high %v1442, %v1458
        %v1478 = vunpack.c.l.s4 1934713408
        %v1479 = vunpack.c.0.s8 %v1478
        %v1480 = vlaneseq
        %v1481 = vshrl.u32 %v1480, 7
        %v1482 = vsub.s32 %v1479, %v1481
        %v1483 = vrot.slane %v1475, %v1482
        %v1485 = vunpack.c.l.s4 1934713408
        %v1486 = vunpack.c.0.s8 %v1485
        %v1487 = vlaneseq
        %v1488 = vshrl.u32 %v1487, 7
        %v1489 = vsub.s32 %v1486, %v1488
        %v1490 = vrot.slane %v1476, %v1489
        %v1491 = vcombine.high %v1467, 0.0
        %v1492 = vcombine.high %v1474, 0.0
        %v1493 = vcombine.high %v1483, 0.0
        %v1494 = vcombine.high %v1490, 0.0
        %v1495 = vcombine.low %v1066, %v1418
        %v1496 = vcombine.high %v1066, %v1418
        %v1498 = vunpack.c.l.s4 1983009808
        %v1499 = vunpack.c.0.s8 %v1498
        %v1500 = vlaneseq
        %v1501 = vshrl.u32 %v1500, 7
        %v1502 = vsub.s32 %v1499, %v1501
        %v1503 = vrot.slane %v1495, %v1502
        %v1505 = vunpack.c.l.s4 1983009808
        %v1506 = vunpack.c.0.s8 %v1505
        %v1507 = vlaneseq
        %v1508 = vshrl.u32 %v1507, 7
        %v1509 = vsub.s32 %v1506, %v1508
        %v1510 = vrot.slane %v1496, %v1509
        %v1511 = vcombine.low %v1412, %v1424
        %v1512 = vcombine.high %v1412, %v1424
        %v1514 = vunpack.c.l.s4 1983009808
        %v1515 = vunpack.c.0.s8 %v1514
        %v1516 = vlaneseq
        %v1517 = vshrl.u32 %v1516, 7
        %v1518 = vsub.s32 %v1515, %v1517
        %v1519 = vrot.slane %v1511, %v1518
        %v1521 = vunpack.c.l.s4 1983009808
        %v1522 = vunpack.c.0.s8 %v1521
        %v1523 = vlaneseq
        %v1524 = vshrl.u32 %v1523, 7
        %v1525 = vsub.s32 %v1522, %v1524
        %v1526 = vrot.slane %v1512, %v1525
        %v1527 = vcombine.low %v1503, %v1519
        %v1528 = vcombine.high %v1503, %v1519
        %v1530 = vunpack.c.l.s4 1934713408
        %v1531 = vunpack.c.0.s8 %v1530
        %v1532 = vlaneseq
        %v1533 = vshrl.u32 %v1532, 7
        %v1534 = vsub.s32 %v1531, %v1533
        %v1535 = vrot.slane %v1527, %v1534
        %v1537 = vunpack.c.l.s4 1934713408
        %v1538 = vunpack.c.0.s8 %v1537
        %v1539 = vlaneseq
        %v1540 = vshrl.u32 %v1539, 7
        %v1541 = vsub.s32 %v1538, %v1540
        %v1542 = vrot.slane %v1528, %v1541
        %v1543 = vcombine.low %v1510, %v1526
        %v1544 = vcombine.high %v1510, %v1526
        %v1546 = vunpack.c.l.s4 1934713408
        %v1547 = vunpack.c.0.s8 %v1546
        %v1548 = vlaneseq
        %v1549 = vshrl.u32 %v1548, 7
        %v1550 = vsub.s32 %v1547, %v1549
        %v1551 = vrot.slane %v1543, %v1550
        %v1553 = vunpack.c.l.s4 1934713408
        %v1554 = vunpack.c.0.s8 %v1553
        %v1555 = vlaneseq
        %v1556 = vshrl.u32 %v1555, 7
        %v1557 = vsub.s32 %v1554, %v1556
        %v1558 = vrot.slane %v1544, %v1557
        %v1559 = vcombine.high %v1535, 0.0
        %v1560 = vcombine.high %v1542, 0.0
        %v1561 = vcombine.high %v1551, 0.0
        %v1562 = vcombine.high %v1558, 0.0
        %v1563 = vcombine.low %v1467, %v1474
        %v1565 = vunpack.c.l.s4 1983009808
        %v1566 = vunpack.c.0.s8 %v1565
        %v1567 = vlaneseq
        %v1568 = vshrl.u32 %v1567, 7
        %v1569 = vsub.s32 %v1566, %v1568
        %v1570 = vrot.slane %v1563, %v1569
        %v1571 = vcombine.low %v1491, %v1492
        %v1573 = vunpack.c.l.s4 1983009808
        %v1574 = vunpack.c.0.s8 %v1573
        %v1575 = vlaneseq
        %v1576 = vshrl.u32 %v1575, 7
        %v1577 = vsub.s32 %v1574, %v1576
        %v1578 = vrot.slane %v1571, %v1577
        %v1579 = vcombine.low %v1483, %v1490
        %v1581 = vunpack.c.l.s4 1983009808
        %v1582 = vunpack.c.0.s8 %v1581
        %v1583 = vlaneseq
        %v1584 = vshrl.u32 %v1583, 7
        %v1585 = vsub.s32 %v1582, %v1584
        %v1586 = vrot.slane %v1579, %v1585
        %v1587 = vcombine.low %v1493, %v1494
        %v1589 = vunpack.c.l.s4 1983009808
        %v1590 = vunpack.c.0.s8 %v1589
        %v1591 = vlaneseq
        %v1592 = vshrl.u32 %v1591, 7
        %v1593 = vsub.s32 %v1590, %v1592
        %v1594 = vrot.slane %v1587, %v1593
        %v1595 = vcombine.low %v1570, %v1578
        %v1596 = vcombine.high %v1570, %v1578
        %v1598 = vunpack.c.l.s4 1934713408
        %v1599 = vunpack.c.0.s8 %v1598
        %v1600 = vlaneseq
        %v1601 = vshrl.u32 %v1600, 7
        %v1602 = vsub.s32 %v1599, %v1601
        %v1603 = vrot.slane %v1595, %v1602
        %v1605 = vunpack.c.l.s4 1934713408
        %v1606 = vunpack.c.0.s8 %v1605
        %v1607 = vlaneseq
        %v1608 = vshrl.u32 %v1607, 7
        %v1609 = vsub.s32 %v1606, %v1608
        %v1610 = vrot.slane %v1596, %v1609
        %v1611 = vcombine.low %v1586, %v1594
        %v1612 = vcombine.high %v1586, %v1594
        %v1614 = vunpack.c.l.s4 1934713408
        %v1615 = vunpack.c.0.s8 %v1614
        %v1616 = vlaneseq
        %v1617 = vshrl.u32 %v1616, 7
        %v1618 = vsub.s32 %v1615, %v1617
        %v1619 = vrot.slane %v1611, %v1618
        %v1621 = vunpack.c.l.s4 1934713408
        %v1622 = vunpack.c.0.s8 %v1621
        %v1623 = vlaneseq
        %v1624 = vshrl.u32 %v1623, 7
        %v1625 = vsub.s32 %v1622, %v1624
        %v1626 = vrot.slane %v1612, %v1625
        %v1627 = vcombine.low %v1603, %v1619
        %v1628 = vcombine.high %v1603, %v1619
        %v1629 = vcombine.low %v1610, %v1626
        %v1630 = vcombine.high %v1610, %v1626
        %v1631 = vcombine.low %v1535, %v1542
        %v1633 = vunpack.c.l.s4 1983009808
        %v1634 = vunpack.c.0.s8 %v1633
        %v1635 = vlaneseq
        %v1636 = vshrl.u32 %v1635, 7
        %v1637 = vsub.s32 %v1634, %v1636
        %v1638 = vrot.slane %v1631, %v1637
        %v1639 = vcombine.low %v1559, %v1560
        %v1641 = vunpack.c.l.s4 1983009808
        %v1642 = vunpack.c.0.s8 %v1641
        %v1643 = vlaneseq
        %v1644 = vshrl.u32 %v1643, 7
        %v1645 = vsub.s32 %v1642, %v1644
        %v1646 = vrot.slane %v1639, %v1645
        %v1647 = vcombine.low %v1551, %v1558
        %v1649 = vunpack.c.l.s4 1983009808
        %v1650 = vunpack.c.0.s8 %v1649
        %v1651 = vlaneseq
        %v1652 = vshrl.u32 %v1651, 7
        %v1653 = vsub.s32 %v1650, %v1652
        %v1654 = vrot.slane %v1647, %v1653
        %v1655 = vcombine.low %v1561, %v1562
        %v1657 = vunpack.c.l.s4 1983009808
        %v1658 = vunpack.c.0.s8 %v1657
        %v1659 = vlaneseq
        %v1660 = vshrl.u32 %v1659, 7
        %v1661 = vsub.s32 %v1658, %v1660
        %v1662 = vrot.slane %v1655, %v1661
        %v1663 = vcombine.low %v1638, %v1646
        %v1664 = vcombine.high %v1638, %v1646
        %v1666 = vunpack.c.l.s4 1934713408
        %v1667 = vunpack.c.0.s8 %v1666
        %v1668 = vlaneseq
        %v1669 = vshrl.u32 %v1668, 7
        %v1670 = vsub.s32 %v1667, %v1669
        %v1671 = vrot.slane %v1663, %v1670
        %v1673 = vunpack.c.l.s4 1934713408
        %v1674 = vunpack.c.0.s8 %v1673
        %v1675 = vlaneseq
        %v1676 = vshrl.u32 %v1675, 7
        %v1677 = vsub.s32 %v1674, %v1676
        %v1678 = vrot.slane %v1664, %v1677
        %v1679 = vcombine.low %v1654, %v1662
        %v1680 = vcombine.high %v1654, %v1662
        %v1682 = vunpack.c.l.s4 1934713408
        %v1683 = vunpack.c.0.s8 %v1682
        %v1684 = vlaneseq
        %v1685 = vshrl.u32 %v1684, 7
        %v1686 = vsub.s32 %v1683, %v1685
        %v1687 = vrot.slane %v1679, %v1686
        %v1689 = vunpack.c.l.s4 1934713408
        %v1690 = vunpack.c.0.s8 %v1689
        %v1691 = vlaneseq
        %v1692 = vshrl.u32 %v1691, 7
        %v1693 = vsub.s32 %v1690, %v1692
        %v1694 = vrot.slane %v1680, %v1693
        %v1695 = vcombine.low %v1671, %v1687
        %v1696 = vcombine.high %v1671, %v1687
        %v1697 = vcombine.low %v1678, %v1694
        %v1698 = vcombine.high %v1678, %v1694
        %v1699 = vpack.c.bf16 %v1695, %v1627
        %v1700 = vpack.c.bf16 %v1696, %v1628
        %v1701 = vpack.c.bf16 %v1697, %v1629
        %v1702 = vpack.c.bf16 %v1698, %v1630
        %1705 = vrot.lane.b32.xlu0 %v1103, 96
        %v1706 = vpop.permute.xlu0 %1705
        %1707 = vrot.lane.b32.xlu0 %v1106, 96
        %v1708 = vpop.permute.xlu0 %1707
        %1711 = vrot.lane.b32.xlu0 %v1103, 64
        %v1712 = vpop.permute.xlu0 %1711
        %1713 = vrot.lane.b32.xlu0 %v1106, 64
        %v1714 = vpop.permute.xlu0 %1713
        %1717 = vrot.lane.b32.xlu0 %v1103, 32
        %v1718 = vpop.permute.xlu0 %1717
        %1719 = vrot.lane.b32.xlu0 %v1106, 32
        %v1720 = vpop.permute.xlu0 %1719
        %v1723 = vcombine.low %v1103, %v1712
        %v1724 = vcombine.high %v1103, %v1712
        %v1726 = vunpack.c.l.s4 1983009808
        %v1727 = vunpack.c.0.s8 %v1726
        %v1728 = vlaneseq
        %v1729 = vshrl.u32 %v1728, 7
        %v1730 = vsub.s32 %v1727, %v1729
        %v1731 = vrot.slane %v1723, %v1730
        %v1733 = vunpack.c.l.s4 1983009808
        %v1734 = vunpack.c.0.s8 %v1733
        %v1735 = vlaneseq
        %v1736 = vshrl.u32 %v1735, 7
        %v1737 = vsub.s32 %v1734, %v1736
        %v1738 = vrot.slane %v1724, %v1737
        %v1739 = vcombine.low %v1706, %v1718
        %v1740 = vcombine.high %v1706, %v1718
        %v1742 = vunpack.c.l.s4 1983009808
        %v1743 = vunpack.c.0.s8 %v1742
        %v1744 = vlaneseq
        %v1745 = vshrl.u32 %v1744, 7
        %v1746 = vsub.s32 %v1743, %v1745
        %v1747 = vrot.slane %v1739, %v1746
        %v1749 = vunpack.c.l.s4 1983009808
        %v1750 = vunpack.c.0.s8 %v1749
        %v1751 = vlaneseq
        %v1752 = vshrl.u32 %v1751, 7
        %v1753 = vsub.s32 %v1750, %v1752
        %v1754 = vrot.slane %v1740, %v1753
        %v1755 = vcombine.low %v1731, %v1747
        %v1756 = vcombine.high %v1731, %v1747
        %v1758 = vunpack.c.l.s4 1934713408
        %v1759 = vunpack.c.0.s8 %v1758
        %v1760 = vlaneseq
        %v1761 = vshrl.u32 %v1760, 7
        %v1762 = vsub.s32 %v1759, %v1761
        %v1763 = vrot.slane %v1755, %v1762
        %v1765 = vunpack.c.l.s4 1934713408
        %v1766 = vunpack.c.0.s8 %v1765
        %v1767 = vlaneseq
        %v1768 = vshrl.u32 %v1767, 7
        %v1769 = vsub.s32 %v1766, %v1768
        %v1770 = vrot.slane %v1756, %v1769
        %v1771 = vcombine.low %v1738, %v1754
        %v1772 = vcombine.high %v1738, %v1754
        %v1774 = vunpack.c.l.s4 1934713408
        %v1775 = vunpack.c.0.s8 %v1774
        %v1776 = vlaneseq
        %v1777 = vshrl.u32 %v1776, 7
        %v1778 = vsub.s32 %v1775, %v1777
        %v1779 = vrot.slane %v1771, %v1778
        %v1781 = vunpack.c.l.s4 1934713408
        %v1782 = vunpack.c.0.s8 %v1781
        %v1783 = vlaneseq
        %v1784 = vshrl.u32 %v1783, 7
        %v1785 = vsub.s32 %v1782, %v1784
        %v1786 = vrot.slane %v1772, %v1785
        %v1787 = vcombine.high %v1763, 0.0
        %v1788 = vcombine.high %v1770, 0.0
        %v1789 = vcombine.high %v1779, 0.0
        %v1790 = vcombine.high %v1786, 0.0
        %v1791 = vcombine.low %v1106, %v1714
        %v1792 = vcombine.high %v1106, %v1714
        %v1794 = vunpack.c.l.s4 1983009808
        %v1795 = vunpack.c.0.s8 %v1794
        %v1796 = vlaneseq
        %v1797 = vshrl.u32 %v1796, 7
        %v1798 = vsub.s32 %v1795, %v1797
        %v1799 = vrot.slane %v1791, %v1798
        %v1801 = vunpack.c.l.s4 1983009808
        %v1802 = vunpack.c.0.s8 %v1801
        %v1803 = vlaneseq
        %v1804 = vshrl.u32 %v1803, 7
        %v1805 = vsub.s32 %v1802, %v1804
        %v1806 = vrot.slane %v1792, %v1805
        %v1807 = vcombine.low %v1708, %v1720
        %v1808 = vcombine.high %v1708, %v1720
        %v1810 = vunpack.c.l.s4 1983009808
        %v1811 = vunpack.c.0.s8 %v1810
        %v1812 = vlaneseq
        %v1813 = vshrl.u32 %v1812, 7
        %v1814 = vsub.s32 %v1811, %v1813
        %v1815 = vrot.slane %v1807, %v1814
        %v1817 = vunpack.c.l.s4 1983009808
        %v1818 = vunpack.c.0.s8 %v1817
        %v1819 = vlaneseq
        %v1820 = vshrl.u32 %v1819, 7
        %v1821 = vsub.s32 %v1818, %v1820
        %v1822 = vrot.slane %v1808, %v1821
        %v1823 = vcombine.low %v1799, %v1815
        %v1824 = vcombine.high %v1799, %v1815
        %v1826 = vunpack.c.l.s4 1934713408
        %v1827 = vunpack.c.0.s8 %v1826
        %v1828 = vlaneseq
        %v1829 = vshrl.u32 %v1828, 7
        %v1830 = vsub.s32 %v1827, %v1829
        %v1831 = vrot.slane %v1823, %v1830
        %v1833 = vunpack.c.l.s4 1934713408
        %v1834 = vunpack.c.0.s8 %v1833
        %v1835 = vlaneseq
        %v1836 = vshrl.u32 %v1835, 7
        %v1837 = vsub.s32 %v1834, %v1836
        %v1838 = vrot.slane %v1824, %v1837
        %v1839 = vcombine.low %v1806, %v1822
        %v1840 = vcombine.high %v1806, %v1822
        %v1842 = vunpack.c.l.s4 1934713408
        %v1843 = vunpack.c.0.s8 %v1842
        %v1844 = vlaneseq
        %v1845 = vshrl.u32 %v1844, 7
        %v1846 = vsub.s32 %v1843, %v1845
        %v1847 = vrot.slane %v1839, %v1846
        %v1849 = vunpack.c.l.s4 1934713408
        %v1850 = vunpack.c.0.s8 %v1849
        %v1851 = vlaneseq
        %v1852 = vshrl.u32 %v1851, 7
        %v1853 = vsub.s32 %v1850, %v1852
        %v1854 = vrot.slane %v1840, %v1853
        %v1855 = vcombine.high %v1831, 0.0
        %v1856 = vcombine.high %v1838, 0.0
        %v1857 = vcombine.high %v1847, 0.0
        %v1858 = vcombine.high %v1854, 0.0
        %v1859 = vcombine.low %v1763, %v1770
        %v1861 = vunpack.c.l.s4 1983009808
        %v1862 = vunpack.c.0.s8 %v1861
        %v1863 = vlaneseq
        %v1864 = vshrl.u32 %v1863, 7
        %v1865 = vsub.s32 %v1862, %v1864
        %v1866 = vrot.slane %v1859, %v1865
        %v1867 = vcombine.low %v1787, %v1788
        %v1869 = vunpack.c.l.s4 1983009808
        %v1870 = vunpack.c.0.s8 %v1869
        %v1871 = vlaneseq
        %v1872 = vshrl.u32 %v1871, 7
        %v1873 = vsub.s32 %v1870, %v1872
        %v1874 = vrot.slane %v1867, %v1873
        %v1875 = vcombine.low %v1779, %v1786
        %v1877 = vunpack.c.l.s4 1983009808
        %v1878 = vunpack.c.0.s8 %v1877
        %v1879 = vlaneseq
        %v1880 = vshrl.u32 %v1879, 7
        %v1881 = vsub.s32 %v1878, %v1880
        %v1882 = vrot.slane %v1875, %v1881
        %v1883 = vcombine.low %v1789, %v1790
        %v1885 = vunpack.c.l.s4 1983009808
        %v1886 = vunpack.c.0.s8 %v1885
        %v1887 = vlaneseq
        %v1888 = vshrl.u32 %v1887, 7
        %v1889 = vsub.s32 %v1886, %v1888
        %v1890 = vrot.slane %v1883, %v1889
        %v1891 = vcombine.low %v1866, %v1874
        %v1892 = vcombine.high %v1866, %v1874
        %v1894 = vunpack.c.l.s4 1934713408
        %v1895 = vunpack.c.0.s8 %v1894
        %v1896 = vlaneseq
        %v1897 = vshrl.u32 %v1896, 7
        %v1898 = vsub.s32 %v1895, %v1897
        %v1899 = vrot.slane %v1891, %v1898
        %v1901 = vunpack.c.l.s4 1934713408
        %v1902 = vunpack.c.0.s8 %v1901
        %v1903 = vlaneseq
        %v1904 = vshrl.u32 %v1903, 7
        %v1905 = vsub.s32 %v1902, %v1904
        %v1906 = vrot.slane %v1892, %v1905
        %v1907 = vcombine.low %v1882, %v1890
        %v1908 = vcombine.high %v1882, %v1890
        %v1910 = vunpack.c.l.s4 1934713408
        %v1911 = vunpack.c.0.s8 %v1910
        %v1912 = vlaneseq
        %v1913 = vshrl.u32 %v1912, 7
        %v1914 = vsub.s32 %v1911, %v1913
        %v1915 = vrot.slane %v1907, %v1914
        %v1917 = vunpack.c.l.s4 1934713408
        %v1918 = vunpack.c.0.s8 %v1917
        %v1919 = vlaneseq
        %v1920 = vshrl.u32 %v1919, 7
        %v1921 = vsub.s32 %v1918, %v1920
        %v1922 = vrot.slane %v1908, %v1921
        %v1923 = vcombine.low %v1899, %v1915
        %v1924 = vcombine.high %v1899, %v1915
        %v1925 = vcombine.low %v1906, %v1922
        %v1926 = vcombine.high %v1906, %v1922
        %v1927 = vcombine.low %v1831, %v1838
        %v1929 = vunpack.c.l.s4 1983009808
        %v1930 = vunpack.c.0.s8 %v1929
        %v1931 = vlaneseq
        %v1932 = vshrl.u32 %v1931, 7
        %v1933 = vsub.s32 %v1930, %v1932
        %v1934 = vrot.slane %v1927, %v1933
        %v1935 = vcombine.low %v1855, %v1856
        %v1937 = vunpack.c.l.s4 1983009808
        %v1938 = vunpack.c.0.s8 %v1937
        %v1939 = vlaneseq
        %v1940 = vshrl.u32 %v1939, 7
        %v1941 = vsub.s32 %v1938, %v1940
        %v1942 = vrot.slane %v1935, %v1941
        %v1943 = vcombine.low %v1847, %v1854
        %v1945 = vunpack.c.l.s4 1983009808
        %v1946 = vunpack.c.0.s8 %v1945
        %v1947 = vlaneseq
        %v1948 = vshrl.u32 %v1947, 7
        %v1949 = vsub.s32 %v1946, %v1948
        %v1950 = vrot.slane %v1943, %v1949
        %v1951 = vcombine.low %v1857, %v1858
        %v1953 = vunpack.c.l.s4 1983009808
        %v1954 = vunpack.c.0.s8 %v1953
        %v1955 = vlaneseq
        %v1956 = vshrl.u32 %v1955, 7
        %v1957 = vsub.s32 %v1954, %v1956
        %v1958 = vrot.slane %v1951, %v1957
        %v1959 = vcombine.low %v1934, %v1942
        %v1960 = vcombine.high %v1934, %v1942
        %v1962 = vunpack.c.l.s4 1934713408
        %v1963 = vunpack.c.0.s8 %v1962
        %v1964 = vlaneseq
        %v1965 = vshrl.u32 %v1964, 7
        %v1966 = vsub.s32 %v1963, %v1965
        %v1967 = vrot.slane %v1959, %v1966
        %v1969 = vunpack.c.l.s4 1934713408
        %v1970 = vunpack.c.0.s8 %v1969
        %v1971 = vlaneseq
        %v1972 = vshrl.u32 %v1971, 7
        %v1973 = vsub.s32 %v1970, %v1972
        %v1974 = vrot.slane %v1960, %v1973
        %v1975 = vcombine.low %v1950, %v1958
        %v1976 = vcombine.high %v1950, %v1958
        %v1978 = vunpack.c.l.s4 1934713408
        %v1979 = vunpack.c.0.s8 %v1978
        %v1980 = vlaneseq
        %v1981 = vshrl.u32 %v1980, 7
        %v1982 = vsub.s32 %v1979, %v1981
        %v1983 = vrot.slane %v1975, %v1982
        %v1985 = vunpack.c.l.s4 1934713408
        %v1986 = vunpack.c.0.s8 %v1985
        %v1987 = vlaneseq
        %v1988 = vshrl.u32 %v1987, 7
        %v1989 = vsub.s32 %v1986, %v1988
        %v1990 = vrot.slane %v1976, %v1989
        %v1991 = vcombine.low %v1967, %v1983
        %v1992 = vcombine.high %v1967, %v1983
        %v1993 = vcombine.low %v1974, %v1990
        %v1994 = vcombine.high %v1974, %v1990
        %v1995 = vpack.c.bf16 %v1991, %v1923
        %v1996 = vpack.c.bf16 %v1992, %v1924
        %v1997 = vpack.c.bf16 %v1993, %v1925
        %v1998 = vpack.c.bf16 %v1994, %v1926
        %vm1999 = vcmask 261120
        %v2001 = vsel %vm1999, %v1403, 0
        %v2004 = vsel %vm1999, %v1699, 0
        %2006 = vmatprep.subr.bf16.mxu0 0
        %2007 = vmatpush1.bf16.xpose.msra.mxu0 0
        %2008 = vmatprep.subr.bf16.mxu0 0
        %2009 = vmatpush1.bf16.xpose.msra.mxu0 0
        %2010 = vmatprep.subr.bf16.mxu0 0
        %2011 = vmatpush1.bf16.xpose.msra.mxu0 0
        %2012 = vmatprep.subr.bf16.mxu0 0
        %2013 = vmatpush1.bf16.xpose.msra.mxu0 0
        %2014 = vmatprep.subr.bf16.mxu0 0
        %2015 = vmatpush1.bf16.xpose.msra.mxu0 0
        %2016 = vmatprep.subr.bf16.mxu0 0
        %2017 = vmatpush1.bf16.xpose.msra.mxu0 0
        %2018 = vmatprep.subr.bf16.mxu0 0
        %2019 = vmatpush1.bf16.xpose.msra.mxu0 0
        %2020 = vmatprep.subr.bf16.mxu0 0
        %2021 = vmatpush1.bf16.xpose.msra.mxu0 %v2004
        %2022 = vmatprep.subr.bf16.mxu0 0
        %2023 = vmatpush2.bf16.xpose.msra.mxu0 0
        %2024 = vmatprep.subr.bf16.mxu0 0
        %2025 = vmatpush2.bf16.xpose.msra.mxu0 0
        %2026 = vmatprep.subr.bf16.mxu0 0
        %2027 = vmatpush2.bf16.xpose.msra.mxu0 0
        %2028 = vmatprep.subr.bf16.mxu0 0
        %2029 = vmatpush2.bf16.xpose.msra.mxu0 0
        %2030 = vmatprep.subr.bf16.mxu0 0
        %2031 = vmatpush2.bf16.xpose.msra.mxu0 0
        %2032 = vmatprep.subr.bf16.mxu0 0
        %2033 = vmatpush2.bf16.xpose.msra.mxu0 0
        %2034 = vmatprep.subr.bf16.mxu0 0
        %2035 = vmatpush2.bf16.xpose.msra.mxu0 0
        %2036 = vmatprep.subr.bf16.mxu0 0
        %2037 = vmatpush2.bf16.xpose.msra.mxu0 0
        %2038 = vmatprep.mubr.bf16.mxu0 0
        %2039 = vmatmul.mubr.bf16.gmra.mxu0 %v2001
        %v2040 = vpop.f32.mrf.mxu0
        %v2041 = vadd.f32 0.0, %v2040
        %v2042 = vpop.f32.mrf.mxu0
        %v2043 = vpop.f32.mrf.mxu0
        %v2044 = vadd.f32 0.0, %v2043
        %v2045 = vpop.f32.mrf.mxu0
        %2046 = vdwg.mxu0
        %v2048 = vsel %vm1999, %v1404, 0
        %v2051 = vsel %vm1999, %v1700, 0
        %2053 = vmatprep.subr.bf16.mxu0 0
        %2054 = vmatpush1.bf16.xpose.msra.mxu0 0
        %2055 = vmatprep.subr.bf16.mxu0 0
        %2056 = vmatpush1.bf16.xpose.msra.mxu0 0
        %2057 = vmatprep.subr.bf16.mxu0 0
        %2058 = vmatpush1.bf16.xpose.msra.mxu0 0
        %2059 = vmatprep.subr.bf16.mxu0 0
        %2060 = vmatpush1.bf16.xpose.msra.mxu0 0
        %2061 = vmatprep.subr.bf16.mxu0 0
        %2062 = vmatpush1.bf16.xpose.msra.mxu0 0
        %2063 = vmatprep.subr.bf16.mxu0 0
        %2064 = vmatpush1.bf16.xpose.msra.mxu0 0
        %2065 = vmatprep.subr.bf16.mxu0 0
        %2066 = vmatpush1.bf16.xpose.msra.mxu0 0
        %2067 = vmatprep.subr.bf16.mxu0 0
        %2068 = vmatpush1.bf16.xpose.msra.mxu0 %v2051
        %2069 = vmatprep.subr.bf16.mxu0 0
        %2070 = vmatpush2.bf16.xpose.msra.mxu0 0
        %2071 = vmatprep.subr.bf16.mxu0 0
        %2072 = vmatpush2.bf16.xpose.msra.mxu0 0
        %2073 = vmatprep.subr.bf16.mxu0 0
        %2074 = vmatpush2.bf16.xpose.msra.mxu0 0
        %2075 = vmatprep.subr.bf16.mxu0 0
        %2076 = vmatpush2.bf16.xpose.msra.mxu0 0
        %2077 = vmatprep.subr.bf16.mxu0 0
        %2078 = vmatpush2.bf16.xpose.msra.mxu0 0
        %2079 = vmatprep.subr.bf16.mxu0 0
        %2080 = vmatpush2.bf16.xpose.msra.mxu0 0
        %2081 = vmatprep.subr.bf16.mxu0 0
        %2082 = vmatpush2.bf16.xpose.msra.mxu0 0
        %2083 = vmatprep.subr.bf16.mxu0 0
        %2084 = vmatpush2.bf16.xpose.msra.mxu0 0
        %2085 = vmatprep.mubr.bf16.mxu0 0
        %2086 = vmatmul.mubr.bf16.gmra.mxu0 %v2048
        %v2087 = vpop.f32.mrf.mxu0
        %v2088 = vadd.f32 0.0, %v2087
        %v2089 = vpop.f32.mrf.mxu0
        %v2090 = vpop.f32.mrf.mxu0
        %v2091 = vadd.f32 0.0, %v2090
        %v2092 = vpop.f32.mrf.mxu0
        %2093 = vdwg.mxu0
        %v2095 = vsel %vm1999, %v1405, 0
        %v2098 = vsel %vm1999, %v1701, 0
        %2100 = vmatprep.subr.bf16.mxu0 0
        %2101 = vmatpush1.bf16.xpose.msra.mxu0 0
        %2102 = vmatprep.subr.bf16.mxu0 0
        %2103 = vmatpush1.bf16.xpose.msra.mxu0 0
        %2104 = vmatprep.subr.bf16.mxu0 0
        %2105 = vmatpush1.bf16.xpose.msra.mxu0 0
        %2106 = vmatprep.subr.bf16.mxu0 0
        %2107 = vmatpush1.bf16.xpose.msra.mxu0 0
        %2108 = vmatprep.subr.bf16.mxu0 0
        %2109 = vmatpush1.bf16.xpose.msra.mxu0 0
        %2110 = vmatprep.subr.bf16.mxu0 0
        %2111 = vmatpush1.bf16.xpose.msra.mxu0 0
        %2112 = vmatprep.subr.bf16.mxu0 0
        %2113 = vmatpush1.bf16.xpose.msra.mxu0 0
        %2114 = vmatprep.subr.bf16.mxu0 0
        %2115 = vmatpush1.bf16.xpose.msra.mxu0 %v2098
        %2116 = vmatprep.subr.bf16.mxu0 0
        %2117 = vmatpush2.bf16.xpose.msra.mxu0 0
        %2118 = vmatprep.subr.bf16.mxu0 0
        %2119 = vmatpush2.bf16.xpose.msra.mxu0 0
        %2120 = vmatprep.subr.bf16.mxu0 0
        %2121 = vmatpush2.bf16.xpose.msra.mxu0 0
        %2122 = vmatprep.subr.bf16.mxu0 0
        %2123 = vmatpush2.bf16.xpose.msra.mxu0 0
        %2124 = vmatprep.subr.bf16.mxu0 0
        %2125 = vmatpush2.bf16.xpose.msra.mxu0 0
        %2126 = vmatprep.subr.bf16.mxu0 0
        %2127 = vmatpush2.bf16.xpose.msra.mxu0 0
        %2128 = vmatprep.subr.bf16.mxu0 0
        %2129 = vmatpush2.bf16.xpose.msra.mxu0 0
        %2130 = vmatprep.subr.bf16.mxu0 0
        %2131 = vmatpush2.bf16.xpose.msra.mxu0 0
        %2132 = vmatprep.mubr.bf16.mxu0 0
        %2133 = vmatmul.mubr.bf16.gmra.mxu0 %v2095
        %v2134 = vpop.f32.mrf.mxu0
        %v2135 = vadd.f32 0.0, %v2134
        %v2136 = vpop.f32.mrf.mxu0
        %v2137 = vpop.f32.mrf.mxu0
        %v2138 = vadd.f32 0.0, %v2137
        %v2139 = vpop.f32.mrf.mxu0
        %2140 = vdwg.mxu0
        %v2142 = vsel %vm1999, %v1406, 0
        %v2145 = vsel %vm1999, %v1702, 0
        %2147 = vmatprep.subr.bf16.mxu0 0
        %2148 = vmatpush1.bf16.xpose.msra.mxu0 0
        %2149 = vmatprep.subr.bf16.mxu0 0
        %2150 = vmatpush1.bf16.xpose.msra.mxu0 0
        %2151 = vmatprep.subr.bf16.mxu0 0
        %2152 = vmatpush1.bf16.xpose.msra.mxu0 0
        %2153 = vmatprep.subr.bf16.mxu0 0
        %2154 = vmatpush1.bf16.xpose.msra.mxu0 0
        %2155 = vmatprep.subr.bf16.mxu0 0
        %2156 = vmatpush1.bf16.xpose.msra.mxu0 0
        %2157 = vmatprep.subr.bf16.mxu0 0
        %2158 = vmatpush1.bf16.xpose.msra.mxu0 0
        %2159 = vmatprep.subr.bf16.mxu0 0
        %2160 = vmatpush1.bf16.xpose.msra.mxu0 0
        %2161 = vmatprep.subr.bf16.mxu0 0
        %2162 = vmatpush1.bf16.xpose.msra.mxu0 %v2145
        %2163 = vmatprep.subr.bf16.mxu0 0
        %2164 = vmatpush2.bf16.xpose.msra.mxu0 0
        %2165 = vmatprep.subr.bf16.mxu0 0
        %2166 = vmatpush2.bf16.xpose.msra.mxu0 0
        %2167 = vmatprep.subr.bf16.mxu0 0
        %2168 = vmatpush2.bf16.xpose.msra.mxu0 0
        %2169 = vmatprep.subr.bf16.mxu0 0
        %2170 = vmatpush2.bf16.xpose.msra.mxu0 0
        %2171 = vmatprep.subr.bf16.mxu0 0
        %2172 = vmatpush2.bf16.xpose.msra.mxu0 0
        %2173 = vmatprep.subr.bf16.mxu0 0
        %2174 = vmatpush2.bf16.xpose.msra.mxu0 0
        %2175 = vmatprep.subr.bf16.mxu0 0
        %2176 = vmatpush2.bf16.xpose.msra.mxu0 0
        %2177 = vmatprep.subr.bf16.mxu0 0
        %2178 = vmatpush2.bf16.xpose.msra.mxu0 0
        %2179 = vmatprep.mubr.bf16.mxu0 0
        %2180 = vmatmul.mubr.bf16.gmra.mxu0 %v2142
        %v2181 = vpop.f32.mrf.mxu0
        %v2182 = vadd.f32 0.0, %v2181
        %v2183 = vpop.f32.mrf.mxu0
        %v2184 = vpop.f32.mrf.mxu0
        %v2185 = vadd.f32 0.0, %v2184
        %v2186 = vpop.f32.mrf.mxu0
        %2187 = vdwg.mxu0
        %vm2188 = vcmask 130048
        %v2189 = vsel %vm2188, %v2041, -inf
        %2190 = vmax.xlane.f32.xlu0 %v2189
        %v2191 = vpop.xlane.xlu0 %2190
        %v2192 = vsel %vm2188, %v2044, -inf
        %2193 = vmax.xlane.f32.xlu0 %v2192
        %v2194 = vpop.xlane.xlu0 %2193
        %v2195 = vsel %vm2188, %v2088, -inf
        %2196 = vmax.xlane.f32.xlu0 %v2195
        %v2197 = vpop.xlane.xlu0 %2196
        %v2198 = vsel %vm2188, %v2091, -inf
        %2199 = vmax.xlane.f32.xlu0 %v2198
        %v2200 = vpop.xlane.xlu0 %2199
        %v2201 = vsel %vm2188, %v2135, -inf
        %2202 = vmax.xlane.f32.xlu0 %v2201
        %v2203 = vpop.xlane.xlu0 %2202
        %v2204 = vsel %vm2188, %v2138, -inf
        %2205 = vmax.xlane.f32.xlu0 %v2204
        %v2206 = vpop.xlane.xlu0 %2205
        %v2207 = vsel %vm2188, %v2182, -inf
        %2208 = vmax.xlane.f32.xlu0 %v2207
        %v2209 = vpop.xlane.xlu0 %2208
        %v2210 = vsel %vm2188, %v2185, -inf
        %2211 = vmax.xlane.f32.xlu0 %v2210
        %v2212 = vpop.xlane.xlu0 %2211
        %v2213 = vsub.f32 %v2041, %v2191
        %v2214 = vsub.f32 %v2044, %v2194
        %v2215 = vsub.f32 %v2088, %v2197
        %v2216 = vsub.f32 %v2091, %v2200
        %v2217 = vsub.f32 %v2135, %v2203
        %v2218 = vsub.f32 %v2138, %v2206
        %v2219 = vsub.f32 %v2182, %v2209
        %v2220 = vsub.f32 %v2185, %v2212
        %v2221 = vmul.f32 %v2213, 1.442695
        %v2222 = vpow.pop %v2221
        %v2223 = vmul.f32 %v2214, 1.442695
        %v2224 = vpow.pop %v2223
        %v2225 = vmul.f32 %v2215, 1.442695
        %v2226 = vpow.pop %v2225
        %v2227 = vmul.f32 %v2216, 1.442695
        %v2228 = vpow.pop %v2227
        %v2229 = vmul.f32 %v2217, 1.442695
        %v2230 = vpow.pop %v2229
        %v2231 = vmul.f32 %v2218, 1.442695
        %v2232 = vpow.pop %v2231
        %v2233 = vmul.f32 %v2219, 1.442695
        %v2234 = vpow.pop %v2233
        %v2235 = vmul.f32 %v2220, 1.442695
        %v2236 = vpow.pop %v2235
        %v2237 = vsel %vm2188, %v2222, 0.0
        %2238 = vadd.xlane.f32.xlu0 %v2237
        %v2239 = vpop.xlane.xlu0 %2238
        %v2240 = vsel %vm2188, %v2224, 0.0
        %2241 = vadd.xlane.f32.xlu0 %v2240
        %v2242 = vpop.xlane.xlu0 %2241
        %v2243 = vsel %vm2188, %v2226, 0.0
        %2244 = vadd.xlane.f32.xlu0 %v2243
        %v2245 = vpop.xlane.xlu0 %2244
        %v2246 = vsel %vm2188, %v2228, 0.0
        %2247 = vadd.xlane.f32.xlu0 %v2246
        %v2248 = vpop.xlane.xlu0 %2247
        %v2249 = vsel %vm2188, %v2230, 0.0
        %2250 = vadd.xlane.f32.xlu0 %v2249
        %v2251 = vpop.xlane.xlu0 %2250
        %v2252 = vsel %vm2188, %v2232, 0.0
        %2253 = vadd.xlane.f32.xlu0 %v2252
        %v2254 = vpop.xlane.xlu0 %2253
        %v2255 = vsel %vm2188, %v2234, 0.0
        %2256 = vadd.xlane.f32.xlu0 %v2255
        %v2257 = vpop.xlane.xlu0 %2256
        %v2258 = vsel %vm2188, %v2236, 0.0
        %2259 = vadd.xlane.f32.xlu0 %v2258
        %v2260 = vpop.xlane.xlu0 %2259
        %v2261 = vrcp.pop %v2239
        %v2262 = vrcp.pop %v2242
        %v2263 = vrcp.pop %v2245
        %v2264 = vrcp.pop %v2248
        %v2265 = vrcp.pop %v2251
        %v2266 = vrcp.pop %v2254
        %v2267 = vrcp.pop %v2257
        %v2268 = vrcp.pop %v2260
        %v2269 = vpack.c.bf16 %v2224, %v2222
        %v2270 = vpack.c.bf16 %v2228, %v2226
        %v2271 = vpack.c.bf16 %v2232, %v2230
        %v2272 = vpack.c.bf16 %v2236, %v2234
        %v2274 = vsel %vm2188, %v2269, 0
        %2276 = vmatprep.subr.bf16.mxu0 0
        %2277 = vmatpush1.bf16.msra.mxu0 0
        %2278 = vmatprep.subr.bf16.mxu0 0
        %2279 = vmatpush1.bf16.msra.mxu0 0
        %2280 = vmatprep.subr.bf16.mxu0 0
        %2281 = vmatpush1.bf16.msra.mxu0 0
        %2282 = vmatprep.subr.bf16.mxu0 0
        %2283 = vmatpush1.bf16.msra.mxu0 0
        %2284 = vmatprep.subr.bf16.mxu0 0
        %2285 = vmatpush1.bf16.msra.mxu0 0
        %2286 = vmatprep.subr.bf16.mxu0 0
        %2287 = vmatpush1.bf16.msra.mxu0 0
        %2288 = vmatprep.subr.bf16.mxu0 0
        %2289 = vmatpush1.bf16.msra.mxu0 0
        %2290 = vmatprep.subr.bf16.mxu0 0
        %2291 = vmatpush1.bf16.msra.mxu0 %v1995
        %2292 = vmatprep.subr.bf16.mxu0 0
        %2293 = vmatpush2.bf16.msra.mxu0 0
        %2294 = vmatprep.subr.bf16.mxu0 0
        %2295 = vmatpush2.bf16.msra.mxu0 0
        %2296 = vmatprep.subr.bf16.mxu0 0
        %2297 = vmatpush2.bf16.msra.mxu0 0
        %2298 = vmatprep.subr.bf16.mxu0 0
        %2299 = vmatpush2.bf16.msra.mxu0 0
        %2300 = vmatprep.subr.bf16.mxu0 0
        %2301 = vmatpush2.bf16.msra.mxu0 0
        %2302 = vmatprep.subr.bf16.mxu0 0
        %2303 = vmatpush2.bf16.msra.mxu0 0
        %2304 = vmatprep.subr.bf16.mxu0 0
        %2305 = vmatpush2.bf16.msra.mxu0 0
        %2306 = vmatprep.subr.bf16.mxu0 0
        %2307 = vmatpush2.bf16.msra.mxu0 0
        %2308 = vmatprep.mubr.bf16.mxu0 0
        %2309 = vmatmul.mubr.bf16.gmra.mxu0 %v2274
        %v2310 = vpop.f32.mrf.mxu0
        %v2311 = vadd.f32 0.0, %v2310
        %v2312 = vpop.f32.mrf.mxu0
        %v2313 = vpop.f32.mrf.mxu0
        %v2314 = vadd.f32 0.0, %v2313
        %v2315 = vpop.f32.mrf.mxu0
        %2316 = vdwg.mxu0
        %v2318 = vsel %vm2188, %v2270, 0
        %2320 = vmatprep.subr.bf16.mxu0 0
        %2321 = vmatpush1.bf16.msra.mxu0 0
        %2322 = vmatprep.subr.bf16.mxu0 0
        %2323 = vmatpush1.bf16.msra.mxu0 0
        %2324 = vmatprep.subr.bf16.mxu0 0
        %2325 = vmatpush1.bf16.msra.mxu0 0
        %2326 = vmatprep.subr.bf16.mxu0 0
        %2327 = vmatpush1.bf16.msra.mxu0 0
        %2328 = vmatprep.subr.bf16.mxu0 0
        %2329 = vmatpush1.bf16.msra.mxu0 0
        %2330 = vmatprep.subr.bf16.mxu0 0
        %2331 = vmatpush1.bf16.msra.mxu0 0
        %2332 = vmatprep.subr.bf16.mxu0 0
        %2333 = vmatpush1.bf16.msra.mxu0 0
        %2334 = vmatprep.subr.bf16.mxu0 0
        %2335 = vmatpush1.bf16.msra.mxu0 %v1996
        %2336 = vmatprep.subr.bf16.mxu0 0
        %2337 = vmatpush2.bf16.msra.mxu0 0
        %2338 = vmatprep.subr.bf16.mxu0 0
        %2339 = vmatpush2.bf16.msra.mxu0 0
        %2340 = vmatprep.subr.bf16.mxu0 0
        %2341 = vmatpush2.bf16.msra.mxu0 0
        %2342 = vmatprep.subr.bf16.mxu0 0
        %2343 = vmatpush2.bf16.msra.mxu0 0
        %2344 = vmatprep.subr.bf16.mxu0 0
        %2345 = vmatpush2.bf16.msra.mxu0 0
        %2346 = vmatprep.subr.bf16.mxu0 0
        %2347 = vmatpush2.bf16.msra.mxu0 0
        %2348 = vmatprep.subr.bf16.mxu0 0
        %2349 = vmatpush2.bf16.msra.mxu0 0
        %2350 = vmatprep.subr.bf16.mxu0 0
        %2351 = vmatpush2.bf16.msra.mxu0 0
        %2352 = vmatprep.mubr.bf16.mxu0 0
        %2353 = vmatmul.mubr.bf16.gmra.mxu0 %v2318
        %v2354 = vpop.f32.mrf.mxu0
        %v2355 = vadd.f32 0.0, %v2354
        %v2356 = vpop.f32.mrf.mxu0
        %v2357 = vpop.f32.mrf.mxu0
        %v2358 = vadd.f32 0.0, %v2357
        %v2359 = vpop.f32.mrf.mxu0
        %2360 = vdwg.mxu0
        %v2362 = vsel %vm2188, %v2271, 0
        %2364 = vmatprep.subr.bf16.mxu0 0
        %2365 = vmatpush1.bf16.msra.mxu0 0
        %2366 = vmatprep.subr.bf16.mxu0 0
        %2367 = vmatpush1.bf16.msra.mxu0 0
        %2368 = vmatprep.subr.bf16.mxu0 0
        %2369 = vmatpush1.bf16.msra.mxu0 0
        %2370 = vmatprep.subr.bf16.mxu0 0
        %2371 = vmatpush1.bf16.msra.mxu0 0
        %2372 = vmatprep.subr.bf16.mxu0 0
        %2373 = vmatpush1.bf16.msra.mxu0 0
        %2374 = vmatprep.subr.bf16.mxu0 0
        %2375 = vmatpush1.bf16.msra.mxu0 0
        %2376 = vmatprep.subr.bf16.mxu0 0
        %2377 = vmatpush1.bf16.msra.mxu0 0
        %2378 = vmatprep.subr.bf16.mxu0 0
        %2379 = vmatpush1.bf16.msra.mxu0 %v1997
        %2380 = vmatprep.subr.bf16.mxu0 0
        %2381 = vmatpush2.bf16.msra.mxu0 0
        %2382 = vmatprep.subr.bf16.mxu0 0
        %2383 = vmatpush2.bf16.msra.mxu0 0
        %2384 = vmatprep.subr.bf16.mxu0 0
        %2385 = vmatpush2.bf16.msra.mxu0 0
        %2386 = vmatprep.subr.bf16.mxu0 0
        %2387 = vmatpush2.bf16.msra.mxu0 0
        %2388 = vmatprep.subr.bf16.mxu0 0
        %2389 = vmatpush2.bf16.msra.mxu0 0
        %2390 = vmatprep.subr.bf16.mxu0 0
        %2391 = vmatpush2.bf16.msra.mxu0 0
        %2392 = vmatprep.subr.bf16.mxu0 0
        %2393 = vmatpush2.bf16.msra.mxu0 0
        %2394 = vmatprep.subr.bf16.mxu0 0
        %2395 = vmatpush2.bf16.msra.mxu0 0
        %2396 = vmatprep.mubr.bf16.mxu0 0
        %2397 = vmatmul.mubr.bf16.gmra.mxu0 %v2362
        %v2398 = vpop.f32.mrf.mxu0
        %v2399 = vadd.f32 0.0, %v2398
        %v2400 = vpop.f32.mrf.mxu0
        %v2401 = vpop.f32.mrf.mxu0
        %v2402 = vadd.f32 0.0, %v2401
        %v2403 = vpop.f32.mrf.mxu0
        %2404 = vdwg.mxu0
        %v2406 = vsel %vm2188, %v2272, 0
        %2408 = vmatprep.subr.bf16.mxu0 0
        %2409 = vmatpush1.bf16.msra.mxu0 0
        %2410 = vmatprep.subr.bf16.mxu0 0
        %2411 = vmatpush1.bf16.msra.mxu0 0
        %2412 = vmatprep.subr.bf16.mxu0 0
        %2413 = vmatpush1.bf16.msra.mxu0 0
        %2414 = vmatprep.subr.bf16.mxu0 0
        %2415 = vmatpush1.bf16.msra.mxu0 0
        %2416 = vmatprep.subr.bf16.mxu0 0
        %2417 = vmatpush1.bf16.msra.mxu0 0
        %2418 = vmatprep.subr.bf16.mxu0 0
        %2419 = vmatpush1.bf16.msra.mxu0 0
        %2420 = vmatprep.subr.bf16.mxu0 0
        %2421 = vmatpush1.bf16.msra.mxu0 0
        %2422 = vmatprep.subr.bf16.mxu0 0
        %2423 = vmatpush1.bf16.msra.mxu0 %v1998
        %2424 = vmatprep.subr.bf16.mxu0 0
        %2425 = vmatpush2.bf16.msra.mxu0 0
        %2426 = vmatprep.subr.bf16.mxu0 0
        %2427 = vmatpush2.bf16.msra.mxu0 0
        %2428 = vmatprep.subr.bf16.mxu0 0
        %2429 = vmatpush2.bf16.msra.mxu0 0
        %2430 = vmatprep.subr.bf16.mxu0 0
        %2431 = vmatpush2.bf16.msra.mxu0 0
        %2432 = vmatprep.subr.bf16.mxu0 0
        %2433 = vmatpush2.bf16.msra.mxu0 0
        %2434 = vmatprep.subr.bf16.mxu0 0
        %2435 = vmatpush2.bf16.msra.mxu0 0
        %2436 = vmatprep.subr.bf16.mxu0 0
        %2437 = vmatpush2.bf16.msra.mxu0 0
        %2438 = vmatprep.subr.bf16.mxu0 0
        %2439 = vmatpush2.bf16.msra.mxu0 0
        %2440 = vmatprep.mubr.bf16.mxu0 0
        %2441 = vmatmul.mubr.bf16.gmra.mxu0 %v2406
        %v2442 = vpop.f32.mrf.mxu0
        %v2443 = vadd.f32 0.0, %v2442
        %v2444 = vpop.f32.mrf.mxu0
        %v2445 = vpop.f32.mrf.mxu0
        %v2446 = vadd.f32 0.0, %v2445
        %v2447 = vpop.f32.mrf.mxu0
        %2448 = vdwg.mxu0
        %v2449 = vmul.f32 %v2311, %v2261
        %v2450 = vmul.f32 %v2314, %v2262
        %v2451 = vmul.f32 %v2355, %v2263
        %v2452 = vmul.f32 %v2358, %v2264
        %v2453 = vmul.f32 %v2399, %v2265
        %v2454 = vmul.f32 %v2402, %v2266
        %v2455 = vmul.f32 %v2443, %v2267
        %v2456 = vmul.f32 %v2446, %v2268
        %v2457 = vcombine.low %v2449, %v2453
        %v2458 = vcombine.high %v2449, %v2453
        %v2460 = vunpack.c.l.s4 1983009808
        %v2461 = vunpack.c.0.s8 %v2460
        %v2462 = vlaneseq
        %v2463 = vshrl.u32 %v2462, 7
        %v2464 = vsub.s32 %v2461, %v2463
        %v2465 = vrot.slane %v2457, %v2464
        %v2467 = vunpack.c.l.s4 1983009808
        %v2468 = vunpack.c.0.s8 %v2467
        %v2469 = vlaneseq
        %v2470 = vshrl.u32 %v2469, 7
        %v2471 = vsub.s32 %v2468, %v2470
        %v2472 = vrot.slane %v2458, %v2471
        %v2473 = vcombine.low %v2451, %v2455
        %v2474 = vcombine.high %v2451, %v2455
        %v2476 = vunpack.c.l.s4 1983009808
        %v2477 = vunpack.c.0.s8 %v2476
        %v2478 = vlaneseq
        %v2479 = vshrl.u32 %v2478, 7
        %v2480 = vsub.s32 %v2477, %v2479
        %v2481 = vrot.slane %v2473, %v2480
        %v2483 = vunpack.c.l.s4 1983009808
        %v2484 = vunpack.c.0.s8 %v2483
        %v2485 = vlaneseq
        %v2486 = vshrl.u32 %v2485, 7
        %v2487 = vsub.s32 %v2484, %v2486
        %v2488 = vrot.slane %v2474, %v2487
        %v2489 = vcombine.low %v2465, %v2481
        %v2490 = vcombine.high %v2465, %v2481
        %v2492 = vunpack.c.l.s4 1934713408
        %v2493 = vunpack.c.0.s8 %v2492
        %v2494 = vlaneseq
        %v2495 = vshrl.u32 %v2494, 7
        %v2496 = vsub.s32 %v2493, %v2495
        %v2497 = vrot.slane %v2489, %v2496
        %v2499 = vunpack.c.l.s4 1934713408
        %v2500 = vunpack.c.0.s8 %v2499
        %v2501 = vlaneseq
        %v2502 = vshrl.u32 %v2501, 7
        %v2503 = vsub.s32 %v2500, %v2502
        %v2504 = vrot.slane %v2490, %v2503
        %v2505 = vcombine.low %v2472, %v2488
        %v2506 = vcombine.high %v2472, %v2488
        %v2508 = vunpack.c.l.s4 1934713408
        %v2509 = vunpack.c.0.s8 %v2508
        %v2510 = vlaneseq
        %v2511 = vshrl.u32 %v2510, 7
        %v2512 = vsub.s32 %v2509, %v2511
        %v2513 = vrot.slane %v2505, %v2512
        %v2515 = vunpack.c.l.s4 1934713408
        %v2516 = vunpack.c.0.s8 %v2515
        %v2517 = vlaneseq
        %v2518 = vshrl.u32 %v2517, 7
        %v2519 = vsub.s32 %v2516, %v2518
        %v2520 = vrot.slane %v2506, %v2519
        %v2521 = vcombine.high %v2497, 0.0
        %v2522 = vcombine.high %v2504, 0.0
        %v2523 = vcombine.high %v2513, 0.0
        %v2524 = vcombine.high %v2520, 0.0
        %v2525 = vcombine.low %v2450, %v2454
        %v2526 = vcombine.high %v2450, %v2454
        %v2528 = vunpack.c.l.s4 1983009808
        %v2529 = vunpack.c.0.s8 %v2528
        %v2530 = vlaneseq
        %v2531 = vshrl.u32 %v2530, 7
        %v2532 = vsub.s32 %v2529, %v2531
        %v2533 = vrot.slane %v2525, %v2532
        %v2535 = vunpack.c.l.s4 1983009808
        %v2536 = vunpack.c.0.s8 %v2535
        %v2537 = vlaneseq
        %v2538 = vshrl.u32 %v2537, 7
        %v2539 = vsub.s32 %v2536, %v2538
        %v2540 = vrot.slane %v2526, %v2539
        %v2541 = vcombine.low %v2452, %v2456
        %v2542 = vcombine.high %v2452, %v2456
        %v2544 = vunpack.c.l.s4 1983009808
        %v2545 = vunpack.c.0.s8 %v2544
        %v2546 = vlaneseq
        %v2547 = vshrl.u32 %v2546, 7
        %v2548 = vsub.s32 %v2545, %v2547
        %v2549 = vrot.slane %v2541, %v2548
        %v2551 = vunpack.c.l.s4 1983009808
        %v2552 = vunpack.c.0.s8 %v2551
        %v2553 = vlaneseq
        %v2554 = vshrl.u32 %v2553, 7
        %v2555 = vsub.s32 %v2552, %v2554
        %v2556 = vrot.slane %v2542, %v2555
        %v2557 = vcombine.low %v2533, %v2549
        %v2558 = vcombine.high %v2533, %v2549
        %v2560 = vunpack.c.l.s4 1934713408
        %v2561 = vunpack.c.0.s8 %v2560
        %v2562 = vlaneseq
        %v2563 = vshrl.u32 %v2562, 7
        %v2564 = vsub.s32 %v2561, %v2563
        %v2565 = vrot.slane %v2557, %v2564
        %v2567 = vunpack.c.l.s4 1934713408
        %v2568 = vunpack.c.0.s8 %v2567
        %v2569 = vlaneseq
        %v2570 = vshrl.u32 %v2569, 7
        %v2571 = vsub.s32 %v2568, %v2570
        %v2572 = vrot.slane %v2558, %v2571
        %v2573 = vcombine.low %v2540, %v2556
        %v2574 = vcombine.high %v2540, %v2556
        %v2576 = vunpack.c.l.s4 1934713408
        %v2577 = vunpack.c.0.s8 %v2576
        %v2578 = vlaneseq
        %v2579 = vshrl.u32 %v2578, 7
        %v2580 = vsub.s32 %v2577, %v2579
        %v2581 = vrot.slane %v2573, %v2580
        %v2583 = vunpack.c.l.s4 1934713408
        %v2584 = vunpack.c.0.s8 %v2583
        %v2585 = vlaneseq
        %v2586 = vshrl.u32 %v2585, 7
        %v2587 = vsub.s32 %v2584, %v2586
        %v2588 = vrot.slane %v2574, %v2587
        %v2589 = vcombine.high %v2565, 0.0
        %v2590 = vcombine.high %v2572, 0.0
        %v2591 = vcombine.high %v2581, 0.0
        %v2592 = vcombine.high %v2588, 0.0
        %v2593 = vcombine.low %v2497, %v2504
        %v2595 = vunpack.c.l.s4 1983009808
        %v2596 = vunpack.c.0.s8 %v2595
        %v2597 = vlaneseq
        %v2598 = vshrl.u32 %v2597, 7
        %v2599 = vsub.s32 %v2596, %v2598
        %v2600 = vrot.slane %v2593, %v2599
        %v2601 = vcombine.low %v2521, %v2522
        %v2603 = vunpack.c.l.s4 1983009808
        %v2604 = vunpack.c.0.s8 %v2603
        %v2605 = vlaneseq
        %v2606 = vshrl.u32 %v2605, 7
        %v2607 = vsub.s32 %v2604, %v2606
        %v2608 = vrot.slane %v2601, %v2607
        %v2609 = vcombine.low %v2513, %v2520
        %v2611 = vunpack.c.l.s4 1983009808
        %v2612 = vunpack.c.0.s8 %v2611
        %v2613 = vlaneseq
        %v2614 = vshrl.u32 %v2613, 7
        %v2615 = vsub.s32 %v2612, %v2614
        %v2616 = vrot.slane %v2609, %v2615
        %v2617 = vcombine.low %v2523, %v2524
        %v2619 = vunpack.c.l.s4 1983009808
        %v2620 = vunpack.c.0.s8 %v2619
        %v2621 = vlaneseq
        %v2622 = vshrl.u32 %v2621, 7
        %v2623 = vsub.s32 %v2620, %v2622
        %v2624 = vrot.slane %v2617, %v2623
        %v2625 = vcombine.low %v2600, %v2608
        %v2626 = vcombine.high %v2600, %v2608
        %v2628 = vunpack.c.l.s4 1934713408
        %v2629 = vunpack.c.0.s8 %v2628
        %v2630 = vlaneseq
        %v2631 = vshrl.u32 %v2630, 7
        %v2632 = vsub.s32 %v2629, %v2631
        %v2633 = vrot.slane %v2625, %v2632
        %v2635 = vunpack.c.l.s4 1934713408
        %v2636 = vunpack.c.0.s8 %v2635
        %v2637 = vlaneseq
        %v2638 = vshrl.u32 %v2637, 7
        %v2639 = vsub.s32 %v2636, %v2638
        %v2640 = vrot.slane %v2626, %v2639
        %v2641 = vcombine.low %v2616, %v2624
        %v2642 = vcombine.high %v2616, %v2624
        %v2644 = vunpack.c.l.s4 1934713408
        %v2645 = vunpack.c.0.s8 %v2644
        %v2646 = vlaneseq
        %v2647 = vshrl.u32 %v2646, 7
        %v2648 = vsub.s32 %v2645, %v2647
        %v2649 = vrot.slane %v2641, %v2648
        %v2651 = vunpack.c.l.s4 1934713408
        %v2652 = vunpack.c.0.s8 %v2651
        %v2653 = vlaneseq
        %v2654 = vshrl.u32 %v2653, 7
        %v2655 = vsub.s32 %v2652, %v2654
        %v2656 = vrot.slane %v2642, %v2655
        %v2657 = vcombine.low %v2633, %v2649
        %v2658 = vcombine.high %v2633, %v2649
        %v2659 = vcombine.low %v2640, %v2656
        %v2660 = vcombine.high %v2640, %v2656
        %v2661 = vcombine.low %v2565, %v2572
        %v2663 = vunpack.c.l.s4 1983009808
        %v2664 = vunpack.c.0.s8 %v2663
        %v2665 = vlaneseq
        %v2666 = vshrl.u32 %v2665, 7
        %v2667 = vsub.s32 %v2664, %v2666
        %v2668 = vrot.slane %v2661, %v2667
        %v2669 = vcombine.low %v2589, %v2590
        %v2671 = vunpack.c.l.s4 1983009808
        %v2672 = vunpack.c.0.s8 %v2671
        %v2673 = vlaneseq
        %v2674 = vshrl.u32 %v2673, 7
        %v2675 = vsub.s32 %v2672, %v2674
        %v2676 = vrot.slane %v2669, %v2675
        %v2677 = vcombine.low %v2581, %v2588
        %v2679 = vunpack.c.l.s4 1983009808
        %v2680 = vunpack.c.0.s8 %v2679
        %v2681 = vlaneseq
        %v2682 = vshrl.u32 %v2681, 7
        %v2683 = vsub.s32 %v2680, %v2682
        %v2684 = vrot.slane %v2677, %v2683
        %v2685 = vcombine.low %v2591, %v2592
        %v2687 = vunpack.c.l.s4 1983009808
        %v2688 = vunpack.c.0.s8 %v2687
        %v2689 = vlaneseq
        %v2690 = vshrl.u32 %v2689, 7
        %v2691 = vsub.s32 %v2688, %v2690
        %v2692 = vrot.slane %v2685, %v2691
        %v2693 = vcombine.low %v2668, %v2676
        %v2694 = vcombine.high %v2668, %v2676
        %v2696 = vunpack.c.l.s4 1934713408
        %v2697 = vunpack.c.0.s8 %v2696
        %v2698 = vlaneseq
        %v2699 = vshrl.u32 %v2698, 7
        %v2700 = vsub.s32 %v2697, %v2699
        %v2701 = vrot.slane %v2693, %v2700
        %v2703 = vunpack.c.l.s4 1934713408
        %v2704 = vunpack.c.0.s8 %v2703
        %v2705 = vlaneseq
        %v2706 = vshrl.u32 %v2705, 7
        %v2707 = vsub.s32 %v2704, %v2706
        %v2708 = vrot.slane %v2694, %v2707
        %v2709 = vcombine.low %v2684, %v2692
        %v2710 = vcombine.high %v2684, %v2692
        %v2712 = vunpack.c.l.s4 1934713408
        %v2713 = vunpack.c.0.s8 %v2712
        %v2714 = vlaneseq
        %v2715 = vshrl.u32 %v2714, 7
        %v2716 = vsub.s32 %v2713, %v2715
        %v2717 = vrot.slane %v2709, %v2716
        %v2719 = vunpack.c.l.s4 1934713408
        %v2720 = vunpack.c.0.s8 %v2719
        %v2721 = vlaneseq
        %v2722 = vshrl.u32 %v2721, 7
        %v2723 = vsub.s32 %v2720, %v2722
        %v2724 = vrot.slane %v2710, %v2723
        %v2725 = vcombine.low %v2701, %v2717
        %v2726 = vcombine.high %v2701, %v2717
        %v2727 = vcombine.low %v2708, %v2724
        %v2728 = vcombine.high %v2708, %v2724
        %2731 = vrot.lane.b32.xlu0 %v2658, 32
        %v2732 = vpop.permute.xlu0 %2731
        %2733 = vrot.lane.b32.xlu0 %v2726, 32
        %v2734 = vpop.permute.xlu0 %2733
        %2739 = vrot.lane.b32.xlu0 %v2659, 64
        %v2740 = vpop.permute.xlu0 %2739
        %2741 = vrot.lane.b32.xlu0 %v2727, 64
        %v2742 = vpop.permute.xlu0 %2741
        %2747 = vrot.lane.b32.xlu0 %v2660, 96
        %v2748 = vpop.permute.xlu0 %2747
        %2749 = vrot.lane.b32.xlu0 %v2728, 96
        %v2750 = vpop.permute.xlu0 %2749
        %v2753 = vsel %vm1999, %v2657, %v2732
        %v2754 = vsel %vm1999, %v2725, %v2734
        %vm2755 = vcmask 523264
        %v2756 = vsel %vm2755, %v2753, %v2740
        %v2757 = vsel %vm2755, %v2754, %v2742
        %vm2758 = vcmask 785408
        %v2759 = vsel %vm2758, %v2756, %v2748
        %v2760 = vsel %vm2758, %v2757, %v2750
        %v2761 = vpack.c.bf16 %v2760, %v2759
        %v2762 = vld [vmem:[%s694] sm:$0xf]
        %v2763 = vld [vmem:[%s694 + $0x4] sm:$0xf]
        %v2764 = vld [vmem:[%s694 + $0x8] sm:$0xf]
        %v2765 = vld [vmem:[%s694 + $0xc] sm:$0xf]
        %v2766 = vld [vmem:[%s694 + $0x10] sm:$0xf]
        %v2767 = vld [vmem:[%s694 + $0x14] sm:$0xf]
        %v2768 = vld [vmem:[%s694 + $0x18] sm:$0xf]
        %v2769 = vld [vmem:[%s694 + $0x1c] sm:$0xf]
        %v2770 = vld [vmem:[%s694 + $0x20] sm:$0xf]
        %v2771 = vld [vmem:[%s694 + $0x24] sm:$0xf]
        %v2772 = vld [vmem:[%s694 + $0x28] sm:$0xf]
        %v2773 = vld [vmem:[%s694 + $0x2c] sm:$0xf]
        %v2774 = vld [vmem:[%s694 + $0x30] sm:$0xf]
        %v2775 = vld [vmem:[%s694 + $0x34] sm:$0xf]
        %v2776 = vld [vmem:[%s694 + $0x38] sm:$0xf]
        %v2777 = vld [vmem:[%s694 + $0x3c] sm:$0xf]
        %v2778 = vld [vmem:[%s810] sm:$0x1]
        %v2780 = vlaneseq
        %v2781 = vshrl.u32 %v2780, 7
        %v2782 = vsub.s32 0, %v2781
        %v2783 = vrot.slane %v2778, %v2782
        %v2801 = vunpack.c.l.b16 %v2762
        %v2802 = vunpack.c.l.b16 %v2763
        %v2803 = vunpack.c.l.b16 %v2764
        %v2804 = vunpack.c.l.b16 %v2765
        %v2805 = vunpack.c.l.b16 %v2766
        %v2806 = vunpack.c.l.b16 %v2767
        %v2807 = vunpack.c.l.b16 %v2768
        %v2808 = vunpack.c.l.b16 %v2769
        %v2809 = vunpack.c.l.b16 %v2770
        %v2810 = vunpack.c.l.b16 %v2771
        %v2811 = vunpack.c.l.b16 %v2772
        %v2812 = vunpack.c.l.b16 %v2773
        %v2813 = vunpack.c.l.b16 %v2774
        %v2814 = vunpack.c.l.b16 %v2775
        %v2815 = vunpack.c.l.b16 %v2776
        %v2816 = vunpack.c.l.b16 %v2777
        %v2817 = vpack.c.b16 %v2802, %v2801
        %v2818 = vpack.c.b16 %v2804, %v2803
        %v2819 = vpack.c.b16 %v2806, %v2805
        %v2820 = vpack.c.b16 %v2808, %v2807
        %v2821 = vpack.c.b16 %v2810, %v2809
        %v2822 = vpack.c.b16 %v2812, %v2811
        %v2823 = vpack.c.b16 %v2814, %v2813
        %v2824 = vpack.c.b16 %v2816, %v2815
        %2833 = vmatprep.subr.bf16.mxu0 0
        %2834 = vmatpush1.bf16.msra.mxu0 %v2824
        %2835 = vmatprep.subr.bf16.mxu0 0
        %2836 = vmatpush1.bf16.msra.mxu0 %v2823
        %2837 = vmatprep.subr.bf16.mxu0 0
        %2838 = vmatpush1.bf16.msra.mxu0 %v2822
        %2839 = vmatprep.subr.bf16.mxu0 0
        %2840 = vmatpush1.bf16.msra.mxu0 %v2821
        %2841 = vmatprep.subr.bf16.mxu0 0
        %2842 = vmatpush1.bf16.msra.mxu0 %v2820
        %2843 = vmatprep.subr.bf16.mxu0 0
        %2844 = vmatpush1.bf16.msra.mxu0 %v2819
        %2845 = vmatprep.subr.bf16.mxu0 0
        %2846 = vmatpush1.bf16.msra.mxu0 %v2818
        %2847 = vmatprep.subr.bf16.mxu0 0
        %2848 = vmatpush1.bf16.msra.mxu0 %v2817
        %2849 = vmatprep.subr.bf16.mxu0 0
        %2850 = vmatpush2.bf16.msra.mxu0 0
        %2851 = vmatprep.subr.bf16.mxu0 0
        %2852 = vmatpush2.bf16.msra.mxu0 0
        %2853 = vmatprep.subr.bf16.mxu0 0
        %2854 = vmatpush2.bf16.msra.mxu0 0
        %2855 = vmatprep.subr.bf16.mxu0 0
        %2856 = vmatpush2.bf16.msra.mxu0 0
        %2857 = vmatprep.subr.bf16.mxu0 0
        %2858 = vmatpush2.bf16.msra.mxu0 0
        %2859 = vmatprep.subr.bf16.mxu0 0
        %2860 = vmatpush2.bf16.msra.mxu0 0
        %2861 = vmatprep.subr.bf16.mxu0 0
        %2862 = vmatpush2.bf16.msra.mxu0 0
        %2863 = vmatprep.subr.bf16.mxu0 0
        %2864 = vmatpush2.bf16.msra.mxu0 0
        %2865 = vmatprep.mubr.bf16.mxu0 0
        %2866 = vmatmul.mubr.bf16.gmra.mxu0 %v2761
        %v2867 = vpop.f32.mrf.mxu0
        %v2868 = vadd.f32 %v2783, %v2867
        %v2869 = vpop.f32.mrf.mxu0
        %v2870 = vpop.f32.mrf.mxu0
        %v2871 = vadd.f32 %v2783, %v2870
        %v2872 = vpop.f32.mrf.mxu0
        %2873 = vdwg.mxu0
        %v2874 = vadd.f32 %v845, %v2868
        %v2875 = vadd.f32 %v846, %v2871
        %v2876 = vld [vmem:[%s813] sm:$0x1]
        %v2877 = vld [vmem:[%s816] sm:$0x1]
        %2878 = vadd.xlane.f32.xlu0 %v2874
        %v2879 = vpop.xlane.xlu0 %2878
        %2880 = vadd.xlane.f32.xlu0 %v2875
        %v2881 = vpop.xlane.xlu0 %2880
        %v2882 = vrcp.pop 128.0
        %v2883 = vmul.f32 %v2879, %v2882
        %v2884 = vmul.f32 %v2881, %v2882
        %v2885 = vsub.f32 %v2874, %v2883
        %v2886 = vsub.f32 %v2875, %v2884
        %v2887 = vmul.f32 %v2885, %v2885
        %v2888 = vmul.f32 %v2886, %v2886
        %2889 = vadd.xlane.f32.xlu0 %v2887
        %v2890 = vpop.xlane.xlu0 %2889
        %2891 = vadd.xlane.f32.xlu0 %v2888
        %v2892 = vpop.xlane.xlu0 %2891
        %v2893 = vmul.f32 %v2890, %v2882
        %v2894 = vmul.f32 %v2892, %v2882
        %v2895 = vadd.f32 %v2893, 1e-05
        %v2896 = vadd.f32 %v2894, 1e-05
        %v2897 = vrsqrt.pop %v2895
        %v2898 = vrsqrt.pop %v2896
        %v2899 = vmul.f32 %v2885, %v2897
        %v2900 = vmul.f32 %v2886, %v2898
        %v2902 = vlaneseq
        %v2903 = vshrl.u32 %v2902, 7
        %v2904 = vsub.s32 0, %v2903
        %v2905 = vrot.slane %v2876, %v2904
        %v2907 = vmul.f32 %v2899, %v2905
        %v2908 = vmul.f32 %v2900, %v2905
        %v2910 = vlaneseq
        %v2911 = vshrl.u32 %v2910, 7
        %v2912 = vsub.s32 0, %v2911
        %v2913 = vrot.slane %v2877, %v2912
        %v2915 = vadd.f32 %v2907, %v2913
        %v2916 = vadd.f32 %v2908, %v2913
        %v2917 = vpack.c.bf16 %v2916, %v2915
        %v2918 = vld [vmem:[%s703] sm:$0xff]
        %v2919 = vld [vmem:[%s703 + $0x8] sm:$0xff]
        %v2920 = vld [vmem:[%s703 + $0x10] sm:$0xff]
        %v2921 = vld [vmem:[%s703 + $0x18] sm:$0xff]
        %v2922 = vld [vmem:[%s703 + $0x20] sm:$0xff]
        %v2923 = vld [vmem:[%s703 + $0x28] sm:$0xff]
        %v2924 = vld [vmem:[%s703 + $0x30] sm:$0xff]
        %v2925 = vld [vmem:[%s703 + $0x38] sm:$0xff]
        %v2926 = vld [vmem:[%s703 + $0x40] sm:$0xff]
        %v2927 = vld [vmem:[%s703 + $0x48] sm:$0xff]
        %v2928 = vld [vmem:[%s703 + $0x50] sm:$0xff]
        %v2929 = vld [vmem:[%s703 + $0x58] sm:$0xff]
        %v2930 = vld [vmem:[%s703 + $0x60] sm:$0xff]
        %v2931 = vld [vmem:[%s703 + $0x68] sm:$0xff]
        %v2932 = vld [vmem:[%s703 + $0x70] sm:$0xff]
        %v2933 = vld [vmem:[%s703 + $0x78] sm:$0xff]
        %v2934 = vld [vmem:[%s703 + $0x80] sm:$0xff]
        %v2935 = vld [vmem:[%s703 + $0x88] sm:$0xff]
        %v2936 = vld [vmem:[%s703 + $0x90] sm:$0xff]
        %v2937 = vld [vmem:[%s703 + $0x98] sm:$0xff]
        %v2938 = vld [vmem:[%s703 + $0xa0] sm:$0xff]
        %v2939 = vld [vmem:[%s703 + $0xa8] sm:$0xff]
        %v2940 = vld [vmem:[%s703 + $0xb0] sm:$0xff]
        %v2941 = vld [vmem:[%s703 + $0xb8] sm:$0xff]
        %v2942 = vld [vmem:[%s703 + $0xc0] sm:$0xff]
        %v2943 = vld [vmem:[%s703 + $0xc8] sm:$0xff]
        %v2944 = vld [vmem:[%s703 + $0xd0] sm:$0xff]
        %v2945 = vld [vmem:[%s703 + $0xd8] sm:$0xff]
        %v2946 = vld [vmem:[%s703 + $0xe0] sm:$0xff]
        %v2947 = vld [vmem:[%s703 + $0xe8] sm:$0xff]
        %v2948 = vld [vmem:[%s703 + $0xf0] sm:$0xff]
        %v2949 = vld [vmem:[%s703 + $0xf8] sm:$0xff]
        %v2950 = vld [vmem:[%s820] sm:$0xf]
        %v2952 = vlaneseq
        %v2953 = vshrl.u32 %v2952, 7
        %v2954 = vsub.s32 0, %v2953
        %v2955 = vrot.slane %v2950, %v2954
        %v2956 = vlaneseq
        %v2957 = vshrl.u32 %v2956, 7
        %v2958 = vsub.s32 1, %v2957
        %v2959 = vrot.slane %v2950, %v2958
        %v2960 = vlaneseq
        %v2961 = vshrl.u32 %v2960, 7
        %v2962 = vsub.s32 2, %v2961
        %v2963 = vrot.slane %v2950, %v2962
        %v2964 = vlaneseq
        %v2965 = vshrl.u32 %v2964, 7
        %v2966 = vsub.s32 3, %v2965
        %v2967 = vrot.slane %v2950, %v2966
        %v3004 = vunpack.c.l.b16 %v2918
        %v3005 = vunpack.c.h.b16 %v2918
        %v3006 = vunpack.c.l.b16 %v2919
        %v3007 = vunpack.c.h.b16 %v2919
        %v3008 = vunpack.c.l.b16 %v2920
        %v3009 = vunpack.c.h.b16 %v2920
        %v3010 = vunpack.c.l.b16 %v2921
        %v3011 = vunpack.c.h.b16 %v2921
        %v3012 = vunpack.c.l.b16 %v2922
        %v3013 = vunpack.c.h.b16 %v2922
        %v3014 = vunpack.c.l.b16 %v2923
        %v3015 = vunpack.c.h.b16 %v2923
        %v3016 = vunpack.c.l.b16 %v2924
        %v3017 = vunpack.c.h.b16 %v2924
        %v3018 = vunpack.c.l.b16 %v2925
        %v3019 = vunpack.c.h.b16 %v2925
        %v3020 = vunpack.c.l.b16 %v2926
        %v3021 = vunpack.c.h.b16 %v2926
        %v3022 = vunpack.c.l.b16 %v2927
        %v3023 = vunpack.c.h.b16 %v2927
        %v3024 = vunpack.c.l.b16 %v2928
        %v3025 = vunpack.c.h.b16 %v2928
        %v3026 = vunpack.c.l.b16 %v2929
        %v3027 = vunpack.c.h.b16 %v2929
        %v3028 = vunpack.c.l.b16 %v2930
        %v3029 = vunpack.c.h.b16 %v2930
        %v3030 = vunpack.c.l.b16 %v2931
        %v3031 = vunpack.c.h.b16 %v2931
        %v3032 = vunpack.c.l.b16 %v2932
        %v3033 = vunpack.c.h.b16 %v2932
        %v3034 = vunpack.c.l.b16 %v2933
        %v3035 = vunpack.c.h.b16 %v2933
        %v3036 = vunpack.c.l.b16 %v2934
        %v3037 = vunpack.c.h.b16 %v2934
        %v3038 = vunpack.c.l.b16 %v2935
        %v3039 = vunpack.c.h.b16 %v2935
        %v3040 = vunpack.c.l.b16 %v2936
        %v3041 = vunpack.c.h.b16 %v2936
        %v3042 = vunpack.c.l.b16 %v2937
        %v3043 = vunpack.c.h.b16 %v2937
        %v3044 = vunpack.c.l.b16 %v2938
        %v3045 = vunpack.c.h.b16 %v2938
        %v3046 = vunpack.c.l.b16 %v2939
        %v3047 = vunpack.c.h.b16 %v2939
        %v3048 = vunpack.c.l.b16 %v2940
        %v3049 = vunpack.c.h.b16 %v2940
        %v3050 = vunpack.c.l.b16 %v2941
        %v3051 = vunpack.c.h.b16 %v2941
        %v3052 = vunpack.c.l.b16 %v2942
        %v3053 = vunpack.c.h.b16 %v2942
        %v3054 = vunpack.c.l.b16 %v2943
        %v3055 = vunpack.c.h.b16 %v2943
        %v3056 = vunpack.c.l.b16 %v2944
        %v3057 = vunpack.c.h.b16 %v2944
        %v3058 = vunpack.c.l.b16 %v2945
        %v3059 = vunpack.c.h.b16 %v2945
        %v3060 = vunpack.c.l.b16 %v2946
        %v3061 = vunpack.c.h.b16 %v2946
        %v3062 = vunpack.c.l.b16 %v2947
        %v3063 = vunpack.c.h.b16 %v2947
        %v3064 = vunpack.c.l.b16 %v2948
        %v3065 = vunpack.c.h.b16 %v2948
        %v3066 = vunpack.c.l.b16 %v2949
        %v3067 = vunpack.c.h.b16 %v2949
        %v3068 = vpack.c.b16 %v3008, %v3004
        %v3069 = vpack.c.b16 %v3009, %v3005
        %v3070 = vpack.c.b16 %v3010, %v3006
        %v3071 = vpack.c.b16 %v3011, %v3007
        %v3072 = vpack.c.b16 %v3016, %v3012
        %v3073 = vpack.c.b16 %v3017, %v3013
        %v3074 = vpack.c.b16 %v3018, %v3014
        %v3075 = vpack.c.b16 %v3019, %v3015
        %v3076 = vpack.c.b16 %v3024, %v3020
        %v3077 = vpack.c.b16 %v3025, %v3021
        %v3078 = vpack.c.b16 %v3026, %v3022
        %v3079 = vpack.c.b16 %v3027, %v3023
        %v3080 = vpack.c.b16 %v3032, %v3028
        %v3081 = vpack.c.b16 %v3033, %v3029
        %v3082 = vpack.c.b16 %v3034, %v3030
        %v3083 = vpack.c.b16 %v3035, %v3031
        %v3084 = vpack.c.b16 %v3040, %v3036
        %v3085 = vpack.c.b16 %v3041, %v3037
        %v3086 = vpack.c.b16 %v3042, %v3038
        %v3087 = vpack.c.b16 %v3043, %v3039
        %v3088 = vpack.c.b16 %v3048, %v3044
        %v3089 = vpack.c.b16 %v3049, %v3045
        %v3090 = vpack.c.b16 %v3050, %v3046
        %v3091 = vpack.c.b16 %v3051, %v3047
        %v3092 = vpack.c.b16 %v3056, %v3052
        %v3093 = vpack.c.b16 %v3057, %v3053
        %v3094 = vpack.c.b16 %v3058, %v3054
        %v3095 = vpack.c.b16 %v3059, %v3055
        %v3096 = vpack.c.b16 %v3064, %v3060
        %v3097 = vpack.c.b16 %v3065, %v3061
        %v3098 = vpack.c.b16 %v3066, %v3062
        %v3099 = vpack.c.b16 %v3067, %v3063
        %3132 = vmatprep.subr.bf16.mxu0 %v3097
        %3133 = vmatpush1.bf16.msra.mxu0 %v3096
        %3134 = vmatprep.subr.bf16.mxu0 %v3093
        %3135 = vmatpush1.bf16.msra.mxu0 %v3092
        %3136 = vmatprep.subr.bf16.mxu0 %v3089
        %3137 = vmatpush1.bf16.msra.mxu0 %v3088
        %3138 = vmatprep.subr.bf16.mxu0 %v3085
        %3139 = vmatpush1.bf16.msra.mxu0 %v3084
        %3140 = vmatprep.subr.bf16.mxu0 %v3081
        %3141 = vmatpush1.bf16.msra.mxu0 %v3080
        %3142 = vmatprep.subr.bf16.mxu0 %v3077
        %3143 = vmatpush1.bf16.msra.mxu0 %v3076
        %3144 = vmatprep.subr.bf16.mxu0 %v3073
        %3145 = vmatpush1.bf16.msra.mxu0 %v3072
        %3146 = vmatprep.subr.bf16.mxu0 %v3069
        %3147 = vmatpush1.bf16.msra.mxu0 %v3068
        %3148 = vmatprep.subr.bf16.mxu0 0
        %3149 = vmatpush2.bf16.msra.mxu0 0
        %3150 = vmatprep.subr.bf16.mxu0 0
        %3151 = vmatpush2.bf16.msra.mxu0 0
        %3152 = vmatprep.subr.bf16.mxu0 0
        %3153 = vmatpush2.bf16.msra.mxu0 0
        %3154 = vmatprep.subr.bf16.mxu0 0
        %3155 = vmatpush2.bf16.msra.mxu0 0
        %3156 = vmatprep.subr.bf16.mxu0 0
        %3157 = vmatpush2.bf16.msra.mxu0 0
        %3158 = vmatprep.subr.bf16.mxu0 0
        %3159 = vmatpush2.bf16.msra.mxu0 0
        %3160 = vmatprep.subr.bf16.mxu0 0
        %3161 = vmatpush2.bf16.msra.mxu0 0
        %3162 = vmatprep.subr.bf16.mxu0 0
        %3163 = vmatpush2.bf16.msra.mxu0 0
        %3164 = vmatprep.mubr.bf16.mxu0 0
        %3165 = vmatmul.mubr.bf16.gmra.mxu0 %v2917
        %v3166 = vpop.f32.mrf.mxu0
        %v3167 = vadd.f32 %v2955, %v3166
        %v3168 = vpop.f32.mrf.mxu0
        %v3169 = vadd.f32 %v2959, %v3168
        %v3170 = vpop.f32.mrf.mxu0
        %v3171 = vadd.f32 %v2955, %v3170
        %v3172 = vpop.f32.mrf.mxu0
        %v3173 = vadd.f32 %v2959, %v3172
        %3174 = vdwg.mxu0
        %3175 = vmatprep.subr.bf16.mxu0 %v3099
        %3176 = vmatpush1.bf16.msra.mxu0 %v3098
        %3177 = vmatprep.subr.bf16.mxu0 %v3095
        %3178 = vmatpush1.bf16.msra.mxu0 %v3094
        %3179 = vmatprep.subr.bf16.mxu0 %v3091
        %3180 = vmatpush1.bf16.msra.mxu0 %v3090
        %3181 = vmatprep.subr.bf16.mxu0 %v3087
        %3182 = vmatpush1.bf16.msra.mxu0 %v3086
        %3183 = vmatprep.subr.bf16.mxu0 %v3083
        %3184 = vmatpush1.bf16.msra.mxu0 %v3082
        %3185 = vmatprep.subr.bf16.mxu0 %v3079
        %3186 = vmatpush1.bf16.msra.mxu0 %v3078
        %3187 = vmatprep.subr.bf16.mxu0 %v3075
        %3188 = vmatpush1.bf16.msra.mxu0 %v3074
        %3189 = vmatprep.subr.bf16.mxu0 %v3071
        %3190 = vmatpush1.bf16.msra.mxu0 %v3070
        %3191 = vmatprep.subr.bf16.mxu0 0
        %3192 = vmatpush2.bf16.msra.mxu0 0
        %3193 = vmatprep.subr.bf16.mxu0 0
        %3194 = vmatpush2.bf16.msra.mxu0 0
        %3195 = vmatprep.subr.bf16.mxu0 0
        %3196 = vmatpush2.bf16.msra.mxu0 0
        %3197 = vmatprep.subr.bf16.mxu0 0
        %3198 = vmatpush2.bf16.msra.mxu0 0
        %3199 = vmatprep.subr.bf16.mxu0 0
        %3200 = vmatpush2.bf16.msra.mxu0 0
        %3201 = vmatprep.subr.bf16.mxu0 0
        %3202 = vmatpush2.bf16.msra.mxu0 0
        %3203 = vmatprep.subr.bf16.mxu0 0
        %3204 = vmatpush2.bf16.msra.mxu0 0
        %3205 = vmatprep.subr.bf16.mxu0 0
        %3206 = vmatpush2.bf16.msra.mxu0 0
        %3207 = vmatprep.mubr.bf16.mxu0 0
        %3208 = vmatmul.mubr.bf16.gmra.mxu0 %v2917
        %v3209 = vpop.f32.mrf.mxu0
        %v3210 = vadd.f32 %v2963, %v3209
        %v3211 = vpop.f32.mrf.mxu0
        %v3212 = vadd.f32 %v2967, %v3211
        %v3213 = vpop.f32.mrf.mxu0
        %v3214 = vadd.f32 %v2963, %v3213
        %v3215 = vpop.f32.mrf.mxu0
        %v3216 = vadd.f32 %v2967, %v3215
        %3217 = vdwg.mxu0
        %v3218 = vmax.f32 %v3167, 0.0
        %v3219 = vmax.f32 %v3169, 0.0
        %v3220 = vmax.f32 %v3210, 0.0
        %v3221 = vmax.f32 %v3212, 0.0
        %v3222 = vmax.f32 %v3171, 0.0
        %v3223 = vmax.f32 %v3173, 0.0
        %v3224 = vmax.f32 %v3214, 0.0
        %v3225 = vmax.f32 %v3216, 0.0
        %v3226 = vpack.c.bf16 %v3222, %v3218
        %v3227 = vpack.c.bf16 %v3223, %v3219
        %v3228 = vpack.c.bf16 %v3224, %v3220
        %v3229 = vpack.c.bf16 %v3225, %v3221
        %v3230 = vld [vmem:[%s712] sm:$0xf]
        %v3231 = vld [vmem:[%s712 + $0x4] sm:$0xf]
        %v3232 = vld [vmem:[%s712 + $0x8] sm:$0xf]
        %v3233 = vld [vmem:[%s712 + $0xc] sm:$0xf]
        %v3234 = vld [vmem:[%s712 + $0x10] sm:$0xf]
        %v3235 = vld [vmem:[%s712 + $0x14] sm:$0xf]
        %v3236 = vld [vmem:[%s712 + $0x18] sm:$0xf]
        %v3237 = vld [vmem:[%s712 + $0x1c] sm:$0xf]
        %v3238 = vld [vmem:[%s712 + $0x20] sm:$0xf]
        %v3239 = vld [vmem:[%s712 + $0x24] sm:$0xf]
        %v3240 = vld [vmem:[%s712 + $0x28] sm:$0xf]
        %v3241 = vld [vmem:[%s712 + $0x2c] sm:$0xf]
        %v3242 = vld [vmem:[%s712 + $0x30] sm:$0xf]
        %v3243 = vld [vmem:[%s712 + $0x34] sm:$0xf]
        %v3244 = vld [vmem:[%s712 + $0x38] sm:$0xf]
        %v3245 = vld [vmem:[%s712 + $0x3c] sm:$0xf]
        %v3246 = vld [vmem:[%s712 + $0x40] sm:$0xf]
        %v3247 = vld [vmem:[%s712 + $0x44] sm:$0xf]
        %v3248 = vld [vmem:[%s712 + $0x48] sm:$0xf]
        %v3249 = vld [vmem:[%s712 + $0x4c] sm:$0xf]
        %v3250 = vld [vmem:[%s712 + $0x50] sm:$0xf]
        %v3251 = vld [vmem:[%s712 + $0x54] sm:$0xf]
        %v3252 = vld [vmem:[%s712 + $0x58] sm:$0xf]
        %v3253 = vld [vmem:[%s712 + $0x5c] sm:$0xf]
        %v3254 = vld [vmem:[%s712 + $0x60] sm:$0xf]
        %v3255 = vld [vmem:[%s712 + $0x64] sm:$0xf]
        %v3256 = vld [vmem:[%s712 + $0x68] sm:$0xf]
        %v3257 = vld [vmem:[%s712 + $0x6c] sm:$0xf]
        %v3258 = vld [vmem:[%s712 + $0x70] sm:$0xf]
        %v3259 = vld [vmem:[%s712 + $0x74] sm:$0xf]
        %v3260 = vld [vmem:[%s712 + $0x78] sm:$0xf]
        %v3261 = vld [vmem:[%s712 + $0x7c] sm:$0xf]
        %v3262 = vld [vmem:[%s712 + $0x80] sm:$0xf]
        %v3263 = vld [vmem:[%s712 + $0x84] sm:$0xf]
        %v3264 = vld [vmem:[%s712 + $0x88] sm:$0xf]
        %v3265 = vld [vmem:[%s712 + $0x8c] sm:$0xf]
        %v3266 = vld [vmem:[%s712 + $0x90] sm:$0xf]
        %v3267 = vld [vmem:[%s712 + $0x94] sm:$0xf]
        %v3268 = vld [vmem:[%s712 + $0x98] sm:$0xf]
        %v3269 = vld [vmem:[%s712 + $0x9c] sm:$0xf]
        %v3270 = vld [vmem:[%s712 + $0xa0] sm:$0xf]
        %v3271 = vld [vmem:[%s712 + $0xa4] sm:$0xf]
        %v3272 = vld [vmem:[%s712 + $0xa8] sm:$0xf]
        %v3273 = vld [vmem:[%s712 + $0xac] sm:$0xf]
        %v3274 = vld [vmem:[%s712 + $0xb0] sm:$0xf]
        %v3275 = vld [vmem:[%s712 + $0xb4] sm:$0xf]
        %v3276 = vld [vmem:[%s712 + $0xb8] sm:$0xf]
        %v3277 = vld [vmem:[%s712 + $0xbc] sm:$0xf]
        %v3278 = vld [vmem:[%s712 + $0xc0] sm:$0xf]
        %v3279 = vld [vmem:[%s712 + $0xc4] sm:$0xf]
        %v3280 = vld [vmem:[%s712 + $0xc8] sm:$0xf]
        %v3281 = vld [vmem:[%s712 + $0xcc] sm:$0xf]
        %v3282 = vld [vmem:[%s712 + $0xd0] sm:$0xf]
        %v3283 = vld [vmem:[%s712 + $0xd4] sm:$0xf]
        %v3284 = vld [vmem:[%s712 + $0xd8] sm:$0xf]
        %v3285 = vld [vmem:[%s712 + $0xdc] sm:$0xf]
        %v3286 = vld [vmem:[%s712 + $0xe0] sm:$0xf]
        %v3287 = vld [vmem:[%s712 + $0xe4] sm:$0xf]
        %v3288 = vld [vmem:[%s712 + $0xe8] sm:$0xf]
        %v3289 = vld [vmem:[%s712 + $0xec] sm:$0xf]
        %v3290 = vld [vmem:[%s712 + $0xf0] sm:$0xf]
        %v3291 = vld [vmem:[%s712 + $0xf4] sm:$0xf]
        %v3292 = vld [vmem:[%s712 + $0xf8] sm:$0xf]
        %v3293 = vld [vmem:[%s712 + $0xfc] sm:$0xf]
        %v3294 = vld [vmem:[%s823] sm:$0x1]
        %v3296 = vlaneseq
        %v3297 = vshrl.u32 %v3296, 7
        %v3298 = vsub.s32 0, %v3297
        %v3299 = vrot.slane %v3294, %v3298
        %v3365 = vunpack.c.l.b16 %v3230
        %v3366 = vunpack.c.l.b16 %v3231
        %v3367 = vunpack.c.l.b16 %v3232
        %v3368 = vunpack.c.l.b16 %v3233
        %v3369 = vunpack.c.l.b16 %v3234
        %v3370 = vunpack.c.l.b16 %v3235
        %v3371 = vunpack.c.l.b16 %v3236
        %v3372 = vunpack.c.l.b16 %v3237
        %v3373 = vunpack.c.l.b16 %v3238
        %v3374 = vunpack.c.l.b16 %v3239
        %v3375 = vunpack.c.l.b16 %v3240
        %v3376 = vunpack.c.l.b16 %v3241
        %v3377 = vunpack.c.l.b16 %v3242
        %v3378 = vunpack.c.l.b16 %v3243
        %v3379 = vunpack.c.l.b16 %v3244
        %v3380 = vunpack.c.l.b16 %v3245
        %v3381 = vunpack.c.l.b16 %v3246
        %v3382 = vunpack.c.l.b16 %v3247
        %v3383 = vunpack.c.l.b16 %v3248
        %v3384 = vunpack.c.l.b16 %v3249
        %v3385 = vunpack.c.l.b16 %v3250
        %v3386 = vunpack.c.l.b16 %v3251
        %v3387 = vunpack.c.l.b16 %v3252
        %v3388 = vunpack.c.l.b16 %v3253
        %v3389 = vunpack.c.l.b16 %v3254
        %v3390 = vunpack.c.l.b16 %v3255
        %v3391 = vunpack.c.l.b16 %v3256
        %v3392 = vunpack.c.l.b16 %v3257
        %v3393 = vunpack.c.l.b16 %v3258
        %v3394 = vunpack.c.l.b16 %v3259
        %v3395 = vunpack.c.l.b16 %v3260
        %v3396 = vunpack.c.l.b16 %v3261
        %v3397 = vunpack.c.l.b16 %v3262
        %v3398 = vunpack.c.l.b16 %v3263
        %v3399 = vunpack.c.l.b16 %v3264
        %v3400 = vunpack.c.l.b16 %v3265
        %v3401 = vunpack.c.l.b16 %v3266
        %v3402 = vunpack.c.l.b16 %v3267
        %v3403 = vunpack.c.l.b16 %v3268
        %v3404 = vunpack.c.l.b16 %v3269
        %v3405 = vunpack.c.l.b16 %v3270
        %v3406 = vunpack.c.l.b16 %v3271
        %v3407 = vunpack.c.l.b16 %v3272
        %v3408 = vunpack.c.l.b16 %v3273
        %v3409 = vunpack.c.l.b16 %v3274
        %v3410 = vunpack.c.l.b16 %v3275
        %v3411 = vunpack.c.l.b16 %v3276
        %v3412 = vunpack.c.l.b16 %v3277
        %v3413 = vunpack.c.l.b16 %v3278
        %v3414 = vunpack.c.l.b16 %v3279
        %v3415 = vunpack.c.l.b16 %v3280
        %v3416 = vunpack.c.l.b16 %v3281
        %v3417 = vunpack.c.l.b16 %v3282
        %v3418 = vunpack.c.l.b16 %v3283
        %v3419 = vunpack.c.l.b16 %v3284
        %v3420 = vunpack.c.l.b16 %v3285
        %v3421 = vunpack.c.l.b16 %v3286
        %v3422 = vunpack.c.l.b16 %v3287
        %v3423 = vunpack.c.l.b16 %v3288
        %v3424 = vunpack.c.l.b16 %v3289
        %v3425 = vunpack.c.l.b16 %v3290
        %v3426 = vunpack.c.l.b16 %v3291
        %v3427 = vunpack.c.l.b16 %v3292
        %v3428 = vunpack.c.l.b16 %v3293
        %v3429 = vpack.c.b16 %v3366, %v3365
        %v3430 = vpack.c.b16 %v3368, %v3367
        %v3431 = vpack.c.b16 %v3370, %v3369
        %v3432 = vpack.c.b16 %v3372, %v3371
        %v3433 = vpack.c.b16 %v3374, %v3373
        %v3434 = vpack.c.b16 %v3376, %v3375
        %v3435 = vpack.c.b16 %v3378, %v3377
        %v3436 = vpack.c.b16 %v3380, %v3379
        %v3437 = vpack.c.b16 %v3382, %v3381
        %v3438 = vpack.c.b16 %v3384, %v3383
        %v3439 = vpack.c.b16 %v3386, %v3385
        %v3440 = vpack.c.b16 %v3388, %v3387
        %v3441 = vpack.c.b16 %v3390, %v3389
        %v3442 = vpack.c.b16 %v3392, %v3391
        %v3443 = vpack.c.b16 %v3394, %v3393
        %v3444 = vpack.c.b16 %v3396, %v3395
        %v3445 = vpack.c.b16 %v3398, %v3397
        %v3446 = vpack.c.b16 %v3400, %v3399
        %v3447 = vpack.c.b16 %v3402, %v3401
        %v3448 = vpack.c.b16 %v3404, %v3403
        %v3449 = vpack.c.b16 %v3406, %v3405
        %v3450 = vpack.c.b16 %v3408, %v3407
        %v3451 = vpack.c.b16 %v3410, %v3409
        %v3452 = vpack.c.b16 %v3412, %v3411
        %v3453 = vpack.c.b16 %v3414, %v3413
        %v3454 = vpack.c.b16 %v3416, %v3415
        %v3455 = vpack.c.b16 %v3418, %v3417
        %v3456 = vpack.c.b16 %v3420, %v3419
        %v3457 = vpack.c.b16 %v3422, %v3421
        %v3458 = vpack.c.b16 %v3424, %v3423
        %v3459 = vpack.c.b16 %v3426, %v3425
        %v3460 = vpack.c.b16 %v3428, %v3427
        %3493 = vmatprep.subr.bf16.mxu0 0
        %3494 = vmatpush1.bf16.msra.mxu0 %v3436
        %3495 = vmatprep.subr.bf16.mxu0 0
        %3496 = vmatpush1.bf16.msra.mxu0 %v3435
        %3497 = vmatprep.subr.bf16.mxu0 0
        %3498 = vmatpush1.bf16.msra.mxu0 %v3434
        %3499 = vmatprep.subr.bf16.mxu0 0
        %3500 = vmatpush1.bf16.msra.mxu0 %v3433
        %3501 = vmatprep.subr.bf16.mxu0 0
        %3502 = vmatpush1.bf16.msra.mxu0 %v3432
        %3503 = vmatprep.subr.bf16.mxu0 0
        %3504 = vmatpush1.bf16.msra.mxu0 %v3431
        %3505 = vmatprep.subr.bf16.mxu0 0
        %3506 = vmatpush1.bf16.msra.mxu0 %v3430
        %3507 = vmatprep.subr.bf16.mxu0 0
        %3508 = vmatpush1.bf16.msra.mxu0 %v3429
        %3509 = vmatprep.subr.bf16.mxu0 0
        %3510 = vmatpush2.bf16.msra.mxu0 %v3444
        %3511 = vmatprep.subr.bf16.mxu0 0
        %3512 = vmatpush2.bf16.msra.mxu0 %v3443
        %3513 = vmatprep.subr.bf16.mxu0 0
        %3514 = vmatpush2.bf16.msra.mxu0 %v3442
        %3515 = vmatprep.subr.bf16.mxu0 0
        %3516 = vmatpush2.bf16.msra.mxu0 %v3441
        %3517 = vmatprep.subr.bf16.mxu0 0
        %3518 = vmatpush2.bf16.msra.mxu0 %v3440
        %3519 = vmatprep.subr.bf16.mxu0 0
        %3520 = vmatpush2.bf16.msra.mxu0 %v3439
        %3521 = vmatprep.subr.bf16.mxu0 0
        %3522 = vmatpush2.bf16.msra.mxu0 %v3438
        %3523 = vmatprep.subr.bf16.mxu0 0
        %3524 = vmatpush2.bf16.msra.mxu0 %v3437
        %3525 = vmatprep.mubr.bf16.mxu0 %v3227
        %3526 = vmatmul.mubr.bf16.gmra.mxu0 %v3226
        %v3527 = vpop.f32.mrf.mxu0
        %v3528 = vadd.f32 %v3299, %v3527
        %v3529 = vpop.f32.mrf.mxu0
        %v3530 = vpop.f32.mrf.mxu0
        %v3531 = vadd.f32 %v3299, %v3530
        %v3532 = vpop.f32.mrf.mxu0
        %3533 = vdwg.mxu0
        %3534 = vmatprep.subr.bf16.mxu0 0
        %3535 = vmatpush1.bf16.msra.mxu0 %v3452
        %3536 = vmatprep.subr.bf16.mxu0 0
        %3537 = vmatpush1.bf16.msra.mxu0 %v3451
        %3538 = vmatprep.subr.bf16.mxu0 0
        %3539 = vmatpush1.bf16.msra.mxu0 %v3450
        %3540 = vmatprep.subr.bf16.mxu0 0
        %3541 = vmatpush1.bf16.msra.mxu0 %v3449
        %3542 = vmatprep.subr.bf16.mxu0 0
        %3543 = vmatpush1.bf16.msra.mxu0 %v3448
        %3544 = vmatprep.subr.bf16.mxu0 0
        %3545 = vmatpush1.bf16.msra.mxu0 %v3447
        %3546 = vmatprep.subr.bf16.mxu0 0
        %3547 = vmatpush1.bf16.msra.mxu0 %v3446
        %3548 = vmatprep.subr.bf16.mxu0 0
        %3549 = vmatpush1.bf16.msra.mxu0 %v3445
        %3550 = vmatprep.subr.bf16.mxu0 0
        %3551 = vmatpush2.bf16.msra.mxu0 %v3460
        %3552 = vmatprep.subr.bf16.mxu0 0
        %3553 = vmatpush2.bf16.msra.mxu0 %v3459
        %3554 = vmatprep.subr.bf16.mxu0 0
        %3555 = vmatpush2.bf16.msra.mxu0 %v3458
        %3556 = vmatprep.subr.bf16.mxu0 0
        %3557 = vmatpush2.bf16.msra.mxu0 %v3457
        %3558 = vmatprep.subr.bf16.mxu0 0
        %3559 = vmatpush2.bf16.msra.mxu0 %v3456
        %3560 = vmatprep.subr.bf16.mxu0 0
        %3561 = vmatpush2.bf16.msra.mxu0 %v3455
        %3562 = vmatprep.subr.bf16.mxu0 0
        %3563 = vmatpush2.bf16.msra.mxu0 %v3454
        %3564 = vmatprep.subr.bf16.mxu0 0
        %3565 = vmatpush2.bf16.msra.mxu0 %v3453
        %3566 = vmatprep.mubr.bf16.mxu0 %v3229
        %3567 = vmatmul.mubr.bf16.gmra.mxu0 %v3228
        %v3568 = vpop.f32.mrf.mxu0
        %v3569 = vadd.f32 %v3528, %v3568
        %v3570 = vpop.f32.mrf.mxu0
        %v3571 = vpop.f32.mrf.mxu0
        %v3572 = vadd.f32 %v3531, %v3571
        %v3573 = vpop.f32.mrf.mxu0
        %3574 = vdwg.mxu0
        %v3575 = vadd.f32 %v2915, %v3569
        %v3576 = vadd.f32 %v2916, %v3572
        %v3577 = vld [vmem:[%s826] sm:$0x1]
        %v3578 = vld [vmem:[%s829] sm:$0x1]
        %3579 = vadd.xlane.f32.xlu0 %v3575
        %v3580 = vpop.xlane.xlu0 %3579
        %3581 = vadd.xlane.f32.xlu0 %v3576
        %v3582 = vpop.xlane.xlu0 %3581
        %v3583 = vmul.f32 %v3580, %v2882
        %v3584 = vmul.f32 %v3582, %v2882
        %v3585 = vsub.f32 %v3575, %v3583
        %v3586 = vsub.f32 %v3576, %v3584
        %v3587 = vmul.f32 %v3585, %v3585
        %v3588 = vmul.f32 %v3586, %v3586
        %3589 = vadd.xlane.f32.xlu0 %v3587
        %v3590 = vpop.xlane.xlu0 %3589
        %3591 = vadd.xlane.f32.xlu0 %v3588
        %v3592 = vpop.xlane.xlu0 %3591
        %v3593 = vmul.f32 %v3590, %v2882
        %v3594 = vmul.f32 %v3592, %v2882
        %v3595 = vadd.f32 %v3593, 1e-05
        %v3596 = vadd.f32 %v3594, 1e-05
        %v3597 = vrsqrt.pop %v3595
        %v3598 = vrsqrt.pop %v3596
        %v3599 = vmul.f32 %v3585, %v3597
        %v3600 = vmul.f32 %v3586, %v3598
        %v3602 = vlaneseq
        %v3603 = vshrl.u32 %v3602, 7
        %v3604 = vsub.s32 0, %v3603
        %v3605 = vrot.slane %v3577, %v3604
        %v3607 = vmul.f32 %v3599, %v3605
        %v3608 = vmul.f32 %v3600, %v3605
        %v3610 = vlaneseq
        %v3611 = vshrl.u32 %v3610, 7
        %v3612 = vsub.s32 0, %v3611
        %v3613 = vrot.slane %v3578, %v3612
        %v3615 = vadd.f32 %v3607, %v3613
        %v3616 = vadd.f32 %v3608, %v3613
        %3617 = vst [vmem:[%s844] sm:$0xff] %v3615
        %3618 = vst [vmem:[%s844 + $0x8] sm:$0xff] %v3616
        %p3619 = scmp.eq.s32.totalorder %s45, 1
        // Predicated region
        $region109: #{tpu_custom_call.1} parent=79 // pred_check
          %p3620 = pneg %p3619
        $region110: #{tpu_custom_call.1} parent=79 // pred_check_branch
          %3622 = sbr.rel (%p3620) target = $region112
        $region111: #{tpu_custom_call.1} parent=79 // pred_region
          %v3623 = vld [vmem:[%s13] sm:$0x1]
          %v3624 = vld [vmem:[%s14] sm:$0x1]
          %3625 = vadd.xlane.f32.xlu0 %v3615
          %v3626 = vpop.xlane.xlu0 %3625
          %3627 = vadd.xlane.f32.xlu0 %v3616
          %v3628 = vpop.xlane.xlu0 %3627
          %v3629 = vmul.f32 %v3626, %v2882
          %v3630 = vmul.f32 %v3628, %v2882
          %v3631 = vsub.f32 %v3615, %v3629
          %v3632 = vsub.f32 %v3616, %v3630
          %v3633 = vmul.f32 %v3631, %v3631
          %v3634 = vmul.f32 %v3632, %v3632
          %3635 = vadd.xlane.f32.xlu0 %v3633
          %v3636 = vpop.xlane.xlu0 %3635
          %3637 = vadd.xlane.f32.xlu0 %v3634
          %v3638 = vpop.xlane.xlu0 %3637
          %v3639 = vmul.f32 %v3636, %v2882
          %v3640 = vmul.f32 %v3638, %v2882
          %v3641 = vadd.f32 %v3639, 1e-05
          %v3642 = vadd.f32 %v3640, 1e-05
          %v3643 = vrsqrt.pop %v3641
          %v3644 = vrsqrt.pop %v3642
          %v3645 = vmul.f32 %v3631, %v3643
          %v3646 = vmul.f32 %v3632, %v3644
          %v3648 = vlaneseq
          %v3649 = vshrl.u32 %v3648, 7
          %v3650 = vsub.s32 0, %v3649
          %v3651 = vrot.slane %v3623, %v3650
          %v3653 = vmul.f32 %v3645, %v3651
          %v3654 = vmul.f32 %v3646, %v3651
          %v3656 = vlaneseq
          %v3657 = vshrl.u32 %v3656, 7
          %v3658 = vsub.s32 0, %v3657
          %v3659 = vrot.slane %v3624, %v3658
          %v3661 = vadd.f32 %v3653, %v3659
          %v3662 = vadd.f32 %v3654, %v3659
          %3663 = vst [vmem:[%s805] sm:$0xff] %v3661
          %3664 = vst [vmem:[%s805 + $0x8] sm:$0xff] %v3662
        $region112: #{tpu_custom_call.1} parent=79 // pred_fallthru
          _
        %s3665 = sand.u32 %s449, 1
        %s3666 = scalar_lea.sflag [#allocation5], %s3665
        %s3667 = sand.u32 %s449, 1
        %s3668 = smul.addr %s3667, 16
        %s3669 = scalar_lea.vmem [#allocation14], %s3668
        // Predicated region
        $region113: #{tpu_custom_call.1} parent=79 // pred_check
          %p3670 = pneg %p459
        $region114: #{tpu_custom_call.1} parent=79 // pred_check_branch
          %3672 = sbr.rel (%p3670) target = $region116
        $region115: #{tpu_custom_call.1} parent=79 // pred_region
          %p3673 = scmp.eq.s32.totalorder %s45, 1
          %s3674 = scalar_select %p3673, %s46, 0
          %s3676 = ssub.s32 256, 256
          %3677 = vsyncadd %s3666, %s3676
          %s3678 = smul.addr %s3674, 2
          %s3679 = smul.addr %s3678, 128
          %s3680 = scalar_lea.hbm %s15, %s3679
          %s3681 = sshll.u32 %s3669, 4
          %s3682 = int_to_ptr.vmem [resolvable:$true] %s3681
          %3687 = dma.vmem_to_hbm [thread:$0]  %s3682, 256, %s3680, %s3666, 128, 128, 8
        $region116: #{tpu_custom_call.1} parent=79 // pred_fallthru
          _
      $region80: #{tpu_custom_call.1} parent=5 // pred_fallthru
        _
      %p3688 = scmp.le.s32.totalorder 2, %s36
      // Predicated region
      $region117: #{tpu_custom_call.1} parent=5 // pred_check
        %p3689 = pneg %p3688
      $region118: #{tpu_custom_call.1} parent=5 // pred_check_branch
        %3691 = sbr.rel (%p3689) target = $region120
      $region119: #{tpu_custom_call.1} parent=5 // pred_region
        %s3692 = ssub.s32 %s36, 2
        // Predicated region
        $region121: #{tpu_custom_call.1} parent=119 // pred_check
          %p3693 = pneg %p465
        $region122: #{tpu_custom_call.1} parent=119 // pred_check_branch
          %3695 = sbr.rel (%p3693) target = $region124
        $region123: #{tpu_custom_call.1} parent=119 // pred_region
          %s3696 = sand.u32 %s450, 1
          %s3697 = scalar_lea.sflag [#allocation5], %s3696
          %s3698 = sand.u32 %s450, 1
          %s3699 = smul.addr %s3698, 16
          %s3700 = scalar_lea.vmem [#allocation14], %s3699
          %3701 = dma.done %s3697, 256
        $region124: #{tpu_custom_call.1} parent=119 // pred_fallthru
          _
      $region120: #{tpu_custom_call.1} parent=5 // pred_fallthru
        _
    $region6: #{tpu_custom_call.1} parent=1 // loop_footer
      %s40 = sadd.s32 1, %s36
    $region7: #{tpu_custom_call.1} parent=1 // loop_footer_branch
      %35 = sbr.rel target = $region3
    $region8: #{tpu_custom_call.1} parent=1 // loop_exit
      _
    %3702 = vsyncpa [#allocation4], 1
    %s3703 = scalar_lea.sflag [#allocation4], 1
    %3704 = vsyncpa %s3703, 1
    %3705 = vsyncpa [#allocation7], 1
    %s3706 = scalar_lea.sflag [#allocation7], 1
    %3707 = vsyncpa %s3706, 1
    %3708 = vsyncpa [#allocation10], 1
    %s3709 = scalar_lea.sflag [#allocation10], 1
    %3710 = vsyncpa %s3709, 1
    %3711 = vsyncpa [#allocation13], 1
    %s3712 = scalar_lea.sflag [#allocation13], 1
    %3713 = vsyncpa %s3712, 1
    %3714 = vsyncpa [#allocation5], 1
    %s3715 = scalar_lea.sflag [#allocation5], 1
    %3716 = vsyncpa %s3715, 1

</llo_original>
